<compile_context>
chip_gen: v5e
topology: v5e:2x2
jax: 0.10.0
libtpu: 0.0.40
codegen_flags: <defaults>
</compile_context>

<pallas_src>
import math
import functools

import jax
import jax.numpy as jnp
from jax.experimental import pallas as pl
from jax.experimental.pallas import tpu as pltpu


# ---------------------------------------------------------------------------
# In-kernel helpers (traced inside the Pallas kernel body, all small arrays)
# ---------------------------------------------------------------------------
def _dw_conv1d_dilated(xs, w, dilation):
    """Depthwise dilated conv1d with 'same' zero padding.

    xs: (C, L), w: (C, k) -> (C, L); matches
    nn.Conv1d(C, C, k, padding=dilation*(k-1)//2, dilation=dilation,
              groups=C, bias=False).
    """
    C, L = xs.shape
    k = w.shape[1]
    pad = dilation * (k - 1) // 2
    if pad == 0:
        xp = xs
    else:
        z = jnp.zeros((C, pad), xs.dtype)
        xp = jnp.concatenate([z, xs, z], axis=1)      # pad once, slice per tap
    out = w[:, 0:1] * xp[:, 0:L]
    for t in range(1, k):                             # k == 3 -> tiny unroll
        out = out + w[:, t:t + 1] * xp[:, t * dilation:t * dilation + L]
    return out


def _group_norm(y, gamma, beta, groups, eps=1e-5):
    """GroupNorm over a (C, L) slab for one sample (PyTorch semantics)."""
    C, L = y.shape
    yg = y.reshape(groups, C // groups, L)
    mean = jnp.mean(yg, axis=(1, 2), keepdims=True)
    var = jnp.mean((yg - mean) ** 2, axis=(1, 2), keepdims=True)
    yn = ((yg - mean) * jax.lax.rsqrt(var + eps)).reshape(C, L)
    return yn * gamma + beta                          # gamma/beta: (C, 1)


# ---------------------------------------------------------------------------
# Pallas kernel: one (channel-tile, batch-tile) block per grid step
# ---------------------------------------------------------------------------
def ela_kernel(x_ref, p_ref, eh_ref, ew_ref, ehT_ref, ewT_ref, coef_ref, o_ref,
               *, groups_per_tile, dilation, hw_chunk, k):
    Bt, Ct, HW = x_ref.shape
    H = eh_ref.shape[0]
    W = ew_ref.shape[0]
    n_chunks = HW // hw_chunk

    # Full f32 contract precision only matters for the f32 path (keeps the MXU
    # reductions numerically equal to the reference); bf16 operands already
    # accumulate in f32.
    mm_prec = (jax.lax.Precision.HIGHEST
               if eh_ref.dtype == jnp.float32 else None)

    # Packed per-channel parameters: [w_sp (k) | w_ch centre tap | gamma | beta]
    p = p_ref[...].astype(jnp.float32)
    w_sp = p[:, 0:k]                          # (Ct, k) spatial dw-conv weight
    w_ch_c = p[:, k:k + 1]                    # (Ct, 1) channel-att centre tap
    gamma = p[:, k + 1:k + 2]                 # (Ct, 1)
    beta = p[:, k + 2:k + 3]                  # (Ct, 1)
    ch_coef = coef_ref[0]                     # sigmoid(ch_weight)
    sp_coef = coef_ref[1]                     # sigmoid(sp_weight)
    res_coef = coef_ref[2]                    # sigmoid(res_weight)

    def reduce_hw(b):
        """Row/column sums of sample b via NN matmuls against 0/1 matrices."""
        if n_chunks == 1:
            xc = x_ref[b]                                      # native dtype
            xh = jnp.dot(xc, ehT_ref[...], precision=mm_prec,
                         preferred_element_type=jnp.float32)   # (Ct, H)
            xw = jnp.dot(xc, ewT_ref[...], precision=mm_prec,
                         preferred_element_type=jnp.float32)   # (Ct, W)
            return xh, xw

        def body(i, carry):
            xh, xw = carry
            off = pl.multiple_of(i * hw_chunk, hw_chunk)
            xc = x_ref[b, :, pl.ds(off, hw_chunk)]
            ehT = ehT_ref[pl.ds(off, hw_chunk), :]
            ewT = ewT_ref[pl.ds(off, hw_chunk), :]
            xh = xh + jnp.dot(xc, ehT, precision=mm_prec,
                              preferred_element_type=jnp.float32)
            xw = xw + jnp.dot(xc, ewT, precision=mm_prec,
                              preferred_element_type=jnp.float32)
            return xh, xw

        init = (jnp.zeros((Ct, H), jnp.float32),
                jnp.zeros((Ct, W), jnp.float32))
        return jax.lax.fori_loop(0, n_chunks, body, init)

    def write_out(b, ch_term, h_att, w_att):
        """Chunked epilogue: never materializes a full (Ct, HW) f32 temp."""
        h_att = h_att.astype(eh_ref.dtype)
        w_att = w_att.astype(ew_ref.dtype)

        def one_chunk(off, size):
            eh = eh_ref[:, pl.ds(off, size)]                   # (H, size)
            ew = ew_ref[:, pl.ds(off, size)]                   # (W, size)
            h_full = jnp.dot(h_att, eh, precision=mm_prec,
                             preferred_element_type=jnp.float32)
            w_full = jnp.dot(w_att, ew, precision=mm_prec,
                             preferred_element_type=jnp.float32)
            att = ch_term + h_full * w_full                    # (Ct, size) f32
            xc = x_ref[b, :, pl.ds(off, size)]                 # native dtype
            o_ref[b, :, pl.ds(off, size)] = (
                xc * att.astype(xc.dtype)).astype(o_ref.dtype)

        if n_chunks == 1:
            one_chunk(0, HW)
        else:
            @pl.loop(0, n_chunks)
            def _(i):
                one_chunk(pl.multiple_of(i * hw_chunk, hw_chunk), hw_chunk)

    # Per-sample: MXU reductions -> tiny attention math -> chunked epilogue.
    for b in range(Bt):
        xh_sum, xw_sum = reduce_hw(b)
        x_h = xh_sum * (1.0 / W)                               # (Ct, H) means
        x_w = xw_sum * (1.0 / H)                               # (Ct, W) means

        # Channel attention: AdaptiveAvgPool2d(1) -> length-1 depthwise conv
        # (== centre-tap scale) -> sigmoid; residual coefficient folded in.
        gap = jnp.sum(x_h, axis=1, keepdims=True) * (1.0 / H)  # (Ct, 1)
        ch_att = jax.nn.sigmoid(w_ch_c * gap)
        ch_term = ch_coef * ch_att + res_coef                  # (Ct, 1)

        # Spatial attentions: dilated dw-conv -> GroupNorm -> sigmoid; the
        # spatial gate is folded into h_att so the slab op is one mul+add.
        h_att = jax.nn.sigmoid(_group_norm(
            _dw_conv1d_dilated(x_h, w_sp, dilation), gamma, beta,
            groups_per_tile)) * sp_coef
        w_att = jax.nn.sigmoid(_group_norm(
            _dw_conv1d_dilated(x_w, w_sp, dilation), gamma, beta,
            groups_per_tile))

        write_out(b, ch_term, h_att, w_att)


# ---------------------------------------------------------------------------
# Wrapper helpers
# ---------------------------------------------------------------------------
def _pick_hw_chunk(HW, target=2048):
    """Chunk length along the flattened spatial axis (divides HW; prefers a
    multiple of 128 so dynamic lane slices stay aligned)."""
    if HW <= target:
        return HW
    d = target - (target % 128)
    while d >= 128:
        if HW % d == 0:
            return d
        d -= 128
    # TODO(synk): pad HW (or add an HW grid axis) for spatial sizes with no
    # 128-aligned divisor instead of falling back to a single big chunk.
    return HW


def _pick_c_tile(C, group_size, HW, dtype, budget_f32_bytes):
    """Largest channel tile that (a) divides C, (b) is a whole number of
    GroupNorm groups, (c) keeps sublane packing unpadded (8 rows for f32,
    16 for bf16), (d) keeps one f32-equivalent sample block under budget."""
    n_groups = C // group_size
    sub = 16 if dtype == jnp.bfloat16 else 8
    cands = [m * group_size for m in range(1, n_groups + 1) if n_groups % m == 0]
    aligned = [ct for ct in cands if ct % sub == 0 or ct == C]
    if aligned:
        cands = aligned
    fitting = [ct for ct in cands if ct * HW * 4 <= budget_f32_bytes]
    return max(fitting) if fitting else min(cands)


def _pick_b_tile(B, n_ct, per_sample_f32_bytes, budget_f32_bytes):
    """Pack batch samples into a block when the problem is small, but keep
    enough grid steps to pipeline / feed both v7x TensorCores."""
    total = B * n_ct
    min_steps = min(8, total)
    best = 1
    for bt in range(1, B + 1):
        if B % bt:
            continue
        if bt * per_sample_f32_bytes > budget_f32_bytes:
            continue
        if (B // bt) * n_ct < min_steps:
            continue
        best = bt
    return best


def _const_spec(shape):
    """Full-array constant-index block; single-buffered (it never changes)."""
    ndim = len(shape)
    index_map = lambda c, b: (0,) * ndim
    try:
        return pl.BlockSpec(shape, index_map, pipeline_mode=pl.Buffered(1))
    except Exception:            # older jax: no pipeline_mode kwarg
        return pl.BlockSpec(shape, index_map)


# ---------------------------------------------------------------------------
# Forward wrapper
# ---------------------------------------------------------------------------
def ela_forward(x, w_ch, w_sp, gn_gamma, gn_beta, ch_w, sp_w, res_w,
                groups, dilation=2):
    B, C, H, W = x.shape
    HW = H * W
    k = w_sp.shape[1]
    assert C % groups == 0
    group_size = C // groups
    itemsize = jnp.dtype(x.dtype).itemsize

    # Generation-aware budgets (v5e/v6e: 128 MiB VMEM, v7x: 64 MiB per core).
    try:
        phys_vmem = int(pltpu.get_tpu_info().vmem_capacity_bytes)
    except Exception:
        phys_vmem = 64 << 20
    blk_budget_f32 = (6 << 20) if phys_vmem >= (96 << 20) else (3 << 20)

    c_tile = _pick_c_tile(C, group_size, HW, x.dtype, blk_budget_f32)
    n_ct = C // c_tile
    groups_per_tile = c_tile // group_size
    b_tile = _pick_b_tile(B, n_ct, c_tile * HW * 4, blk_budget_f32)
    n_bt = B // b_tile
    hw_chunk = _pick_hw_chunk(HW)
    n_chunks = HW // hw_chunk

    # Lane-dense slab (free reshape in HBM).
    x_flat = x.reshape(B, C, HW)

    # Packed per-channel parameters: [w_sp (k) | w_ch centre tap | gamma | beta].
    center = (k - 1) // 2
    params = jnp.concatenate([
        w_sp.astype(jnp.float32),
        w_ch[:, center:center + 1].astype(jnp.float32),
        gn_gamma.reshape(C, 1).astype(jnp.float32),
        gn_beta.reshape(C, 1).astype(jnp.float32),
    ], axis=1)                                                     # (C, k+3)

    # Scalar gates -> SMEM.
    coefs = jax.nn.sigmoid(
        jnp.concatenate([ch_w, sp_w, res_w]).astype(jnp.float32))  # (3,)

    # Constant 0/1 expansion matrices, shipped in both orientations so every
    # kernel matmul is NN (no in-kernel transposes).  0/1 is exact in bf16.
    e_dtype = jnp.bfloat16 if x.dtype == jnp.bfloat16 else jnp.float32
    hw_ids = jnp.arange(HW, dtype=jnp.int32)
    row = hw_ids // W
    col = hw_ids % W
    h_ids = jnp.arange(H, dtype=jnp.int32)
    w_ids = jnp.arange(W, dtype=jnp.int32)
    e_h = (row[None, :] == h_ids[:, None]).astype(e_dtype)      # (H, HW)
    e_w = (col[None, :] == w_ids[:, None]).astype(e_dtype)      # (W, HW)
    e_hT = (row[:, None] == h_ids[None, :]).astype(e_dtype)     # (HW, H)
    e_wT = (col[:, None] == w_ids[None, :]).astype(e_dtype)     # (HW, W)
    # TODO(synk): for very large H*W generate expansion-matrix chunks in-kernel
    # (iota compares) instead of shipping ~2*(H+W)*HW elements.

    # VMEM accounting: double-buffered x in/out blocks + single-buffered
    # constants + per-chunk f32 temporaries + headroom.
    e_item = jnp.dtype(e_dtype).itemsize
    blk_io = b_tile * c_tile * HW * itemsize
    temps = (10 * c_tile * hw_chunk * 4) if n_chunks > 1 else (4 * c_tile * HW * 4)
    aux = 2 * (H + W) * HW * e_item
    est = 4 * blk_io + temps + aux + (4 << 20)
    vmem_limit = int(min(int(phys_vmem * 0.9), max(32 << 20, est)))

    kernel = functools.partial(ela_kernel,
                               groups_per_tile=groups_per_tile,
                               dilation=dilation,
                               hw_chunk=hw_chunk,
                               k=k)

    out_flat = pl.pallas_call(
        kernel,
        out_shape=jax.ShapeDtypeStruct((B, C, HW), x.dtype),
        grid_spec=pltpu.PrefetchScalarGridSpec(
            num_scalar_prefetch=0,
            grid=(n_ct, n_bt),        # batch fastest -> params stay resident
            in_specs=[
                pl.BlockSpec((b_tile, c_tile, HW), lambda c, b: (b, c, 0)),
                pl.BlockSpec((c_tile, k + 3), lambda c, b: (c, 0)),
                _const_spec((H, HW)),
                _const_spec((W, HW)),
                _const_spec((HW, H)),
                _const_spec((HW, W)),
                pl.BlockSpec(memory_space=pltpu.MemorySpace.SMEM),
            ],
            out_specs=pl.BlockSpec((b_tile, c_tile, HW),
                                   lambda c, b: (b, c, 0)),
        ),
        compiler_params=pltpu.CompilerParams(
            dimension_semantics=("parallel", "parallel"),
            vmem_limit_bytes=vmem_limit),
    )(x_flat, params, e_h, e_w, e_hT, e_wT, coefs)

    return out_flat.reshape(B, C, H, W)


# ---------------------------------------------------------------------------
# Pure-JAX reference (mirrors the PyTorch forward) for verification
# ---------------------------------------------------------------------------
def ela_reference(x, w_ch, w_sp, gn_gamma, gn_beta, ch_w, sp_w, res_w,
                  groups, dilation=2):
    B, C, H, W = x.shape
    k = w_sp.shape[1]
    eps = 1e-5

    def dwconv(xs):  # (B, C, L)
        L = xs.shape[2]
        pad = dilation * (k - 1) // 2
        xp = jnp.pad(xs, ((0, 0), (0, 0), (pad, pad)))
        out = jnp.zeros_like(xs)
        for t in range(k):
            out = out + w_sp[None, :, t:t + 1] * xp[:, :, t * dilation:t * dilation + L]
        return out

    def gn(y):  # (B, C, L)
        Bq, Cq, L = y.shape
        yg = y.reshape(Bq, groups, (Cq // groups) * L)
        mean = yg.mean(axis=2, keepdims=True)
        var = ((yg - mean) ** 2).mean(axis=2, keepdims=True)
        yn = ((yg - mean) / jnp.sqrt(var + eps)).reshape(Bq, Cq, L)
        return yn * gn_gamma[None, :, None] + gn_beta[None, :, None]

    gap = x.mean(axis=(2, 3))                                          # (B, C)
    ch_att = jax.nn.sigmoid(w_ch[None, :, (k - 1) // 2] * gap)[:, :, None, None]
    x_h = x.mean(axis=3)
    x_w = x.mean(axis=2)
    h_att = jax.nn.sigmoid(gn(dwconv(x_h)))[:, :, :, None]
    w_att = jax.nn.sigmoid(gn(dwconv(x_w)))[:, :, None, :]
    ch_c = jax.nn.sigmoid(ch_w)[0]
    sp_c = jax.nn.sigmoid(sp_w)[0]
    res_c = jax.nn.sigmoid(res_w)[0]
    att_mask = ch_c * ch_att + sp_c * (h_att * w_att)
    return x * att_mask + res_c * x


# ---------------------------------------------------------------------------
if __name__ == "__main__":
    # ELA(channel=16): kernel_size = 3, GroupNorm groups = max(1, 16//16) = 1.
    B, C, H, W = 2, 16, 16, 16
    b_param, gamma_param = 1, 2
    ks = int(abs((math.log(C, 2) + b_param) / gamma_param))
    ks = ks if ks % 2 else ks + 1                 # -> 3
    groups = max(1, C // 16)                      # -> 1
    dilation = 2

    key = jax.random.PRNGKey(0)
    kx, k1, k2 = jax.random.split(key, 3)
    x = jax.random.normal(kx, (B, C, H, W), jnp.float32)

    # Deterministic parameter init (conv weights ~ kaiming-uniform bound;
    # scalar gates / GroupNorm affine match the module's __init__ values).
    bound = 1.0 / math.sqrt(ks)
    w_ch = jax.random.uniform(k1, (C, ks), jnp.float32, -bound, bound)
    w_sp = jax.random.uniform(k2, (C, ks), jnp.float32, -bound, bound)
    gn_gamma = jnp.ones((C,), jnp.float32)
    gn_beta = jnp.zeros((C,), jnp.float32)
    ch_w = jnp.zeros((1,), jnp.float32)
    sp_w = jnp.zeros((1,), jnp.float32)
    res_w = jnp.zeros((1,), jnp.float32)

    out = ela_forward(x, w_ch, w_sp, gn_gamma, gn_beta, ch_w, sp_w, res_w,
                      groups, dilation)
    out = jax.block_until_ready(out)

    ref = ela_reference(x, w_ch, w_sp, gn_gamma, gn_beta, ch_w, sp_w, res_w,
                        groups, dilation)
    assert out.shape == (B, C, H, W)
    max_err = float(jnp.max(jnp.abs(out - ref)))
    # fp32-contract-precision MXU path -> ~1e-6; 2e-3 leaves headroom in case
    # the precision hint is ever lowered to reduced-precision passes.
    assert max_err < 2e-3, f"max_err={max_err}"

    print("KERNEL_OK")
</pallas_src>

<mosaic_0001>
module attributes {stable_mosaic.version = 11 : i64} {
  func.func @ela_kernel(%arg0: i32, %arg1: i32, %arg2: memref<1x16x256xf32, #tpu.memory_space<vmem>>, %arg3: memref<16x6xf32, #tpu.memory_space<vmem>>, %arg4: memref<16x256xf32, #tpu.memory_space<vmem>>, %arg5: memref<16x256xf32, #tpu.memory_space<vmem>>, %arg6: memref<256x16xf32, #tpu.memory_space<vmem>>, %arg7: memref<256x16xf32, #tpu.memory_space<vmem>>, %arg8: memref<3xf32, #tpu.memory_space<smem>>, %arg9: memref<1x16x256xf32, #tpu.memory_space<vmem>>) attributes {dimension_semantics = [#tpu.dimension_semantics<parallel>, #tpu.dimension_semantics<parallel>], iteration_bounds = array<i64: 1, 2>, scalar_prefetch = 0 : i64, scratch_operands = 0 : i64, tpu.core_type = #tpu.core_type<tc>, window_params = [{transform_indices = @transform_0, window_bounds = array<i64: 1, 16, 256>}, {transform_indices = @transform_1, window_bounds = array<i64: 16, 6>}, {pipeline_mode = #tpu.pipeline_mode<synchronous>, transform_indices = @transform_2, window_bounds = array<i64: 16, 256>}, {pipeline_mode = #tpu.pipeline_mode<synchronous>, transform_indices = @transform_3, window_bounds = array<i64: 16, 256>}, {pipeline_mode = #tpu.pipeline_mode<synchronous>, transform_indices = @transform_4, window_bounds = array<i64: 256, 16>}, {pipeline_mode = #tpu.pipeline_mode<synchronous>, transform_indices = @transform_5, window_bounds = array<i64: 256, 16>}, {transform_indices = @transform_6, window_bounds = array<i64: 3>}, {transform_indices = @transform_7, window_bounds = array<i64: 1, 16, 256>}]} {
    %c0 = arith.constant 0 : index
    %c0_0 = arith.constant 0 : index
    %0 = vector.load %arg3[%c0, %c0_0] : memref<16x6xf32, #tpu.memory_space<vmem>>, vector<16x6xf32>
    %1 = vector.extract_strided_slice %0 {offsets = [0, 0], sizes = [16, 3], strides = [1, 1]} : vector<16x6xf32> to vector<16x3xf32>
    %2 = vector.extract_strided_slice %0 {offsets = [0, 3], sizes = [16, 1], strides = [1, 1]} : vector<16x6xf32> to vector<16x1xf32>
    %3 = vector.extract_strided_slice %0 {offsets = [0, 4], sizes = [16, 1], strides = [1, 1]} : vector<16x6xf32> to vector<16x1xf32>
    %4 = vector.extract_strided_slice %0 {offsets = [0, 5], sizes = [16, 1], strides = [1, 1]} : vector<16x6xf32> to vector<16x1xf32>
    %c0_1 = arith.constant 0 : index
    %5 = memref.load %arg8[%c0_1] : memref<3xf32, #tpu.memory_space<smem>>
    %c1 = arith.constant 1 : index
    %6 = memref.load %arg8[%c1] : memref<3xf32, #tpu.memory_space<smem>>
    %c2 = arith.constant 2 : index
    %7 = memref.load %arg8[%c2] : memref<3xf32, #tpu.memory_space<smem>>
    %c0_2 = arith.constant 0 : index
    %c0_3 = arith.constant 0 : index
    %c0_4 = arith.constant 0 : index
    %8 = vector.load %arg2[%c0_2, %c0_3, %c0_4] : memref<1x16x256xf32, #tpu.memory_space<vmem>>, vector<1x16x256xf32>
    %9 = vector.shape_cast %8 : vector<1x16x256xf32> to vector<16x256xf32>
    %c0_5 = arith.constant 0 : index
    %c0_6 = arith.constant 0 : index
    %10 = vector.load %arg6[%c0_5, %c0_6] : memref<256x16xf32, #tpu.memory_space<vmem>>, vector<256x16xf32>
    %cst = arith.constant dense<0.000000e+00> : vector<16x16xf32>
    %11 = tpu.matmul %9, %10, %cst {dimension_numbers = #tpu.dot_dimension_numbers<[1], [0], [0], [1], [0, 0, 1, 1], [], []>, precision = #tpu.contract_precision<fp32>} : vector<16x256xf32>, vector<256x16xf32>, vector<16x16xf32> -> vector<16x16xf32>
    %c0_7 = arith.constant 0 : index
    %c0_8 = arith.constant 0 : index
    %12 = vector.load %arg7[%c0_7, %c0_8] : memref<256x16xf32, #tpu.memory_space<vmem>>, vector<256x16xf32>
    %cst_9 = arith.constant dense<0.000000e+00> : vector<16x16xf32>
    %13 = tpu.matmul %9, %12, %cst_9 {dimension_numbers = #tpu.dot_dimension_numbers<[1], [0], [0], [1], [0, 0, 1, 1], [], []>, precision = #tpu.contract_precision<fp32>} : vector<16x256xf32>, vector<256x16xf32>, vector<16x16xf32> -> vector<16x16xf32>
    %cst_10 = arith.constant 6.250000e-02 : f32
    %14 = vector.broadcast %cst_10 : f32 to vector<16x16xf32>
    %15 = arith.mulf %11, %14 : vector<16x16xf32>
    %cst_11 = arith.constant 6.250000e-02 : f32
    %16 = vector.broadcast %cst_11 : f32 to vector<16x16xf32>
    %17 = arith.mulf %13, %16 : vector<16x16xf32>
    %cst_12 = arith.constant dense<0.000000e+00> : vector<16xf32>
    %18 = vector.multi_reduction <add>, %15, %cst_12 [1] : vector<16x16xf32> to vector<16xf32>
    %19 = vector.shape_cast %18 : vector<16xf32> to vector<16x1xf32>
    %cst_13 = arith.constant 6.250000e-02 : f32
    %20 = vector.broadcast %cst_13 : f32 to vector<16x1xf32>
    %21 = arith.mulf %19, %20 : vector<16x1xf32>
    %22 = arith.mulf %2, %21 : vector<16x1xf32>
    %23 = arith.negf %22 : vector<16x1xf32>
    %24 = math.exp %23 : vector<16x1xf32>
    %cst_14 = arith.constant 1.000000e+00 : f32
    %25 = vector.broadcast %cst_14 : f32 to vector<16x1xf32>
    %26 = arith.addf %25, %24 : vector<16x1xf32>
    %27 = arith.divf %25, %26 : vector<16x1xf32>
    %28 = vector.broadcast %5 : f32 to vector<16x1xf32>
    %29 = arith.mulf %28, %27 : vector<16x1xf32>
    %30 = vector.broadcast %7 : f32 to vector<16x1xf32>
    %31 = arith.addf %29, %30 : vector<16x1xf32>
    %cst_15 = arith.constant 0.000000e+00 : f32
    %32 = vector.broadcast %cst_15 : f32 to vector<16x2xf32>
    %33 = tpu.concatenate %32, %15, %32 in 1 : vector<16x2xf32>, vector<16x16xf32>, vector<16x2xf32> -> vector<16x20xf32>
    %34 = vector.extract_strided_slice %1 {offsets = [0, 0], sizes = [16, 1], strides = [1, 1]} : vector<16x3xf32> to vector<16x1xf32>
    %35 = vector.extract_strided_slice %33 {offsets = [0, 0], sizes = [16, 16], strides = [1, 1]} : vector<16x20xf32> to vector<16x16xf32>
    %36 = vector.broadcast %34 : vector<16x1xf32> to vector<16x16xf32>
    %37 = arith.mulf %36, %35 : vector<16x16xf32>
    %38 = vector.extract_strided_slice %1 {offsets = [0, 1], sizes = [16, 1], strides = [1, 1]} : vector<16x3xf32> to vector<16x1xf32>
    %39 = vector.extract_strided_slice %33 {offsets = [0, 2], sizes = [16, 16], strides = [1, 1]} : vector<16x20xf32> to vector<16x16xf32>
    %40 = vector.broadcast %38 : vector<16x1xf32> to vector<16x16xf32>
    %41 = arith.mulf %40, %39 : vector<16x16xf32>
    %42 = arith.addf %37, %41 : vector<16x16xf32>
    %43 = vector.extract_strided_slice %1 {offsets = [0, 2], sizes = [16, 1], strides = [1, 1]} : vector<16x3xf32> to vector<16x1xf32>
    %44 = vector.extract_strided_slice %33 {offsets = [0, 4], sizes = [16, 16], strides = [1, 1]} : vector<16x20xf32> to vector<16x16xf32>
    %45 = vector.broadcast %43 : vector<16x1xf32> to vector<16x16xf32>
    %46 = arith.mulf %45, %44 : vector<16x16xf32>
    %47 = arith.addf %42, %46 : vector<16x16xf32>
    %48 = vector.shape_cast %47 : vector<16x16xf32> to vector<1x16x16xf32>
    %cst_16 = arith.constant dense<0.000000e+00> : vector<1xf32>
    %49 = vector.multi_reduction <add>, %48, %cst_16 [1, 2] : vector<1x16x16xf32> to vector<1xf32>
    %50 = vector.shape_cast %49 : vector<1xf32> to vector<1x1x1xf32>
    %cst_17 = arith.constant 2.560000e+02 : f32
    %51 = vector.broadcast %cst_17 : f32 to vector<1x1x1xf32>
    %52 = arith.divf %50, %51 : vector<1x1x1xf32>
    %53 = vector.broadcast %52 : vector<1x1x1xf32> to vector<1x16x16xf32>
    %54 = arith.subf %48, %53 : vector<1x16x16xf32>
    %55 = arith.mulf %54, %54 : vector<1x16x16xf32>
    %cst_18 = arith.constant dense<0.000000e+00> : vector<1xf32>
    %56 = vector.multi_reduction <add>, %55, %cst_18 [1, 2] : vector<1x16x16xf32> to vector<1xf32>
    %57 = vector.shape_cast %56 : vector<1xf32> to vector<1x1x1xf32>
    %cst_19 = arith.constant 2.560000e+02 : f32
    %58 = vector.broadcast %cst_19 : f32 to vector<1x1x1xf32>
    %59 = arith.divf %57, %58 : vector<1x1x1xf32>
    %60 = vector.broadcast %52 : vector<1x1x1xf32> to vector<1x16x16xf32>
    %61 = arith.subf %48, %60 : vector<1x16x16xf32>
    %cst_20 = arith.constant 9.99999974E-6 : f32
    %62 = vector.broadcast %cst_20 : f32 to vector<1x1x1xf32>
    %63 = arith.addf %59, %62 : vector<1x1x1xf32>
    %64 = math.rsqrt %63 : vector<1x1x1xf32>
    %65 = vector.broadcast %64 : vector<1x1x1xf32> to vector<1x16x16xf32>
    %66 = arith.mulf %61, %65 : vector<1x16x16xf32>
    %67 = vector.shape_cast %66 : vector<1x16x16xf32> to vector<16x16xf32>
    %68 = vector.broadcast %3 : vector<16x1xf32> to vector<16x16xf32>
    %69 = arith.mulf %67, %68 : vector<16x16xf32>
    %70 = vector.broadcast %4 : vector<16x1xf32> to vector<16x16xf32>
    %71 = arith.addf %69, %70 : vector<16x16xf32>
    %72 = arith.negf %71 : vector<16x16xf32>
    %73 = math.exp %72 : vector<16x16xf32>
    %cst_21 = arith.constant 1.000000e+00 : f32
    %74 = vector.broadcast %cst_21 : f32 to vector<16x16xf32>
    %75 = arith.addf %74, %73 : vector<16x16xf32>
    %76 = arith.divf %74, %75 : vector<16x16xf32>
    %77 = vector.broadcast %6 : f32 to vector<16x16xf32>
    %78 = arith.mulf %76, %77 : vector<16x16xf32>
    %cst_22 = arith.constant 0.000000e+00 : f32
    %79 = vector.broadcast %cst_22 : f32 to vector<16x2xf32>
    %80 = tpu.concatenate %79, %17, %79 in 1 : vector<16x2xf32>, vector<16x16xf32>, vector<16x2xf32> -> vector<16x20xf32>
    %81 = vector.extract_strided_slice %1 {offsets = [0, 0], sizes = [16, 1], strides = [1, 1]} : vector<16x3xf32> to vector<16x1xf32>
    %82 = vector.extract_strided_slice %80 {offsets = [0, 0], sizes = [16, 16], strides = [1, 1]} : vector<16x20xf32> to vector<16x16xf32>
    %83 = vector.broadcast %81 : vector<16x1xf32> to vector<16x16xf32>
    %84 = arith.mulf %83, %82 : vector<16x16xf32>
    %85 = vector.extract_strided_slice %1 {offsets = [0, 1], sizes = [16, 1], strides = [1, 1]} : vector<16x3xf32> to vector<16x1xf32>
    %86 = vector.extract_strided_slice %80 {offsets = [0, 2], sizes = [16, 16], strides = [1, 1]} : vector<16x20xf32> to vector<16x16xf32>
    %87 = vector.broadcast %85 : vector<16x1xf32> to vector<16x16xf32>
    %88 = arith.mulf %87, %86 : vector<16x16xf32>
    %89 = arith.addf %84, %88 : vector<16x16xf32>
    %90 = vector.extract_strided_slice %1 {offsets = [0, 2], sizes = [16, 1], strides = [1, 1]} : vector<16x3xf32> to vector<16x1xf32>
    %91 = vector.extract_strided_slice %80 {offsets = [0, 4], sizes = [16, 16], strides = [1, 1]} : vector<16x20xf32> to vector<16x16xf32>
    %92 = vector.broadcast %90 : vector<16x1xf32> to vector<16x16xf32>
    %93 = arith.mulf %92, %91 : vector<16x16xf32>
    %94 = arith.addf %89, %93 : vector<16x16xf32>
    %95 = vector.shape_cast %94 : vector<16x16xf32> to vector<1x16x16xf32>
    %cst_23 = arith.constant dense<0.000000e+00> : vector<1xf32>
    %96 = vector.multi_reduction <add>, %95, %cst_23 [1, 2] : vector<1x16x16xf32> to vector<1xf32>
    %97 = vector.shape_cast %96 : vector<1xf32> to vector<1x1x1xf32>
    %cst_24 = arith.constant 2.560000e+02 : f32
    %98 = vector.broadcast %cst_24 : f32 to vector<1x1x1xf32>
    %99 = arith.divf %97, %98 : vector<1x1x1xf32>
    %100 = vector.broadcast %99 : vector<1x1x1xf32> to vector<1x16x16xf32>
    %101 = arith.subf %95, %100 : vector<1x16x16xf32>
    %102 = arith.mulf %101, %101 : vector<1x16x16xf32>
    %cst_25 = arith.constant dense<0.000000e+00> : vector<1xf32>
    %103 = vector.multi_reduction <add>, %102, %cst_25 [1, 2] : vector<1x16x16xf32> to vector<1xf32>
    %104 = vector.shape_cast %103 : vector<1xf32> to vector<1x1x1xf32>
    %cst_26 = arith.constant 2.560000e+02 : f32
    %105 = vector.broadcast %cst_26 : f32 to vector<1x1x1xf32>
    %106 = arith.divf %104, %105 : vector<1x1x1xf32>
    %107 = vector.broadcast %99 : vector<1x1x1xf32> to vector<1x16x16xf32>
    %108 = arith.subf %95, %107 : vector<1x16x16xf32>
    %cst_27 = arith.constant 9.99999974E-6 : f32
    %109 = vector.broadcast %cst_27 : f32 to vector<1x1x1xf32>
    %110 = arith.addf %106, %109 : vector<1x1x1xf32>
    %111 = math.rsqrt %110 : vector<1x1x1xf32>
    %112 = vector.broadcast %111 : vector<1x1x1xf32> to vector<1x16x16xf32>
    %113 = arith.mulf %108, %112 : vector<1x16x16xf32>
    %114 = vector.shape_cast %113 : vector<1x16x16xf32> to vector<16x16xf32>
    %115 = vector.broadcast %3 : vector<16x1xf32> to vector<16x16xf32>
    %116 = arith.mulf %114, %115 : vector<16x16xf32>
    %117 = vector.broadcast %4 : vector<16x1xf32> to vector<16x16xf32>
    %118 = arith.addf %116, %117 : vector<16x16xf32>
    %119 = arith.negf %118 : vector<16x16xf32>
    %120 = math.exp %119 : vector<16x16xf32>
    %cst_28 = arith.constant 1.000000e+00 : f32
    %121 = vector.broadcast %cst_28 : f32 to vector<16x16xf32>
    %122 = arith.addf %121, %120 : vector<16x16xf32>
    %123 = arith.divf %121, %122 : vector<16x16xf32>
    %c0_29 = arith.constant 0 : index
    %c0_30 = arith.constant 0 : index
    %124 = vector.load %arg4[%c0_29, %c0_30] : memref<16x256xf32, #tpu.memory_space<vmem>>, vector<16x256xf32>
    %c0_31 = arith.constant 0 : index
    %c0_32 = arith.constant 0 : index
    %125 = vector.load %arg5[%c0_31, %c0_32] : memref<16x256xf32, #tpu.memory_space<vmem>>, vector<16x256xf32>
    %cst_33 = arith.constant dense<0.000000e+00> : vector<16x256xf32>
    %126 = tpu.matmul %78, %124, %cst_33 {dimension_numbers = #tpu.dot_dimension_numbers<[1], [0], [0], [1], [0, 0, 1, 1], [], []>, precision = #tpu.contract_precision<fp32>} : vector<16x16xf32>, vector<16x256xf32>, vector<16x256xf32> -> vector<16x256xf32>
    %cst_34 = arith.constant dense<0.000000e+00> : vector<16x256xf32>
    %127 = tpu.matmul %123, %125, %cst_34 {dimension_numbers = #tpu.dot_dimension_numbers<[1], [0], [0], [1], [0, 0, 1, 1], [], []>, precision = #tpu.contract_precision<fp32>} : vector<16x16xf32>, vector<16x256xf32>, vector<16x256xf32> -> vector<16x256xf32>
    %128 = arith.mulf %126, %127 : vector<16x256xf32>
    %129 = vector.broadcast %31 : vector<16x1xf32> to vector<16x256xf32>
    %130 = arith.addf %129, %128 : vector<16x256xf32>
    %c0_35 = arith.constant 0 : index
    %c0_36 = arith.constant 0 : index
    %c0_37 = arith.constant 0 : index
    %131 = vector.load %arg2[%c0_35, %c0_36, %c0_37] : memref<1x16x256xf32, #tpu.memory_space<vmem>>, vector<1x16x256xf32>
    %132 = vector.shape_cast %131 : vector<1x16x256xf32> to vector<16x256xf32>
    %133 = arith.mulf %132, %130 : vector<16x256xf32>
    %c0_38 = arith.constant 0 : index
    %c0_39 = arith.constant 0 : index
    %c0_40 = arith.constant 0 : index
    %134 = vector.load %arg9[%c0_38, %c0_39, %c0_40] : memref<1x16x256xf32, #tpu.memory_space<vmem>>, vector<1x16x256xf32>
    %135 = vector.shape_cast %134 : vector<1x16x256xf32> to vector<16x256xf32>
    %136 = vector.shape_cast %133 : vector<16x256xf32> to vector<1x16x256xf32>
    tpu.vector_store %arg9[%c0_38, %c0_39, %c0_40], %136 {strides = array<i32>} : memref<1x16x256xf32, #tpu.memory_space<vmem>>, vector<1x16x256xf32>,
    return
  }
  func.func @transform_0(%arg0: i32, %arg1: i32) -> (i32, i32, i32) {
    %c0_i32 = arith.constant 0 : i32
    %c0_i32_0 = arith.constant 0 : i32
    return %arg1, %arg0, %c0_i32 : i32, i32, i32
  }
  func.func @transform_1(%arg0: i32, %arg1: i32) -> (i32, i32) {
    %c0_i32 = arith.constant 0 : i32
    %c0_i32_0 = arith.constant 0 : i32
    return %arg0, %c0_i32 : i32, i32
  }
  func.func @transform_2(%arg0: i32, %arg1: i32) -> (i32, i32) {
    %c0_i32 = arith.constant 0 : i32
    %c0_i32_0 = arith.constant 0 : i32
    %c0_i32_1 = arith.constant 0 : i32
    return %c0_i32, %c0_i32_0 : i32, i32
  }
  func.func @transform_3(%arg0: i32, %arg1: i32) -> (i32, i32) {
    %c0_i32 = arith.constant 0 : i32
    %c0_i32_0 = arith.constant 0 : i32
    %c0_i32_1 = arith.constant 0 : i32
    return %c0_i32, %c0_i32_0 : i32, i32
  }
  func.func @transform_4(%arg0: i32, %arg1: i32) -> (i32, i32) {
    %c0_i32 = arith.constant 0 : i32
    %c0_i32_0 = arith.constant 0 : i32
    %c0_i32_1 = arith.constant 0 : i32
    return %c0_i32, %c0_i32_0 : i32, i32
  }
  func.func @transform_5(%arg0: i32, %arg1: i32) -> (i32, i32) {
    %c0_i32 = arith.constant 0 : i32
    %c0_i32_0 = arith.constant 0 : i32
    %c0_i32_1 = arith.constant 0 : i32
    return %c0_i32, %c0_i32_0 : i32, i32
  }
  func.func @transform_6(%arg0: i32, %arg1: i32) -> i32 {
    %c0_i32 = arith.constant 0 : i32
    %c0_i32_0 = arith.constant 0 : i32
    return %c0_i32 : i32
  }
  func.func @transform_7(%arg0: i32, %arg1: i32) -> (i32, i32, i32) {
    %c0_i32 = arith.constant 0 : i32
    %c0_i32_0 = arith.constant 0 : i32
    return %arg1, %arg0, %c0_i32 : i32, i32, i32
  }
}

</mosaic_0001>

<llo_original>
// kernel: tpu_custom_call.1
$region0: #{tpu_custom_call.1}
  #allocation0 [shape = 'u32[]', space=smem, size = 0x4, offset = 0x4, fixed_abs, tag = 'smem constant byte address 0x4 - core index']
  #allocation1 [shape = 'u32[72,128]{1,0:T(1,128)}', space=vmem, size = 0x9000, scoped, tag = 'internal scratch']
  %s0 = inlined_call_operand.vmem [shape: f32[2,16,256], index: 0, kind: input, shape index: {}]
  %s1 = inlined_call_operand.vmem [shape: f32[16,6], index: 1, kind: input, shape index: {}]
  %s2 = inlined_call_operand.vmem [shape: f32[16,256], index: 2, kind: input, shape index: {}]
  %s3 = inlined_call_operand.vmem [shape: f32[16,256], index: 3, kind: input, shape index: {}]
  %s4 = inlined_call_operand.vmem [shape: f32[256,16], index: 4, kind: input, shape index: {}]
  %s5 = inlined_call_operand.vmem [shape: f32[256,16], index: 5, kind: input, shape index: {}]
  %s6 = inlined_call_operand.vmem [shape: f32[3], index: 6, kind: input, shape index: {}]
  %s7 = inlined_call_operand.hbm [shape: f32[2,16,256], index: 7, kind: output, shape index: {}]
  %s8 = sld [smem:[#allocation0]]
  $region65: #{tpu_custom_call.1} parent=0
    _
  %s10 = ssub.s32 1, %s8
  %s11 = scalar_select 0, %s10, %s8
  $region1: #{tpu_custom_call.1} parent=0
    #allocation2 [shape = 'u8[512]{0}', space=smem, size = 0x200, scoped, tag = 'input window, operand 6, single buffered']
    #allocation3 [shape = 's32[2]{0}', space=sflag, size = 0x8, scoped, tag = 'scoped memory for tpu_custom_call.1']
    #allocation4 [shape = 's32[2]{0}', space=sflag, size = 0x8, scoped, tag = 'scoped memory for tpu_custom_call.1']
    #allocation5 [shape = 'u8[32768]{0}', space=vmem, size = 0x8000, scoped, tag = 'output window, operand 0']
    %12 = vsyncpa [#allocation4], 0
    %13 = vsyncpa [#allocation3], 0
    %s14 = scalar_lea.sflag [#allocation3], 1
    %15 = vsyncpa %s14, 0
    loop: start=0, step=1, limit=4
    $region2: #{tpu_custom_call.1} parent=1 // loop_pre_header
      _
    $region3: #{tpu_custom_call.1} parent=1 // loop_header
      %s17 = sphi 0, %s21
      %p18 = scmp.ge.s32.totalorder %s17, 4
      %s24 = sphi 0, %s36
      %s25 = sphi 0, %s32
      %s26 = sphi 0, %s24
      %s27 = sphi 0, %s25
      %s28 = sphi 0, %s26
      %s29 = sphi 0, %s27
      %s41 = sphi 0, %s43
      %s44 = sphi 0, %s41
      %s45 = sphi 0, %s44
      %s61 = sphi 0, %s45
      %s67 = sphi 0, %s69
      %s70 = sphi 0, %s67
      %s71 = sphi 0, %s70
      %s87 = sphi 0, %s71
      %s91 = sphi 0, %s91
      %s93 = sphi 0, %s91
      %s94 = sphi 0, %s93
      %s108 = sphi 0, %s94
      %s112 = sphi 0, %s112
      %s114 = sphi 0, %s112
      %s115 = sphi 0, %s114
      %s129 = sphi 0, %s115
      %s133 = sphi 0, %s133
      %s135 = sphi 0, %s133
      %s136 = sphi 0, %s135
      %s150 = sphi 0, %s136
      %s154 = sphi 0, %s154
      %s156 = sphi 0, %s154
      %s157 = sphi 0, %s156
      %s171 = sphi 0, %s157
      %s175 = sphi 0, %s175
      %s177 = sphi 0, %s175
      %s178 = sphi 0, %s177
      %s192 = sphi 0, %s178
      %s200 = sphi 0, %s202
      %s203 = sphi 0, %s200
      %s204 = sphi 0, %s203
      %s220 = sphi 0, %s204
    $region4: #{tpu_custom_call.1} parent=1 // loop_header_branch
      %20 = sbr.rel (%p18) target = $region8
    $region5: #{tpu_custom_call.1} parent=1 // loop_body
      %s22 = ssub.s32 %s17, 1
      %s23 = ssub.s32 %s17, 2
      %s30 = sadd.s32 1, %s25
      %p31 = scmp.ge.s32.totalorder %s30, 2
      %s32 = scalar_select %p31, 0, %s30
      %s33 = sadd.s32 1, %s24
      %s34 = scalar_select %p31, %s33, %s24
      %p35 = scmp.ge.s32.totalorder %s34, 1
      %s36 = scalar_select %p35, 0, %s34
      %s37 = ssub.s32 %s25, %s32
      %s38 = ssub.s32 %s24, %s36
      %s39 = sor.u32 %s37, %s38
      %p40 = scmp.eq.s32.totalorder %s39, 0
      %s42 = sadd.s32 %s41, 1
      %s43 = scalar_select %p40, %s41, %s42
      %p46 = pneg %p40
      %p47 = scmp.eq.s32.totalorder %s17, 1
      %p48 = por %p46, %p47
      %p49 = scmp.ne.s32.totalorder %s41, %s44
      %p50 = scmp.eq.s32.totalorder %s17, 0
      %p51 = por %p49, %p50
      %p52 = scmp.ne.s32.totalorder %s41, %s44
      %p53 = scmp.eq.s32.totalorder %s22, 1
      %p54 = por %p52, %p53
      %p55 = scmp.ne.s32.totalorder %s44, %s45
      %p56 = scmp.eq.s32.totalorder %s22, 0
      %p57 = por %p55, %p56
      %p58 = scmp.ne.s32.totalorder %s44, %s45
      %p59 = scmp.eq.s32.totalorder %s23, 1
      %p60 = por %p58, %p59
      %p62 = scmp.ne.s32.totalorder %s45, %s61
      %p63 = scmp.eq.s32.totalorder %s23, 0
      %p64 = por %p62, %p63
      %s65 = ssub.s32 %s24, %s36
      %p66 = scmp.eq.s32.totalorder %s65, 0
      %s68 = sadd.s32 %s67, 1
      %s69 = scalar_select %p66, %s67, %s68
      %p72 = pneg %p66
      %p73 = scmp.eq.s32.totalorder %s17, 1
      %p74 = por %p72, %p73
      %p75 = scmp.ne.s32.totalorder %s67, %s70
      %p76 = scmp.eq.s32.totalorder %s17, 0
      %p77 = por %p75, %p76
      %p78 = scmp.ne.s32.totalorder %s67, %s70
      %p79 = scmp.eq.s32.totalorder %s22, 1
      %p80 = por %p78, %p79
      %p81 = scmp.ne.s32.totalorder %s70, %s71
      %p82 = scmp.eq.s32.totalorder %s22, 0
      %p83 = por %p81, %p82
      %p84 = scmp.ne.s32.totalorder %s70, %s71
      %p85 = scmp.eq.s32.totalorder %s23, 1
      %p86 = por %p84, %p85
      %p88 = scmp.ne.s32.totalorder %s71, %s87
      %p89 = scmp.eq.s32.totalorder %s23, 0
      %p90 = por %p88, %p89
      %s92 = sadd.s32 %s91, 1
      %p95 = scmp.eq.s32.totalorder %s17, 1
      %p96 = scmp.ne.s32.totalorder %s91, %s93
      %p97 = scmp.eq.s32.totalorder %s17, 0
      %p98 = por %p96, %p97
      %p99 = scmp.ne.s32.totalorder %s91, %s93
      %p100 = scmp.eq.s32.totalorder %s22, 1
      %p101 = por %p99, %p100
      %p102 = scmp.ne.s32.totalorder %s93, %s94
      %p103 = scmp.eq.s32.totalorder %s22, 0
      %p104 = por %p102, %p103
      %p105 = scmp.ne.s32.totalorder %s93, %s94
      %p106 = scmp.eq.s32.totalorder %s23, 1
      %p107 = por %p105, %p106
      %p109 = scmp.ne.s32.totalorder %s94, %s108
      %p110 = scmp.eq.s32.totalorder %s23, 0
      %p111 = por %p109, %p110
      %s113 = sadd.s32 %s112, 1
      %p116 = scmp.eq.s32.totalorder %s17, 1
      %p117 = scmp.ne.s32.totalorder %s112, %s114
      %p118 = scmp.eq.s32.totalorder %s17, 0
      %p119 = por %p117, %p118
      %p120 = scmp.ne.s32.totalorder %s112, %s114
      %p121 = scmp.eq.s32.totalorder %s22, 1
      %p122 = por %p120, %p121
      %p123 = scmp.ne.s32.totalorder %s114, %s115
      %p124 = scmp.eq.s32.totalorder %s22, 0
      %p125 = por %p123, %p124
      %p126 = scmp.ne.s32.totalorder %s114, %s115
      %p127 = scmp.eq.s32.totalorder %s23, 1
      %p128 = por %p126, %p127
      %p130 = scmp.ne.s32.totalorder %s115, %s129
      %p131 = scmp.eq.s32.totalorder %s23, 0
      %p132 = por %p130, %p131
      %s134 = sadd.s32 %s133, 1
      %p137 = scmp.eq.s32.totalorder %s17, 1
      %p138 = scmp.ne.s32.totalorder %s133, %s135
      %p139 = scmp.eq.s32.totalorder %s17, 0
      %p140 = por %p138, %p139
      %p141 = scmp.ne.s32.totalorder %s133, %s135
      %p142 = scmp.eq.s32.totalorder %s22, 1
      %p143 = por %p141, %p142
      %p144 = scmp.ne.s32.totalorder %s135, %s136
      %p145 = scmp.eq.s32.totalorder %s22, 0
      %p146 = por %p144, %p145
      %p147 = scmp.ne.s32.totalorder %s135, %s136
      %p148 = scmp.eq.s32.totalorder %s23, 1
      %p149 = por %p147, %p148
      %p151 = scmp.ne.s32.totalorder %s136, %s150
      %p152 = scmp.eq.s32.totalorder %s23, 0
      %p153 = por %p151, %p152
      %s155 = sadd.s32 %s154, 1
      %p158 = scmp.eq.s32.totalorder %s17, 1
      %p159 = scmp.ne.s32.totalorder %s154, %s156
      %p160 = scmp.eq.s32.totalorder %s17, 0
      %p161 = por %p159, %p160
      %p162 = scmp.ne.s32.totalorder %s154, %s156
      %p163 = scmp.eq.s32.totalorder %s22, 1
      %p164 = por %p162, %p163
      %p165 = scmp.ne.s32.totalorder %s156, %s157
      %p166 = scmp.eq.s32.totalorder %s22, 0
      %p167 = por %p165, %p166
      %p168 = scmp.ne.s32.totalorder %s156, %s157
      %p169 = scmp.eq.s32.totalorder %s23, 1
      %p170 = por %p168, %p169
      %p172 = scmp.ne.s32.totalorder %s157, %s171
      %p173 = scmp.eq.s32.totalorder %s23, 0
      %p174 = por %p172, %p173
      %s176 = sadd.s32 %s175, 1
      %p179 = scmp.eq.s32.totalorder %s17, 1
      %p180 = scmp.ne.s32.totalorder %s175, %s177
      %p181 = scmp.eq.s32.totalorder %s17, 0
      %p182 = por %p180, %p181
      %p183 = scmp.ne.s32.totalorder %s175, %s177
      %p184 = scmp.eq.s32.totalorder %s22, 1
      %p185 = por %p183, %p184
      %p186 = scmp.ne.s32.totalorder %s177, %s178
      %p187 = scmp.eq.s32.totalorder %s22, 0
      %p188 = por %p186, %p187
      %p189 = scmp.ne.s32.totalorder %s177, %s178
      %p190 = scmp.eq.s32.totalorder %s23, 1
      %p191 = por %p189, %p190
      %p193 = scmp.ne.s32.totalorder %s178, %s192
      %p194 = scmp.eq.s32.totalorder %s23, 0
      %p195 = por %p193, %p194
      %s196 = ssub.s32 %s25, %s32
      %s197 = ssub.s32 %s24, %s36
      %s198 = sor.u32 %s196, %s197
      %p199 = scmp.eq.s32.totalorder %s198, 0
      %s201 = sadd.s32 %s200, 1
      %s202 = scalar_select %p199, %s200, %s201
      %p205 = pneg %p199
      %p206 = scmp.eq.s32.totalorder %s17, 1
      %p207 = por %p205, %p206
      %p208 = scmp.ne.s32.totalorder %s200, %s203
      %p209 = scmp.eq.s32.totalorder %s17, 0
      %p210 = por %p208, %p209
      %p211 = scmp.ne.s32.totalorder %s200, %s203
      %p212 = scmp.eq.s32.totalorder %s22, 1
      %p213 = por %p211, %p212
      %p214 = scmp.ne.s32.totalorder %s203, %s204
      %p215 = scmp.eq.s32.totalorder %s22, 0
      %p216 = por %p214, %p215
      %p217 = scmp.ne.s32.totalorder %s203, %s204
      %p218 = scmp.eq.s32.totalorder %s23, 1
      %p219 = por %p217, %p218
      %p221 = scmp.ne.s32.totalorder %s204, %s220
      %p222 = scmp.eq.s32.totalorder %s23, 0
      %p223 = por %p221, %p222
      %p224 = scmp.le.s32.totalorder 1, %s17
      %p225 = scmp.lt.s32.totalorder %s17, 3
      %p226 = pnand %p224, %p225
      %p227 = pneg %p226
      // Predicated region
      $region9: #{tpu_custom_call.1} parent=5 // pred_check
        _
      $region10: #{tpu_custom_call.1} parent=5 // pred_check_branch
        %229 = sbr.rel (%p226) target = $region12
      $region11: #{tpu_custom_call.1} parent=5 // pred_region
        %s230 = ssub.s32 %s17, 1
        // Predicated region
        $region13: #{tpu_custom_call.1} parent=11 // pred_check
          %p231 = pneg %p83
        $region14: #{tpu_custom_call.1} parent=11 // pred_check_branch
          %233 = sbr.rel (%p231) target = $region16
        $region15: #{tpu_custom_call.1} parent=11 // pred_region
          %s234 = smul.u32 2, %s26
          %p235 = scmp.lt.s32.totalorder %s234, 1
          %s236 = scalar_select %p235, %s234, 1
          %s237 = smul.addr %s236, 8
          %s238 = scalar_lea.vmem %s1, %s237
          %s239 = smul.u32 2, %s26
        $region16: #{tpu_custom_call.1} parent=11 // pred_fallthru
          _
        // Predicated region
        $region17: #{tpu_custom_call.1} parent=11 // pred_check
          %p240 = pneg %p104
        $region18: #{tpu_custom_call.1} parent=11 // pred_check_branch
          %242 = sbr.rel (%p240) target = $region20
        $region19: #{tpu_custom_call.1} parent=11 // pred_region
          _
        $region20: #{tpu_custom_call.1} parent=11 // pred_fallthru
          _
        // Predicated region
        $region21: #{tpu_custom_call.1} parent=11 // pred_check
          %p243 = pneg %p125
        $region22: #{tpu_custom_call.1} parent=11 // pred_check_branch
          %245 = sbr.rel (%p243) target = $region24
        $region23: #{tpu_custom_call.1} parent=11 // pred_region
          _
        $region24: #{tpu_custom_call.1} parent=11 // pred_fallthru
          _
        // Predicated region
        $region25: #{tpu_custom_call.1} parent=11 // pred_check
          %p246 = pneg %p146
        $region26: #{tpu_custom_call.1} parent=11 // pred_check_branch
          %248 = sbr.rel (%p246) target = $region28
        $region27: #{tpu_custom_call.1} parent=11 // pred_region
          _
        $region28: #{tpu_custom_call.1} parent=11 // pred_fallthru
          _
        // Predicated region
        $region29: #{tpu_custom_call.1} parent=11 // pred_check
          %p249 = pneg %p167
        $region30: #{tpu_custom_call.1} parent=11 // pred_check_branch
          %251 = sbr.rel (%p249) target = $region32
        $region31: #{tpu_custom_call.1} parent=11 // pred_region
          _
        $region32: #{tpu_custom_call.1} parent=11 // pred_fallthru
          _
        // Predicated region
        $region33: #{tpu_custom_call.1} parent=11 // pred_check
          %p252 = pneg %p188
        $region34: #{tpu_custom_call.1} parent=11 // pred_check_branch
          %254 = sbr.rel (%p252) target = $region36
        $region35: #{tpu_custom_call.1} parent=11 // pred_region
          %256 = vsyncadd [#allocation4], 0
          %s258 = sshll.u32 %s6, 4
          %s259 = int_to_ptr.vmem [resolvable:$true] %s258
          %261 = dma.vmem_to_smem %s259, 16, [#allocation2], [#allocation4]
        $region36: #{tpu_custom_call.1} parent=11 // pred_fallthru
          _
      $region12: #{tpu_custom_call.1} parent=5 // pred_fallthru
        _
      %p262 = scmp.lt.s32.totalorder %s17, 2
      // Predicated region
      $region37: #{tpu_custom_call.1} parent=5 // pred_check
        %p263 = pneg %p262
      $region38: #{tpu_custom_call.1} parent=5 // pred_check_branch
        %265 = sbr.rel (%p263) target = $region40
      $region39: #{tpu_custom_call.1} parent=5 // pred_region
        // Predicated region
        $region41: #{tpu_custom_call.1} parent=39 // pred_check
          %p266 = pneg %p51
        $region42: #{tpu_custom_call.1} parent=39 // pred_check_branch
          %268 = sbr.rel (%p266) target = $region44
        $region43: #{tpu_custom_call.1} parent=39 // pred_region
          %s269 = smul.u32 2, %s24
          %p270 = scmp.lt.s32.totalorder %s25, 1
          %s271 = scalar_select %p270, %s25, 1
          %p272 = scmp.lt.s32.totalorder %s269, 1
          %s273 = scalar_select %p272, %s269, 1
          %s274 = smul.addr %s273, 2
          %s275 = smul.addr %s271, 4
          %s276 = sadd.s32 %s274, %s275
          %s277 = smul.addr %s276, 8
          %s278 = scalar_lea.vmem %s0, %s277
          %s279 = smul.u32 2, %s24
        $region44: #{tpu_custom_call.1} parent=39 // pred_fallthru
          _
      $region40: #{tpu_custom_call.1} parent=5 // pred_fallthru
        _
      %p280 = scmp.le.s32.totalorder 1, %s17
      %p281 = scmp.lt.s32.totalorder %s17, 3
      %p282 = pnand %p280, %p281
      %p283 = pneg %p282
      // Predicated region
      $region45: #{tpu_custom_call.1} parent=5 // pred_check
        _
      $region46: #{tpu_custom_call.1} parent=5 // pred_check_branch
        %285 = sbr.rel (%p282) target = $region48
      $region47: #{tpu_custom_call.1} parent=5 // pred_region
        %s286 = ssub.s32 %s17, 1
        // Predicated region
        $region49: #{tpu_custom_call.1} parent=47 // pred_check
          %p287 = pneg %p188
        $region50: #{tpu_custom_call.1} parent=47 // pred_check_branch
          %289 = sbr.rel (%p287) target = $region52
        $region51: #{tpu_custom_call.1} parent=47 // pred_region
          %291 = dma.done [#allocation4], 16
        $region52: #{tpu_custom_call.1} parent=47 // pred_fallthru
          _
        %292 = sfence
        %s293 = smul.u32 2, %s26
        %p294 = scmp.lt.s32.totalorder %s27, 1
        %s295 = scalar_select %p294, %s27, 1
        %p296 = scmp.lt.s32.totalorder %s293, 1
        %s297 = scalar_select %p296, %s293, 1
        %s298 = smul.addr %s297, 2
        %s299 = smul.addr %s295, 4
        %s300 = sadd.s32 %s298, %s299
        %s301 = smul.addr %s300, 8
        %s302 = scalar_lea.vmem %s0, %s301
        %p303 = pneg %p57
        %p304 = pneg %p54
        %s305 = smul.u32 2, %s26
        %p306 = scmp.lt.s32.totalorder %s305, 1
        %s307 = scalar_select %p306, %s305, 1
        %s308 = smul.addr %s307, 8
        %s309 = scalar_lea.vmem %s1, %s308
        %p310 = pneg %p83
        %p311 = pneg %p80
        %p312 = pneg %p104
        %p313 = pneg %p101
        %p314 = pneg %p125
        %p315 = pneg %p122
        %p316 = pneg %p146
        %p317 = pneg %p143
        %p318 = pneg %p167
        %p319 = pneg %p164
        %p320 = pneg %p188
        %p321 = pneg %p185
        %p322 = pneg %p216
        %p323 = pneg %p213
        %s324 = sand.u32 %s203, 1
        %s325 = scalar_lea.sflag [#allocation3], %s324
        %s326 = sand.u32 %s203, 1
        %s327 = smul.addr %s326, 32
        %s328 = scalar_lea.vmem [#allocation5], %s327
        %s329 = smul.u32 2, %s26
        %p330 = scmp.lt.s32.totalorder %s27, 1
        %s331 = scalar_select %p330, %s27, 1
        %p332 = scmp.lt.s32.totalorder %s329, 1
        %s333 = scalar_select %p332, %s329, 1
        %s334 = smul.addr %s333, 2
        %s335 = smul.addr %s331, 4
        %s336 = sadd.s32 %s334, %s335
        %s337 = smul.addr %s336, 8
        %s338 = scalar_lea.vmem %s0, %s337
        %s339 = smul.u32 2, %s26
        %s340 = smul.u32 2, %s26
        %p341 = scmp.lt.s32.totalorder %s340, 1
        %s342 = scalar_select %p341, %s340, 1
        %s343 = smul.addr %s342, 8
        %s344 = scalar_lea.vmem %s1, %s343
        %s345 = smul.u32 2, %s26
        %s346 = smul.u32 2, %s26
        %v347 = vld [vmem:[%s344] sm:$0xff]
        %v348 = vld [vmem:[%s344 + $0x8] sm:$0xff]
        %s349 = sld [smem:[#allocation2]]
        %s350 = sld [smem:[#allocation2 + $0x1]]
        %s351 = sld [smem:[#allocation2 + $0x2]]
        %v352 = vld [vmem:[%s338] sm:$0xff]
        %v353 = vld [vmem:[%s338 + $0x8] sm:$0xff]
        %v354 = vld [vmem:[%s338 + $0x10] sm:$0xff]
        %v355 = vld [vmem:[%s338 + $0x18] sm:$0xff]
        %v356 = vld [vmem:[%s4] sm:$0xff]
        %v357 = vld [vmem:[%s4 + $0x8] sm:$0xff]
        %v358 = vld [vmem:[%s4 + $0x10] sm:$0xff]
        %v359 = vld [vmem:[%s4 + $0x18] sm:$0xff]
        %v360 = vld [vmem:[%s4 + $0x20] sm:$0xff]
        %v361 = vld [vmem:[%s4 + $0x28] sm:$0xff]
        %v362 = vld [vmem:[%s4 + $0x30] sm:$0xff]
        %v363 = vld [vmem:[%s4 + $0x38] sm:$0xff]
        %v364 = vld [vmem:[%s4 + $0x40] sm:$0xff]
        %v365 = vld [vmem:[%s4 + $0x48] sm:$0xff]
        %v366 = vld [vmem:[%s4 + $0x50] sm:$0xff]
        %v367 = vld [vmem:[%s4 + $0x58] sm:$0xff]
        %v368 = vld [vmem:[%s4 + $0x60] sm:$0xff]
        %v369 = vld [vmem:[%s4 + $0x68] sm:$0xff]
        %v370 = vld [vmem:[%s4 + $0x70] sm:$0xff]
        %v371 = vld [vmem:[%s4 + $0x78] sm:$0xff]
        %v372 = vld [vmem:[%s4 + $0x80] sm:$0xff]
        %v373 = vld [vmem:[%s4 + $0x88] sm:$0xff]
        %v374 = vld [vmem:[%s4 + $0x90] sm:$0xff]
        %v375 = vld [vmem:[%s4 + $0x98] sm:$0xff]
        %v376 = vld [vmem:[%s4 + $0xa0] sm:$0xff]
        %v377 = vld [vmem:[%s4 + $0xa8] sm:$0xff]
        %v378 = vld [vmem:[%s4 + $0xb0] sm:$0xff]
        %v379 = vld [vmem:[%s4 + $0xb8] sm:$0xff]
        %v380 = vld [vmem:[%s4 + $0xc0] sm:$0xff]
        %v381 = vld [vmem:[%s4 + $0xc8] sm:$0xff]
        %v382 = vld [vmem:[%s4 + $0xd0] sm:$0xff]
        %v383 = vld [vmem:[%s4 + $0xd8] sm:$0xff]
        %v384 = vld [vmem:[%s4 + $0xe0] sm:$0xff]
        %v385 = vld [vmem:[%s4 + $0xe8] sm:$0xff]
        %v386 = vld [vmem:[%s4 + $0xf0] sm:$0xff]
        %v387 = vld [vmem:[%s4 + $0xf8] sm:$0xff]
        %v388 = vand.u32 %v371, 4294901760
        %389 = vmatpush.msra.mxu0 %v388
        %v390 = vand.u32 %v370, 4294901760
        %391 = vmatpush.msra.mxu0 %v390
        %v392 = vand.u32 %v369, 4294901760
        %393 = vmatpush.msra.mxu0 %v392
        %v394 = vand.u32 %v368, 4294901760
        %395 = vmatpush.msra.mxu0 %v394
        %v396 = vand.u32 %v367, 4294901760
        %397 = vmatpush.msra.mxu0 %v396
        %v398 = vand.u32 %v366, 4294901760
        %399 = vmatpush.msra.mxu0 %v398
        %v400 = vand.u32 %v365, 4294901760
        %401 = vmatpush.msra.mxu0 %v400
        %v402 = vand.u32 %v364, 4294901760
        %403 = vmatpush.msra.mxu0 %v402
        %v404 = vand.u32 %v363, 4294901760
        %405 = vmatpush.msra.mxu0 %v404
        %v406 = vand.u32 %v362, 4294901760
        %407 = vmatpush.msra.mxu0 %v406
        %v408 = vand.u32 %v361, 4294901760
        %409 = vmatpush.msra.mxu0 %v408
        %v410 = vand.u32 %v360, 4294901760
        %411 = vmatpush.msra.mxu0 %v410
        %v412 = vand.u32 %v359, 4294901760
        %413 = vmatpush.msra.mxu0 %v412
        %v414 = vand.u32 %v358, 4294901760
        %415 = vmatpush.msra.mxu0 %v414
        %v416 = vand.u32 %v357, 4294901760
        %417 = vmatpush.msra.mxu0 %v416
        %v418 = vand.u32 %v356, 4294901760
        %419 = vmatpush.msra.mxu0 %v418
        %v420 = vand.u32 %v352, 4294901760
        %v421 = vsub.f32 %v352, %v420
        %v422 = vand.u32 %v421, 4294901760
        %v423 = vsub.f32 %v421, %v422
        %v424 = vand.u32 %v423, 4294901760
        %425 = vmatmul.f32.gmra.mxu0 %v424
        %v426 = vpop.f32.mrf.mxu0
        %v427 = vadd.f32 0.0, %v426
        %v428 = vand.u32 %v354, 4294901760
        %v429 = vsub.f32 %v354, %v428
        %v430 = vand.u32 %v429, 4294901760
        %v431 = vsub.f32 %v429, %v430
        %v432 = vand.u32 %v431, 4294901760
        %433 = vmatmul.f32.gmra.mxu0 %v432
        %v434 = vpop.f32.mrf.mxu0
        %v435 = vadd.f32 0.0, %v434
        %436 = vdwg.mxu0
        %v437 = vand.u32 %v371, 4294901760
        %v438 = vsub.f32 %v371, %v437
        %v439 = vand.u32 %v438, 4294901760
        %v440 = vsub.f32 %v438, %v439
        %v441 = vand.u32 %v440, 4294901760
        %442 = vmatpush.msra.mxu0 %v441
        %v443 = vand.u32 %v370, 4294901760
        %v444 = vsub.f32 %v370, %v443
        %v445 = vand.u32 %v444, 4294901760
        %v446 = vsub.f32 %v444, %v445
        %v447 = vand.u32 %v446, 4294901760
        %448 = vmatpush.msra.mxu0 %v447
        %v449 = vand.u32 %v369, 4294901760
        %v450 = vsub.f32 %v369, %v449
        %v451 = vand.u32 %v450, 4294901760
        %v452 = vsub.f32 %v450, %v451
        %v453 = vand.u32 %v452, 4294901760
        %454 = vmatpush.msra.mxu0 %v453
        %v455 = vand.u32 %v368, 4294901760
        %v456 = vsub.f32 %v368, %v455
        %v457 = vand.u32 %v456, 4294901760
        %v458 = vsub.f32 %v456, %v457
        %v459 = vand.u32 %v458, 4294901760
        %460 = vmatpush.msra.mxu0 %v459
        %v461 = vand.u32 %v367, 4294901760
        %v462 = vsub.f32 %v367, %v461
        %v463 = vand.u32 %v462, 4294901760
        %v464 = vsub.f32 %v462, %v463
        %v465 = vand.u32 %v464, 4294901760
        %466 = vmatpush.msra.mxu0 %v465
        %v467 = vand.u32 %v366, 4294901760
        %v468 = vsub.f32 %v366, %v467
        %v469 = vand.u32 %v468, 4294901760
        %v470 = vsub.f32 %v468, %v469
        %v471 = vand.u32 %v470, 4294901760
        %472 = vmatpush.msra.mxu0 %v471
        %v473 = vand.u32 %v365, 4294901760
        %v474 = vsub.f32 %v365, %v473
        %v475 = vand.u32 %v474, 4294901760
        %v476 = vsub.f32 %v474, %v475
        %v477 = vand.u32 %v476, 4294901760
        %478 = vmatpush.msra.mxu0 %v477
        %v479 = vand.u32 %v364, 4294901760
        %v480 = vsub.f32 %v364, %v479
        %v481 = vand.u32 %v480, 4294901760
        %v482 = vsub.f32 %v480, %v481
        %v483 = vand.u32 %v482, 4294901760
        %484 = vmatpush.msra.mxu0 %v483
        %v485 = vand.u32 %v363, 4294901760
        %v486 = vsub.f32 %v363, %v485
        %v487 = vand.u32 %v486, 4294901760
        %v488 = vsub.f32 %v486, %v487
        %v489 = vand.u32 %v488, 4294901760
        %490 = vmatpush.msra.mxu0 %v489
        %v491 = vand.u32 %v362, 4294901760
        %v492 = vsub.f32 %v362, %v491
        %v493 = vand.u32 %v492, 4294901760
        %v494 = vsub.f32 %v492, %v493
        %v495 = vand.u32 %v494, 4294901760
        %496 = vmatpush.msra.mxu0 %v495
        %v497 = vand.u32 %v361, 4294901760
        %v498 = vsub.f32 %v361, %v497
        %v499 = vand.u32 %v498, 4294901760
        %v500 = vsub.f32 %v498, %v499
        %v501 = vand.u32 %v500, 4294901760
        %502 = vmatpush.msra.mxu0 %v501
        %v503 = vand.u32 %v360, 4294901760
        %v504 = vsub.f32 %v360, %v503
        %v505 = vand.u32 %v504, 4294901760
        %v506 = vsub.f32 %v504, %v505
        %v507 = vand.u32 %v506, 4294901760
        %508 = vmatpush.msra.mxu0 %v507
        %v509 = vand.u32 %v359, 4294901760
        %v510 = vsub.f32 %v359, %v509
        %v511 = vand.u32 %v510, 4294901760
        %v512 = vsub.f32 %v510, %v511
        %v513 = vand.u32 %v512, 4294901760
        %514 = vmatpush.msra.mxu0 %v513
        %v515 = vand.u32 %v358, 4294901760
        %v516 = vsub.f32 %v358, %v515
        %v517 = vand.u32 %v516, 4294901760
        %v518 = vsub.f32 %v516, %v517
        %v519 = vand.u32 %v518, 4294901760
        %520 = vmatpush.msra.mxu0 %v519
        %v521 = vand.u32 %v357, 4294901760
        %v522 = vsub.f32 %v357, %v521
        %v523 = vand.u32 %v522, 4294901760
        %v524 = vsub.f32 %v522, %v523
        %v525 = vand.u32 %v524, 4294901760
        %526 = vmatpush.msra.mxu0 %v525
        %v527 = vand.u32 %v356, 4294901760
        %v528 = vsub.f32 %v356, %v527
        %v529 = vand.u32 %v528, 4294901760
        %v530 = vsub.f32 %v528, %v529
        %v531 = vand.u32 %v530, 4294901760
        %532 = vmatpush.msra.mxu0 %v531
        %v533 = vand.u32 %v352, 4294901760
        %534 = vmatmul.f32.gmra.mxu0 %v533
        %v535 = vpop.f32.mrf.mxu0
        %v536 = vadd.f32 %v427, %v535
        %v537 = vand.u32 %v354, 4294901760
        %538 = vmatmul.f32.gmra.mxu0 %v537
        %v539 = vpop.f32.mrf.mxu0
        %v540 = vadd.f32 %v435, %v539
        %541 = vdwg.mxu0
        %v542 = vand.u32 %v371, 4294901760
        %v543 = vsub.f32 %v371, %v542
        %544 = vmatpush.msra.mxu0 %v543
        %v545 = vand.u32 %v370, 4294901760
        %v546 = vsub.f32 %v370, %v545
        %547 = vmatpush.msra.mxu0 %v546
        %v548 = vand.u32 %v369, 4294901760
        %v549 = vsub.f32 %v369, %v548
        %550 = vmatpush.msra.mxu0 %v549
        %v551 = vand.u32 %v368, 4294901760
        %v552 = vsub.f32 %v368, %v551
        %553 = vmatpush.msra.mxu0 %v552
        %v554 = vand.u32 %v367, 4294901760
        %v555 = vsub.f32 %v367, %v554
        %556 = vmatpush.msra.mxu0 %v555
        %v557 = vand.u32 %v366, 4294901760
        %v558 = vsub.f32 %v366, %v557
        %559 = vmatpush.msra.mxu0 %v558
        %v560 = vand.u32 %v365, 4294901760
        %v561 = vsub.f32 %v365, %v560
        %562 = vmatpush.msra.mxu0 %v561
        %v563 = vand.u32 %v364, 4294901760
        %v564 = vsub.f32 %v364, %v563
        %565 = vmatpush.msra.mxu0 %v564
        %v566 = vand.u32 %v363, 4294901760
        %v567 = vsub.f32 %v363, %v566
        %568 = vmatpush.msra.mxu0 %v567
        %v569 = vand.u32 %v362, 4294901760
        %v570 = vsub.f32 %v362, %v569
        %571 = vmatpush.msra.mxu0 %v570
        %v572 = vand.u32 %v361, 4294901760
        %v573 = vsub.f32 %v361, %v572
        %574 = vmatpush.msra.mxu0 %v573
        %v575 = vand.u32 %v360, 4294901760
        %v576 = vsub.f32 %v360, %v575
        %577 = vmatpush.msra.mxu0 %v576
        %v578 = vand.u32 %v359, 4294901760
        %v579 = vsub.f32 %v359, %v578
        %580 = vmatpush.msra.mxu0 %v579
        %v581 = vand.u32 %v358, 4294901760
        %v582 = vsub.f32 %v358, %v581
        %583 = vmatpush.msra.mxu0 %v582
        %v584 = vand.u32 %v357, 4294901760
        %v585 = vsub.f32 %v357, %v584
        %586 = vmatpush.msra.mxu0 %v585
        %v587 = vand.u32 %v356, 4294901760
        %v588 = vsub.f32 %v356, %v587
        %589 = vmatpush.msra.mxu0 %v588
        %v590 = vand.u32 %v352, 4294901760
        %v591 = vsub.f32 %v352, %v590
        %592 = vmatmul.f32.gmra.mxu0 %v591
        %v593 = vpop.f32.mrf.mxu0
        %v594 = vadd.f32 %v536, %v593
        %v595 = vand.u32 %v354, 4294901760
        %v596 = vsub.f32 %v354, %v595
        %597 = vmatmul.f32.gmra.mxu0 %v596
        %v598 = vpop.f32.mrf.mxu0
        %v599 = vadd.f32 %v540, %v598
        %600 = vdwg.mxu0
        %v601 = vand.u32 %v371, 4294901760
        %602 = vmatpush.msra.mxu0 %v601
        %v603 = vand.u32 %v370, 4294901760
        %604 = vmatpush.msra.mxu0 %v603
        %v605 = vand.u32 %v369, 4294901760
        %606 = vmatpush.msra.mxu0 %v605
        %v607 = vand.u32 %v368, 4294901760
        %608 = vmatpush.msra.mxu0 %v607
        %v609 = vand.u32 %v367, 4294901760
        %610 = vmatpush.msra.mxu0 %v609
        %v611 = vand.u32 %v366, 4294901760
        %612 = vmatpush.msra.mxu0 %v611
        %v613 = vand.u32 %v365, 4294901760
        %614 = vmatpush.msra.mxu0 %v613
        %v615 = vand.u32 %v364, 4294901760
        %616 = vmatpush.msra.mxu0 %v615
        %v617 = vand.u32 %v363, 4294901760
        %618 = vmatpush.msra.mxu0 %v617
        %v619 = vand.u32 %v362, 4294901760
        %620 = vmatpush.msra.mxu0 %v619
        %v621 = vand.u32 %v361, 4294901760
        %622 = vmatpush.msra.mxu0 %v621
        %v623 = vand.u32 %v360, 4294901760
        %624 = vmatpush.msra.mxu0 %v623
        %v625 = vand.u32 %v359, 4294901760
        %626 = vmatpush.msra.mxu0 %v625
        %v627 = vand.u32 %v358, 4294901760
        %628 = vmatpush.msra.mxu0 %v627
        %v629 = vand.u32 %v357, 4294901760
        %630 = vmatpush.msra.mxu0 %v629
        %v631 = vand.u32 %v356, 4294901760
        %632 = vmatpush.msra.mxu0 %v631
        %v633 = vand.u32 %v352, 4294901760
        %v634 = vsub.f32 %v352, %v633
        %v635 = vand.u32 %v634, 4294901760
        %636 = vmatmul.f32.gmra.mxu0 %v635
        %v637 = vpop.f32.mrf.mxu0
        %v638 = vadd.f32 %v594, %v637
        %v639 = vand.u32 %v354, 4294901760
        %v640 = vsub.f32 %v354, %v639
        %v641 = vand.u32 %v640, 4294901760
        %642 = vmatmul.f32.gmra.mxu0 %v641
        %v643 = vpop.f32.mrf.mxu0
        %v644 = vadd.f32 %v599, %v643
        %645 = vdwg.mxu0
        %v646 = vand.u32 %v371, 4294901760
        %v647 = vsub.f32 %v371, %v646
        %v648 = vand.u32 %v647, 4294901760
        %649 = vmatpush.msra.mxu0 %v648
        %v650 = vand.u32 %v370, 4294901760
        %v651 = vsub.f32 %v370, %v650
        %v652 = vand.u32 %v651, 4294901760
        %653 = vmatpush.msra.mxu0 %v652
        %v654 = vand.u32 %v369, 4294901760
        %v655 = vsub.f32 %v369, %v654
        %v656 = vand.u32 %v655, 4294901760
        %657 = vmatpush.msra.mxu0 %v656
        %v658 = vand.u32 %v368, 4294901760
        %v659 = vsub.f32 %v368, %v658
        %v660 = vand.u32 %v659, 4294901760
        %661 = vmatpush.msra.mxu0 %v660
        %v662 = vand.u32 %v367, 4294901760
        %v663 = vsub.f32 %v367, %v662
        %v664 = vand.u32 %v663, 4294901760
        %665 = vmatpush.msra.mxu0 %v664
        %v666 = vand.u32 %v366, 4294901760
        %v667 = vsub.f32 %v366, %v666
        %v668 = vand.u32 %v667, 4294901760
        %669 = vmatpush.msra.mxu0 %v668
        %v670 = vand.u32 %v365, 4294901760
        %v671 = vsub.f32 %v365, %v670
        %v672 = vand.u32 %v671, 4294901760
        %673 = vmatpush.msra.mxu0 %v672
        %v674 = vand.u32 %v364, 4294901760
        %v675 = vsub.f32 %v364, %v674
        %v676 = vand.u32 %v675, 4294901760
        %677 = vmatpush.msra.mxu0 %v676
        %v678 = vand.u32 %v363, 4294901760
        %v679 = vsub.f32 %v363, %v678
        %v680 = vand.u32 %v679, 4294901760
        %681 = vmatpush.msra.mxu0 %v680
        %v682 = vand.u32 %v362, 4294901760
        %v683 = vsub.f32 %v362, %v682
        %v684 = vand.u32 %v683, 4294901760
        %685 = vmatpush.msra.mxu0 %v684
        %v686 = vand.u32 %v361, 4294901760
        %v687 = vsub.f32 %v361, %v686
        %v688 = vand.u32 %v687, 4294901760
        %689 = vmatpush.msra.mxu0 %v688
        %v690 = vand.u32 %v360, 4294901760
        %v691 = vsub.f32 %v360, %v690
        %v692 = vand.u32 %v691, 4294901760
        %693 = vmatpush.msra.mxu0 %v692
        %v694 = vand.u32 %v359, 4294901760
        %v695 = vsub.f32 %v359, %v694
        %v696 = vand.u32 %v695, 4294901760
        %697 = vmatpush.msra.mxu0 %v696
        %v698 = vand.u32 %v358, 4294901760
        %v699 = vsub.f32 %v358, %v698
        %v700 = vand.u32 %v699, 4294901760
        %701 = vmatpush.msra.mxu0 %v700
        %v702 = vand.u32 %v357, 4294901760
        %v703 = vsub.f32 %v357, %v702
        %v704 = vand.u32 %v703, 4294901760
        %705 = vmatpush.msra.mxu0 %v704
        %v706 = vand.u32 %v356, 4294901760
        %v707 = vsub.f32 %v356, %v706
        %v708 = vand.u32 %v707, 4294901760
        %709 = vmatpush.msra.mxu0 %v708
        %v710 = vand.u32 %v352, 4294901760
        %711 = vmatmul.f32.gmra.mxu0 %v710
        %v712 = vpop.f32.mrf.mxu0
        %v713 = vadd.f32 %v638, %v712
        %v714 = vand.u32 %v354, 4294901760
        %715 = vmatmul.f32.gmra.mxu0 %v714
        %v716 = vpop.f32.mrf.mxu0
        %v717 = vadd.f32 %v644, %v716
        %718 = vdwg.mxu0
        %v719 = vand.u32 %v371, 4294901760
        %720 = vmatpush.msra.mxu0 %v719
        %v721 = vand.u32 %v370, 4294901760
        %722 = vmatpush.msra.mxu0 %v721
        %v723 = vand.u32 %v369, 4294901760
        %724 = vmatpush.msra.mxu0 %v723
        %v725 = vand.u32 %v368, 4294901760
        %726 = vmatpush.msra.mxu0 %v725
        %v727 = vand.u32 %v367, 4294901760
        %728 = vmatpush.msra.mxu0 %v727
        %v729 = vand.u32 %v366, 4294901760
        %730 = vmatpush.msra.mxu0 %v729
        %v731 = vand.u32 %v365, 4294901760
        %732 = vmatpush.msra.mxu0 %v731
        %v733 = vand.u32 %v364, 4294901760
        %734 = vmatpush.msra.mxu0 %v733
        %v735 = vand.u32 %v363, 4294901760
        %736 = vmatpush.msra.mxu0 %v735
        %v737 = vand.u32 %v362, 4294901760
        %738 = vmatpush.msra.mxu0 %v737
        %v739 = vand.u32 %v361, 4294901760
        %740 = vmatpush.msra.mxu0 %v739
        %v741 = vand.u32 %v360, 4294901760
        %742 = vmatpush.msra.mxu0 %v741
        %v743 = vand.u32 %v359, 4294901760
        %744 = vmatpush.msra.mxu0 %v743
        %v745 = vand.u32 %v358, 4294901760
        %746 = vmatpush.msra.mxu0 %v745
        %v747 = vand.u32 %v357, 4294901760
        %748 = vmatpush.msra.mxu0 %v747
        %v749 = vand.u32 %v356, 4294901760
        %750 = vmatpush.msra.mxu0 %v749
        %v751 = vand.u32 %v352, 4294901760
        %752 = vmatmul.f32.gmra.mxu0 %v751
        %v753 = vpop.f32.mrf.mxu0
        %v754 = vadd.f32 %v713, %v753
        %v755 = vand.u32 %v354, 4294901760
        %756 = vmatmul.f32.gmra.mxu0 %v755
        %v757 = vpop.f32.mrf.mxu0
        %v758 = vadd.f32 %v717, %v757
        %759 = vdwg.mxu0
        %v760 = vand.u32 %v387, 4294901760
        %761 = vmatpush.msra.mxu0 %v760
        %v762 = vand.u32 %v386, 4294901760
        %763 = vmatpush.msra.mxu0 %v762
        %v764 = vand.u32 %v385, 4294901760
        %765 = vmatpush.msra.mxu0 %v764
        %v766 = vand.u32 %v384, 4294901760
        %767 = vmatpush.msra.mxu0 %v766
        %v768 = vand.u32 %v383, 4294901760
        %769 = vmatpush.msra.mxu0 %v768
        %v770 = vand.u32 %v382, 4294901760
        %771 = vmatpush.msra.mxu0 %v770
        %v772 = vand.u32 %v381, 4294901760
        %773 = vmatpush.msra.mxu0 %v772
        %v774 = vand.u32 %v380, 4294901760
        %775 = vmatpush.msra.mxu0 %v774
        %v776 = vand.u32 %v379, 4294901760
        %777 = vmatpush.msra.mxu0 %v776
        %v778 = vand.u32 %v378, 4294901760
        %779 = vmatpush.msra.mxu0 %v778
        %v780 = vand.u32 %v377, 4294901760
        %781 = vmatpush.msra.mxu0 %v780
        %v782 = vand.u32 %v376, 4294901760
        %783 = vmatpush.msra.mxu0 %v782
        %v784 = vand.u32 %v375, 4294901760
        %785 = vmatpush.msra.mxu0 %v784
        %v786 = vand.u32 %v374, 4294901760
        %787 = vmatpush.msra.mxu0 %v786
        %v788 = vand.u32 %v373, 4294901760
        %789 = vmatpush.msra.mxu0 %v788
        %v790 = vand.u32 %v372, 4294901760
        %791 = vmatpush.msra.mxu0 %v790
        %v792 = vand.u32 %v353, 4294901760
        %v793 = vsub.f32 %v353, %v792
        %v794 = vand.u32 %v793, 4294901760
        %v795 = vsub.f32 %v793, %v794
        %v796 = vand.u32 %v795, 4294901760
        %797 = vmatmul.f32.gmra.mxu0 %v796
        %v798 = vpop.f32.mrf.mxu0
        %v799 = vadd.f32 %v754, %v798
        %v800 = vand.u32 %v355, 4294901760
        %v801 = vsub.f32 %v355, %v800
        %v802 = vand.u32 %v801, 4294901760
        %v803 = vsub.f32 %v801, %v802
        %v804 = vand.u32 %v803, 4294901760
        %805 = vmatmul.f32.gmra.mxu0 %v804
        %v806 = vpop.f32.mrf.mxu0
        %v807 = vadd.f32 %v758, %v806
        %808 = vdwg.mxu0
        %v809 = vand.u32 %v387, 4294901760
        %v810 = vsub.f32 %v387, %v809
        %v811 = vand.u32 %v810, 4294901760
        %v812 = vsub.f32 %v810, %v811
        %v813 = vand.u32 %v812, 4294901760
        %814 = vmatpush.msra.mxu0 %v813
        %v815 = vand.u32 %v386, 4294901760
        %v816 = vsub.f32 %v386, %v815
        %v817 = vand.u32 %v816, 4294901760
        %v818 = vsub.f32 %v816, %v817
        %v819 = vand.u32 %v818, 4294901760
        %820 = vmatpush.msra.mxu0 %v819
        %v821 = vand.u32 %v385, 4294901760
        %v822 = vsub.f32 %v385, %v821
        %v823 = vand.u32 %v822, 4294901760
        %v824 = vsub.f32 %v822, %v823
        %v825 = vand.u32 %v824, 4294901760
        %826 = vmatpush.msra.mxu0 %v825
        %v827 = vand.u32 %v384, 4294901760
        %v828 = vsub.f32 %v384, %v827
        %v829 = vand.u32 %v828, 4294901760
        %v830 = vsub.f32 %v828, %v829
        %v831 = vand.u32 %v830, 4294901760
        %832 = vmatpush.msra.mxu0 %v831
        %v833 = vand.u32 %v383, 4294901760
        %v834 = vsub.f32 %v383, %v833
        %v835 = vand.u32 %v834, 4294901760
        %v836 = vsub.f32 %v834, %v835
        %v837 = vand.u32 %v836, 4294901760
        %838 = vmatpush.msra.mxu0 %v837
        %v839 = vand.u32 %v382, 4294901760
        %v840 = vsub.f32 %v382, %v839
        %v841 = vand.u32 %v840, 4294901760
        %v842 = vsub.f32 %v840, %v841
        %v843 = vand.u32 %v842, 4294901760
        %844 = vmatpush.msra.mxu0 %v843
        %v845 = vand.u32 %v381, 4294901760
        %v846 = vsub.f32 %v381, %v845
        %v847 = vand.u32 %v846, 4294901760
        %v848 = vsub.f32 %v846, %v847
        %v849 = vand.u32 %v848, 4294901760
        %850 = vmatpush.msra.mxu0 %v849
        %v851 = vand.u32 %v380, 4294901760
        %v852 = vsub.f32 %v380, %v851
        %v853 = vand.u32 %v852, 4294901760
        %v854 = vsub.f32 %v852, %v853
        %v855 = vand.u32 %v854, 4294901760
        %856 = vmatpush.msra.mxu0 %v855
        %v857 = vand.u32 %v379, 4294901760
        %v858 = vsub.f32 %v379, %v857
        %v859 = vand.u32 %v858, 4294901760
        %v860 = vsub.f32 %v858, %v859
        %v861 = vand.u32 %v860, 4294901760
        %862 = vmatpush.msra.mxu0 %v861
        %v863 = vand.u32 %v378, 4294901760
        %v864 = vsub.f32 %v378, %v863
        %v865 = vand.u32 %v864, 4294901760
        %v866 = vsub.f32 %v864, %v865
        %v867 = vand.u32 %v866, 4294901760
        %868 = vmatpush.msra.mxu0 %v867
        %v869 = vand.u32 %v377, 4294901760
        %v870 = vsub.f32 %v377, %v869
        %v871 = vand.u32 %v870, 4294901760
        %v872 = vsub.f32 %v870, %v871
        %v873 = vand.u32 %v872, 4294901760
        %874 = vmatpush.msra.mxu0 %v873
        %v875 = vand.u32 %v376, 4294901760
        %v876 = vsub.f32 %v376, %v875
        %v877 = vand.u32 %v876, 4294901760
        %v878 = vsub.f32 %v876, %v877
        %v879 = vand.u32 %v878, 4294901760
        %880 = vmatpush.msra.mxu0 %v879
        %v881 = vand.u32 %v375, 4294901760
        %v882 = vsub.f32 %v375, %v881
        %v883 = vand.u32 %v882, 4294901760
        %v884 = vsub.f32 %v882, %v883
        %v885 = vand.u32 %v884, 4294901760
        %886 = vmatpush.msra.mxu0 %v885
        %v887 = vand.u32 %v374, 4294901760
        %v888 = vsub.f32 %v374, %v887
        %v889 = vand.u32 %v888, 4294901760
        %v890 = vsub.f32 %v888, %v889
        %v891 = vand.u32 %v890, 4294901760
        %892 = vmatpush.msra.mxu0 %v891
        %v893 = vand.u32 %v373, 4294901760
        %v894 = vsub.f32 %v373, %v893
        %v895 = vand.u32 %v894, 4294901760
        %v896 = vsub.f32 %v894, %v895
        %v897 = vand.u32 %v896, 4294901760
        %898 = vmatpush.msra.mxu0 %v897
        %v899 = vand.u32 %v372, 4294901760
        %v900 = vsub.f32 %v372, %v899
        %v901 = vand.u32 %v900, 4294901760
        %v902 = vsub.f32 %v900, %v901
        %v903 = vand.u32 %v902, 4294901760
        %904 = vmatpush.msra.mxu0 %v903
        %v905 = vand.u32 %v353, 4294901760
        %906 = vmatmul.f32.gmra.mxu0 %v905
        %v907 = vpop.f32.mrf.mxu0
        %v908 = vadd.f32 %v799, %v907
        %v909 = vand.u32 %v355, 4294901760
        %910 = vmatmul.f32.gmra.mxu0 %v909
        %v911 = vpop.f32.mrf.mxu0
        %v912 = vadd.f32 %v807, %v911
        %913 = vdwg.mxu0
        %v914 = vand.u32 %v387, 4294901760
        %v915 = vsub.f32 %v387, %v914
        %916 = vmatpush.msra.mxu0 %v915
        %v917 = vand.u32 %v386, 4294901760
        %v918 = vsub.f32 %v386, %v917
        %919 = vmatpush.msra.mxu0 %v918
        %v920 = vand.u32 %v385, 4294901760
        %v921 = vsub.f32 %v385, %v920
        %922 = vmatpush.msra.mxu0 %v921
        %v923 = vand.u32 %v384, 4294901760
        %v924 = vsub.f32 %v384, %v923
        %925 = vmatpush.msra.mxu0 %v924
        %v926 = vand.u32 %v383, 4294901760
        %v927 = vsub.f32 %v383, %v926
        %928 = vmatpush.msra.mxu0 %v927
        %v929 = vand.u32 %v382, 4294901760
        %v930 = vsub.f32 %v382, %v929
        %931 = vmatpush.msra.mxu0 %v930
        %v932 = vand.u32 %v381, 4294901760
        %v933 = vsub.f32 %v381, %v932
        %934 = vmatpush.msra.mxu0 %v933
        %v935 = vand.u32 %v380, 4294901760
        %v936 = vsub.f32 %v380, %v935
        %937 = vmatpush.msra.mxu0 %v936
        %v938 = vand.u32 %v379, 4294901760
        %v939 = vsub.f32 %v379, %v938
        %940 = vmatpush.msra.mxu0 %v939
        %v941 = vand.u32 %v378, 4294901760
        %v942 = vsub.f32 %v378, %v941
        %943 = vmatpush.msra.mxu0 %v942
        %v944 = vand.u32 %v377, 4294901760
        %v945 = vsub.f32 %v377, %v944
        %946 = vmatpush.msra.mxu0 %v945
        %v947 = vand.u32 %v376, 4294901760
        %v948 = vsub.f32 %v376, %v947
        %949 = vmatpush.msra.mxu0 %v948
        %v950 = vand.u32 %v375, 4294901760
        %v951 = vsub.f32 %v375, %v950
        %952 = vmatpush.msra.mxu0 %v951
        %v953 = vand.u32 %v374, 4294901760
        %v954 = vsub.f32 %v374, %v953
        %955 = vmatpush.msra.mxu0 %v954
        %v956 = vand.u32 %v373, 4294901760
        %v957 = vsub.f32 %v373, %v956
        %958 = vmatpush.msra.mxu0 %v957
        %v959 = vand.u32 %v372, 4294901760
        %v960 = vsub.f32 %v372, %v959
        %961 = vmatpush.msra.mxu0 %v960
        %v962 = vand.u32 %v353, 4294901760
        %v963 = vsub.f32 %v353, %v962
        %964 = vmatmul.f32.gmra.mxu0 %v963
        %v965 = vpop.f32.mrf.mxu0
        %v966 = vadd.f32 %v908, %v965
        %v967 = vand.u32 %v355, 4294901760
        %v968 = vsub.f32 %v355, %v967
        %969 = vmatmul.f32.gmra.mxu0 %v968
        %v970 = vpop.f32.mrf.mxu0
        %v971 = vadd.f32 %v912, %v970
        %972 = vdwg.mxu0
        %v973 = vand.u32 %v387, 4294901760
        %974 = vmatpush.msra.mxu0 %v973
        %v975 = vand.u32 %v386, 4294901760
        %976 = vmatpush.msra.mxu0 %v975
        %v977 = vand.u32 %v385, 4294901760
        %978 = vmatpush.msra.mxu0 %v977
        %v979 = vand.u32 %v384, 4294901760
        %980 = vmatpush.msra.mxu0 %v979
        %v981 = vand.u32 %v383, 4294901760
        %982 = vmatpush.msra.mxu0 %v981
        %v983 = vand.u32 %v382, 4294901760
        %984 = vmatpush.msra.mxu0 %v983
        %v985 = vand.u32 %v381, 4294901760
        %986 = vmatpush.msra.mxu0 %v985
        %v987 = vand.u32 %v380, 4294901760
        %988 = vmatpush.msra.mxu0 %v987
        %v989 = vand.u32 %v379, 4294901760
        %990 = vmatpush.msra.mxu0 %v989
        %v991 = vand.u32 %v378, 4294901760
        %992 = vmatpush.msra.mxu0 %v991
        %v993 = vand.u32 %v377, 4294901760
        %994 = vmatpush.msra.mxu0 %v993
        %v995 = vand.u32 %v376, 4294901760
        %996 = vmatpush.msra.mxu0 %v995
        %v997 = vand.u32 %v375, 4294901760
        %998 = vmatpush.msra.mxu0 %v997
        %v999 = vand.u32 %v374, 4294901760
        %1000 = vmatpush.msra.mxu0 %v999
        %v1001 = vand.u32 %v373, 4294901760
        %1002 = vmatpush.msra.mxu0 %v1001
        %v1003 = vand.u32 %v372, 4294901760
        %1004 = vmatpush.msra.mxu0 %v1003
        %v1005 = vand.u32 %v353, 4294901760
        %v1006 = vsub.f32 %v353, %v1005
        %v1007 = vand.u32 %v1006, 4294901760
        %1008 = vmatmul.f32.gmra.mxu0 %v1007
        %v1009 = vpop.f32.mrf.mxu0
        %v1010 = vadd.f32 %v966, %v1009
        %v1011 = vand.u32 %v355, 4294901760
        %v1012 = vsub.f32 %v355, %v1011
        %v1013 = vand.u32 %v1012, 4294901760
        %1014 = vmatmul.f32.gmra.mxu0 %v1013
        %v1015 = vpop.f32.mrf.mxu0
        %v1016 = vadd.f32 %v971, %v1015
        %1017 = vdwg.mxu0
        %v1018 = vand.u32 %v387, 4294901760
        %v1019 = vsub.f32 %v387, %v1018
        %v1020 = vand.u32 %v1019, 4294901760
        %1021 = vmatpush.msra.mxu0 %v1020
        %v1022 = vand.u32 %v386, 4294901760
        %v1023 = vsub.f32 %v386, %v1022
        %v1024 = vand.u32 %v1023, 4294901760
        %1025 = vmatpush.msra.mxu0 %v1024
        %v1026 = vand.u32 %v385, 4294901760
        %v1027 = vsub.f32 %v385, %v1026
        %v1028 = vand.u32 %v1027, 4294901760
        %1029 = vmatpush.msra.mxu0 %v1028
        %v1030 = vand.u32 %v384, 4294901760
        %v1031 = vsub.f32 %v384, %v1030
        %v1032 = vand.u32 %v1031, 4294901760
        %1033 = vmatpush.msra.mxu0 %v1032
        %v1034 = vand.u32 %v383, 4294901760
        %v1035 = vsub.f32 %v383, %v1034
        %v1036 = vand.u32 %v1035, 4294901760
        %1037 = vmatpush.msra.mxu0 %v1036
        %v1038 = vand.u32 %v382, 4294901760
        %v1039 = vsub.f32 %v382, %v1038
        %v1040 = vand.u32 %v1039, 4294901760
        %1041 = vmatpush.msra.mxu0 %v1040
        %v1042 = vand.u32 %v381, 4294901760
        %v1043 = vsub.f32 %v381, %v1042
        %v1044 = vand.u32 %v1043, 4294901760
        %1045 = vmatpush.msra.mxu0 %v1044
        %v1046 = vand.u32 %v380, 4294901760
        %v1047 = vsub.f32 %v380, %v1046
        %v1048 = vand.u32 %v1047, 4294901760
        %1049 = vmatpush.msra.mxu0 %v1048
        %v1050 = vand.u32 %v379, 4294901760
        %v1051 = vsub.f32 %v379, %v1050
        %v1052 = vand.u32 %v1051, 4294901760
        %1053 = vmatpush.msra.mxu0 %v1052
        %v1054 = vand.u32 %v378, 4294901760
        %v1055 = vsub.f32 %v378, %v1054
        %v1056 = vand.u32 %v1055, 4294901760
        %1057 = vmatpush.msra.mxu0 %v1056
        %v1058 = vand.u32 %v377, 4294901760
        %v1059 = vsub.f32 %v377, %v1058
        %v1060 = vand.u32 %v1059, 4294901760
        %1061 = vmatpush.msra.mxu0 %v1060
        %v1062 = vand.u32 %v376, 4294901760
        %v1063 = vsub.f32 %v376, %v1062
        %v1064 = vand.u32 %v1063, 4294901760
        %1065 = vmatpush.msra.mxu0 %v1064
        %v1066 = vand.u32 %v375, 4294901760
        %v1067 = vsub.f32 %v375, %v1066
        %v1068 = vand.u32 %v1067, 4294901760
        %1069 = vmatpush.msra.mxu0 %v1068
        %v1070 = vand.u32 %v374, 4294901760
        %v1071 = vsub.f32 %v374, %v1070
        %v1072 = vand.u32 %v1071, 4294901760
        %1073 = vmatpush.msra.mxu0 %v1072
        %v1074 = vand.u32 %v373, 4294901760
        %v1075 = vsub.f32 %v373, %v1074
        %v1076 = vand.u32 %v1075, 4294901760
        %1077 = vmatpush.msra.mxu0 %v1076
        %v1078 = vand.u32 %v372, 4294901760
        %v1079 = vsub.f32 %v372, %v1078
        %v1080 = vand.u32 %v1079, 4294901760
        %1081 = vmatpush.msra.mxu0 %v1080
        %v1082 = vand.u32 %v353, 4294901760
        %1083 = vmatmul.f32.gmra.mxu0 %v1082
        %v1084 = vpop.f32.mrf.mxu0
        %v1085 = vadd.f32 %v1010, %v1084
        %v1086 = vand.u32 %v355, 4294901760
        %1087 = vmatmul.f32.gmra.mxu0 %v1086
        %v1088 = vpop.f32.mrf.mxu0
        %v1089 = vadd.f32 %v1016, %v1088
        %1090 = vdwg.mxu0
        %v1091 = vand.u32 %v387, 4294901760
        %1092 = vmatpush.msra.mxu0 %v1091
        %v1093 = vand.u32 %v386, 4294901760
        %1094 = vmatpush.msra.mxu0 %v1093
        %v1095 = vand.u32 %v385, 4294901760
        %1096 = vmatpush.msra.mxu0 %v1095
        %v1097 = vand.u32 %v384, 4294901760
        %1098 = vmatpush.msra.mxu0 %v1097
        %v1099 = vand.u32 %v383, 4294901760
        %1100 = vmatpush.msra.mxu0 %v1099
        %v1101 = vand.u32 %v382, 4294901760
        %1102 = vmatpush.msra.mxu0 %v1101
        %v1103 = vand.u32 %v381, 4294901760
        %1104 = vmatpush.msra.mxu0 %v1103
        %v1105 = vand.u32 %v380, 4294901760
        %1106 = vmatpush.msra.mxu0 %v1105
        %v1107 = vand.u32 %v379, 4294901760
        %1108 = vmatpush.msra.mxu0 %v1107
        %v1109 = vand.u32 %v378, 4294901760
        %1110 = vmatpush.msra.mxu0 %v1109
        %v1111 = vand.u32 %v377, 4294901760
        %1112 = vmatpush.msra.mxu0 %v1111
        %v1113 = vand.u32 %v376, 4294901760
        %1114 = vmatpush.msra.mxu0 %v1113
        %v1115 = vand.u32 %v375, 4294901760
        %1116 = vmatpush.msra.mxu0 %v1115
        %v1117 = vand.u32 %v374, 4294901760
        %1118 = vmatpush.msra.mxu0 %v1117
        %v1119 = vand.u32 %v373, 4294901760
        %1120 = vmatpush.msra.mxu0 %v1119
        %v1121 = vand.u32 %v372, 4294901760
        %1122 = vmatpush.msra.mxu0 %v1121
        %v1123 = vand.u32 %v353, 4294901760
        %1124 = vmatmul.f32.gmra.mxu0 %v1123
        %v1125 = vpop.f32.mrf.mxu0
        %v1126 = vadd.f32 %v1085, %v1125
        %v1127 = vand.u32 %v355, 4294901760
        %1128 = vmatmul.f32.gmra.mxu0 %v1127
        %v1129 = vpop.f32.mrf.mxu0
        %v1130 = vadd.f32 %v1089, %v1129
        %1131 = vdwg.mxu0
        %v1132 = vld [vmem:[%s5] sm:$0xff]
        %v1133 = vld [vmem:[%s5 + $0x8] sm:$0xff]
        %v1134 = vld [vmem:[%s5 + $0x10] sm:$0xff]
        %v1135 = vld [vmem:[%s5 + $0x18] sm:$0xff]
        %v1136 = vld [vmem:[%s5 + $0x20] sm:$0xff]
        %v1137 = vld [vmem:[%s5 + $0x28] sm:$0xff]
        %v1138 = vld [vmem:[%s5 + $0x30] sm:$0xff]
        %v1139 = vld [vmem:[%s5 + $0x38] sm:$0xff]
        %v1140 = vld [vmem:[%s5 + $0x40] sm:$0xff]
        %v1141 = vld [vmem:[%s5 + $0x48] sm:$0xff]
        %v1142 = vld [vmem:[%s5 + $0x50] sm:$0xff]
        %v1143 = vld [vmem:[%s5 + $0x58] sm:$0xff]
        %v1144 = vld [vmem:[%s5 + $0x60] sm:$0xff]
        %v1145 = vld [vmem:[%s5 + $0x68] sm:$0xff]
        %v1146 = vld [vmem:[%s5 + $0x70] sm:$0xff]
        %v1147 = vld [vmem:[%s5 + $0x78] sm:$0xff]
        %v1148 = vld [vmem:[%s5 + $0x80] sm:$0xff]
        %v1149 = vld [vmem:[%s5 + $0x88] sm:$0xff]
        %v1150 = vld [vmem:[%s5 + $0x90] sm:$0xff]
        %v1151 = vld [vmem:[%s5 + $0x98] sm:$0xff]
        %v1152 = vld [vmem:[%s5 + $0xa0] sm:$0xff]
        %v1153 = vld [vmem:[%s5 + $0xa8] sm:$0xff]
        %v1154 = vld [vmem:[%s5 + $0xb0] sm:$0xff]
        %v1155 = vld [vmem:[%s5 + $0xb8] sm:$0xff]
        %v1156 = vld [vmem:[%s5 + $0xc0] sm:$0xff]
        %v1157 = vld [vmem:[%s5 + $0xc8] sm:$0xff]
        %v1158 = vld [vmem:[%s5 + $0xd0] sm:$0xff]
        %v1159 = vld [vmem:[%s5 + $0xd8] sm:$0xff]
        %v1160 = vld [vmem:[%s5 + $0xe0] sm:$0xff]
        %v1161 = vld [vmem:[%s5 + $0xe8] sm:$0xff]
        %v1162 = vld [vmem:[%s5 + $0xf0] sm:$0xff]
        %v1163 = vld [vmem:[%s5 + $0xf8] sm:$0xff]
        %v1164 = vand.u32 %v1147, 4294901760
        %1165 = vmatpush.msra.mxu0 %v1164
        %v1166 = vand.u32 %v1146, 4294901760
        %1167 = vmatpush.msra.mxu0 %v1166
        %v1168 = vand.u32 %v1145, 4294901760
        %1169 = vmatpush.msra.mxu0 %v1168
        %v1170 = vand.u32 %v1144, 4294901760
        %1171 = vmatpush.msra.mxu0 %v1170
        %v1172 = vand.u32 %v1143, 4294901760
        %1173 = vmatpush.msra.mxu0 %v1172
        %v1174 = vand.u32 %v1142, 4294901760
        %1175 = vmatpush.msra.mxu0 %v1174
        %v1176 = vand.u32 %v1141, 4294901760
        %1177 = vmatpush.msra.mxu0 %v1176
        %v1178 = vand.u32 %v1140, 4294901760
        %1179 = vmatpush.msra.mxu0 %v1178
        %v1180 = vand.u32 %v1139, 4294901760
        %1181 = vmatpush.msra.mxu0 %v1180
        %v1182 = vand.u32 %v1138, 4294901760
        %1183 = vmatpush.msra.mxu0 %v1182
        %v1184 = vand.u32 %v1137, 4294901760
        %1185 = vmatpush.msra.mxu0 %v1184
        %v1186 = vand.u32 %v1136, 4294901760
        %1187 = vmatpush.msra.mxu0 %v1186
        %v1188 = vand.u32 %v1135, 4294901760
        %1189 = vmatpush.msra.mxu0 %v1188
        %v1190 = vand.u32 %v1134, 4294901760
        %1191 = vmatpush.msra.mxu0 %v1190
        %v1192 = vand.u32 %v1133, 4294901760
        %1193 = vmatpush.msra.mxu0 %v1192
        %v1194 = vand.u32 %v1132, 4294901760
        %1195 = vmatpush.msra.mxu0 %v1194
        %v1196 = vand.u32 %v352, 4294901760
        %v1197 = vsub.f32 %v352, %v1196
        %v1198 = vand.u32 %v1197, 4294901760
        %v1199 = vsub.f32 %v1197, %v1198
        %v1200 = vand.u32 %v1199, 4294901760
        %1201 = vmatmul.f32.gmra.mxu0 %v1200
        %v1202 = vpop.f32.mrf.mxu0
        %v1203 = vadd.f32 0.0, %v1202
        %v1204 = vand.u32 %v354, 4294901760
        %v1205 = vsub.f32 %v354, %v1204
        %v1206 = vand.u32 %v1205, 4294901760
        %v1207 = vsub.f32 %v1205, %v1206
        %v1208 = vand.u32 %v1207, 4294901760
        %1209 = vmatmul.f32.gmra.mxu0 %v1208
        %v1210 = vpop.f32.mrf.mxu0
        %v1211 = vadd.f32 0.0, %v1210
        %1212 = vdwg.mxu0
        %v1213 = vand.u32 %v1147, 4294901760
        %v1214 = vsub.f32 %v1147, %v1213
        %v1215 = vand.u32 %v1214, 4294901760
        %v1216 = vsub.f32 %v1214, %v1215
        %v1217 = vand.u32 %v1216, 4294901760
        %1218 = vmatpush.msra.mxu0 %v1217
        %v1219 = vand.u32 %v1146, 4294901760
        %v1220 = vsub.f32 %v1146, %v1219
        %v1221 = vand.u32 %v1220, 4294901760
        %v1222 = vsub.f32 %v1220, %v1221
        %v1223 = vand.u32 %v1222, 4294901760
        %1224 = vmatpush.msra.mxu0 %v1223
        %v1225 = vand.u32 %v1145, 4294901760
        %v1226 = vsub.f32 %v1145, %v1225
        %v1227 = vand.u32 %v1226, 4294901760
        %v1228 = vsub.f32 %v1226, %v1227
        %v1229 = vand.u32 %v1228, 4294901760
        %1230 = vmatpush.msra.mxu0 %v1229
        %v1231 = vand.u32 %v1144, 4294901760
        %v1232 = vsub.f32 %v1144, %v1231
        %v1233 = vand.u32 %v1232, 4294901760
        %v1234 = vsub.f32 %v1232, %v1233
        %v1235 = vand.u32 %v1234, 4294901760
        %1236 = vmatpush.msra.mxu0 %v1235
        %v1237 = vand.u32 %v1143, 4294901760
        %v1238 = vsub.f32 %v1143, %v1237
        %v1239 = vand.u32 %v1238, 4294901760
        %v1240 = vsub.f32 %v1238, %v1239
        %v1241 = vand.u32 %v1240, 4294901760
        %1242 = vmatpush.msra.mxu0 %v1241
        %v1243 = vand.u32 %v1142, 4294901760
        %v1244 = vsub.f32 %v1142, %v1243
        %v1245 = vand.u32 %v1244, 4294901760
        %v1246 = vsub.f32 %v1244, %v1245
        %v1247 = vand.u32 %v1246, 4294901760
        %1248 = vmatpush.msra.mxu0 %v1247
        %v1249 = vand.u32 %v1141, 4294901760
        %v1250 = vsub.f32 %v1141, %v1249
        %v1251 = vand.u32 %v1250, 4294901760
        %v1252 = vsub.f32 %v1250, %v1251
        %v1253 = vand.u32 %v1252, 4294901760
        %1254 = vmatpush.msra.mxu0 %v1253
        %v1255 = vand.u32 %v1140, 4294901760
        %v1256 = vsub.f32 %v1140, %v1255
        %v1257 = vand.u32 %v1256, 4294901760
        %v1258 = vsub.f32 %v1256, %v1257
        %v1259 = vand.u32 %v1258, 4294901760
        %1260 = vmatpush.msra.mxu0 %v1259
        %v1261 = vand.u32 %v1139, 4294901760
        %v1262 = vsub.f32 %v1139, %v1261
        %v1263 = vand.u32 %v1262, 4294901760
        %v1264 = vsub.f32 %v1262, %v1263
        %v1265 = vand.u32 %v1264, 4294901760
        %1266 = vmatpush.msra.mxu0 %v1265
        %v1267 = vand.u32 %v1138, 4294901760
        %v1268 = vsub.f32 %v1138, %v1267
        %v1269 = vand.u32 %v1268, 4294901760
        %v1270 = vsub.f32 %v1268, %v1269
        %v1271 = vand.u32 %v1270, 4294901760
        %1272 = vmatpush.msra.mxu0 %v1271
        %v1273 = vand.u32 %v1137, 4294901760
        %v1274 = vsub.f32 %v1137, %v1273
        %v1275 = vand.u32 %v1274, 4294901760
        %v1276 = vsub.f32 %v1274, %v1275
        %v1277 = vand.u32 %v1276, 4294901760
        %1278 = vmatpush.msra.mxu0 %v1277
        %v1279 = vand.u32 %v1136, 4294901760
        %v1280 = vsub.f32 %v1136, %v1279
        %v1281 = vand.u32 %v1280, 4294901760
        %v1282 = vsub.f32 %v1280, %v1281
        %v1283 = vand.u32 %v1282, 4294901760
        %1284 = vmatpush.msra.mxu0 %v1283
        %v1285 = vand.u32 %v1135, 4294901760
        %v1286 = vsub.f32 %v1135, %v1285
        %v1287 = vand.u32 %v1286, 4294901760
        %v1288 = vsub.f32 %v1286, %v1287
        %v1289 = vand.u32 %v1288, 4294901760
        %1290 = vmatpush.msra.mxu0 %v1289
        %v1291 = vand.u32 %v1134, 4294901760
        %v1292 = vsub.f32 %v1134, %v1291
        %v1293 = vand.u32 %v1292, 4294901760
        %v1294 = vsub.f32 %v1292, %v1293
        %v1295 = vand.u32 %v1294, 4294901760
        %1296 = vmatpush.msra.mxu0 %v1295
        %v1297 = vand.u32 %v1133, 4294901760
        %v1298 = vsub.f32 %v1133, %v1297
        %v1299 = vand.u32 %v1298, 4294901760
        %v1300 = vsub.f32 %v1298, %v1299
        %v1301 = vand.u32 %v1300, 4294901760
        %1302 = vmatpush.msra.mxu0 %v1301
        %v1303 = vand.u32 %v1132, 4294901760
        %v1304 = vsub.f32 %v1132, %v1303
        %v1305 = vand.u32 %v1304, 4294901760
        %v1306 = vsub.f32 %v1304, %v1305
        %v1307 = vand.u32 %v1306, 4294901760
        %1308 = vmatpush.msra.mxu0 %v1307
        %v1309 = vand.u32 %v352, 4294901760
        %1310 = vmatmul.f32.gmra.mxu0 %v1309
        %v1311 = vpop.f32.mrf.mxu0
        %v1312 = vadd.f32 %v1203, %v1311
        %v1313 = vand.u32 %v354, 4294901760
        %1314 = vmatmul.f32.gmra.mxu0 %v1313
        %v1315 = vpop.f32.mrf.mxu0
        %v1316 = vadd.f32 %v1211, %v1315
        %1317 = vdwg.mxu0
        %v1318 = vand.u32 %v1147, 4294901760
        %v1319 = vsub.f32 %v1147, %v1318
        %1320 = vmatpush.msra.mxu0 %v1319
        %v1321 = vand.u32 %v1146, 4294901760
        %v1322 = vsub.f32 %v1146, %v1321
        %1323 = vmatpush.msra.mxu0 %v1322
        %v1324 = vand.u32 %v1145, 4294901760
        %v1325 = vsub.f32 %v1145, %v1324
        %1326 = vmatpush.msra.mxu0 %v1325
        %v1327 = vand.u32 %v1144, 4294901760
        %v1328 = vsub.f32 %v1144, %v1327
        %1329 = vmatpush.msra.mxu0 %v1328
        %v1330 = vand.u32 %v1143, 4294901760
        %v1331 = vsub.f32 %v1143, %v1330
        %1332 = vmatpush.msra.mxu0 %v1331
        %v1333 = vand.u32 %v1142, 4294901760
        %v1334 = vsub.f32 %v1142, %v1333
        %1335 = vmatpush.msra.mxu0 %v1334
        %v1336 = vand.u32 %v1141, 4294901760
        %v1337 = vsub.f32 %v1141, %v1336
        %1338 = vmatpush.msra.mxu0 %v1337
        %v1339 = vand.u32 %v1140, 4294901760
        %v1340 = vsub.f32 %v1140, %v1339
        %1341 = vmatpush.msra.mxu0 %v1340
        %v1342 = vand.u32 %v1139, 4294901760
        %v1343 = vsub.f32 %v1139, %v1342
        %1344 = vmatpush.msra.mxu0 %v1343
        %v1345 = vand.u32 %v1138, 4294901760
        %v1346 = vsub.f32 %v1138, %v1345
        %1347 = vmatpush.msra.mxu0 %v1346
        %v1348 = vand.u32 %v1137, 4294901760
        %v1349 = vsub.f32 %v1137, %v1348
        %1350 = vmatpush.msra.mxu0 %v1349
        %v1351 = vand.u32 %v1136, 4294901760
        %v1352 = vsub.f32 %v1136, %v1351
        %1353 = vmatpush.msra.mxu0 %v1352
        %v1354 = vand.u32 %v1135, 4294901760
        %v1355 = vsub.f32 %v1135, %v1354
        %1356 = vmatpush.msra.mxu0 %v1355
        %v1357 = vand.u32 %v1134, 4294901760
        %v1358 = vsub.f32 %v1134, %v1357
        %1359 = vmatpush.msra.mxu0 %v1358
        %v1360 = vand.u32 %v1133, 4294901760
        %v1361 = vsub.f32 %v1133, %v1360
        %1362 = vmatpush.msra.mxu0 %v1361
        %v1363 = vand.u32 %v1132, 4294901760
        %v1364 = vsub.f32 %v1132, %v1363
        %1365 = vmatpush.msra.mxu0 %v1364
        %v1366 = vand.u32 %v352, 4294901760
        %v1367 = vsub.f32 %v352, %v1366
        %1368 = vmatmul.f32.gmra.mxu0 %v1367
        %v1369 = vpop.f32.mrf.mxu0
        %v1370 = vadd.f32 %v1312, %v1369
        %v1371 = vand.u32 %v354, 4294901760
        %v1372 = vsub.f32 %v354, %v1371
        %1373 = vmatmul.f32.gmra.mxu0 %v1372
        %v1374 = vpop.f32.mrf.mxu0
        %v1375 = vadd.f32 %v1316, %v1374
        %1376 = vdwg.mxu0
        %v1377 = vand.u32 %v1147, 4294901760
        %1378 = vmatpush.msra.mxu0 %v1377
        %v1379 = vand.u32 %v1146, 4294901760
        %1380 = vmatpush.msra.mxu0 %v1379
        %v1381 = vand.u32 %v1145, 4294901760
        %1382 = vmatpush.msra.mxu0 %v1381
        %v1383 = vand.u32 %v1144, 4294901760
        %1384 = vmatpush.msra.mxu0 %v1383
        %v1385 = vand.u32 %v1143, 4294901760
        %1386 = vmatpush.msra.mxu0 %v1385
        %v1387 = vand.u32 %v1142, 4294901760
        %1388 = vmatpush.msra.mxu0 %v1387
        %v1389 = vand.u32 %v1141, 4294901760
        %1390 = vmatpush.msra.mxu0 %v1389
        %v1391 = vand.u32 %v1140, 4294901760
        %1392 = vmatpush.msra.mxu0 %v1391
        %v1393 = vand.u32 %v1139, 4294901760
        %1394 = vmatpush.msra.mxu0 %v1393
        %v1395 = vand.u32 %v1138, 4294901760
        %1396 = vmatpush.msra.mxu0 %v1395
        %v1397 = vand.u32 %v1137, 4294901760
        %1398 = vmatpush.msra.mxu0 %v1397
        %v1399 = vand.u32 %v1136, 4294901760
        %1400 = vmatpush.msra.mxu0 %v1399
        %v1401 = vand.u32 %v1135, 4294901760
        %1402 = vmatpush.msra.mxu0 %v1401
        %v1403 = vand.u32 %v1134, 4294901760
        %1404 = vmatpush.msra.mxu0 %v1403
        %v1405 = vand.u32 %v1133, 4294901760
        %1406 = vmatpush.msra.mxu0 %v1405
        %v1407 = vand.u32 %v1132, 4294901760
        %1408 = vmatpush.msra.mxu0 %v1407
        %v1409 = vand.u32 %v352, 4294901760
        %v1410 = vsub.f32 %v352, %v1409
        %v1411 = vand.u32 %v1410, 4294901760
        %1412 = vmatmul.f32.gmra.mxu0 %v1411
        %v1413 = vpop.f32.mrf.mxu0
        %v1414 = vadd.f32 %v1370, %v1413
        %v1415 = vand.u32 %v354, 4294901760
        %v1416 = vsub.f32 %v354, %v1415
        %v1417 = vand.u32 %v1416, 4294901760
        %1418 = vmatmul.f32.gmra.mxu0 %v1417
        %v1419 = vpop.f32.mrf.mxu0
        %v1420 = vadd.f32 %v1375, %v1419
        %1421 = vdwg.mxu0
        %v1422 = vand.u32 %v1147, 4294901760
        %v1423 = vsub.f32 %v1147, %v1422
        %v1424 = vand.u32 %v1423, 4294901760
        %1425 = vmatpush.msra.mxu0 %v1424
        %v1426 = vand.u32 %v1146, 4294901760
        %v1427 = vsub.f32 %v1146, %v1426
        %v1428 = vand.u32 %v1427, 4294901760
        %1429 = vmatpush.msra.mxu0 %v1428
        %v1430 = vand.u32 %v1145, 4294901760
        %v1431 = vsub.f32 %v1145, %v1430
        %v1432 = vand.u32 %v1431, 4294901760
        %1433 = vmatpush.msra.mxu0 %v1432
        %v1434 = vand.u32 %v1144, 4294901760
        %v1435 = vsub.f32 %v1144, %v1434
        %v1436 = vand.u32 %v1435, 4294901760
        %1437 = vmatpush.msra.mxu0 %v1436
        %v1438 = vand.u32 %v1143, 4294901760
        %v1439 = vsub.f32 %v1143, %v1438
        %v1440 = vand.u32 %v1439, 4294901760
        %1441 = vmatpush.msra.mxu0 %v1440
        %v1442 = vand.u32 %v1142, 4294901760
        %v1443 = vsub.f32 %v1142, %v1442
        %v1444 = vand.u32 %v1443, 4294901760
        %1445 = vmatpush.msra.mxu0 %v1444
        %v1446 = vand.u32 %v1141, 4294901760
        %v1447 = vsub.f32 %v1141, %v1446
        %v1448 = vand.u32 %v1447, 4294901760
        %1449 = vmatpush.msra.mxu0 %v1448
        %v1450 = vand.u32 %v1140, 4294901760
        %v1451 = vsub.f32 %v1140, %v1450
        %v1452 = vand.u32 %v1451, 4294901760
        %1453 = vmatpush.msra.mxu0 %v1452
        %v1454 = vand.u32 %v1139, 4294901760
        %v1455 = vsub.f32 %v1139, %v1454
        %v1456 = vand.u32 %v1455, 4294901760
        %1457 = vmatpush.msra.mxu0 %v1456
        %v1458 = vand.u32 %v1138, 4294901760
        %v1459 = vsub.f32 %v1138, %v1458
        %v1460 = vand.u32 %v1459, 4294901760
        %1461 = vmatpush.msra.mxu0 %v1460
        %v1462 = vand.u32 %v1137, 4294901760
        %v1463 = vsub.f32 %v1137, %v1462
        %v1464 = vand.u32 %v1463, 4294901760
        %1465 = vmatpush.msra.mxu0 %v1464
        %v1466 = vand.u32 %v1136, 4294901760
        %v1467 = vsub.f32 %v1136, %v1466
        %v1468 = vand.u32 %v1467, 4294901760
        %1469 = vmatpush.msra.mxu0 %v1468
        %v1470 = vand.u32 %v1135, 4294901760
        %v1471 = vsub.f32 %v1135, %v1470
        %v1472 = vand.u32 %v1471, 4294901760
        %1473 = vmatpush.msra.mxu0 %v1472
        %v1474 = vand.u32 %v1134, 4294901760
        %v1475 = vsub.f32 %v1134, %v1474
        %v1476 = vand.u32 %v1475, 4294901760
        %1477 = vmatpush.msra.mxu0 %v1476
        %v1478 = vand.u32 %v1133, 4294901760
        %v1479 = vsub.f32 %v1133, %v1478
        %v1480 = vand.u32 %v1479, 4294901760
        %1481 = vmatpush.msra.mxu0 %v1480
        %v1482 = vand.u32 %v1132, 4294901760
        %v1483 = vsub.f32 %v1132, %v1482
        %v1484 = vand.u32 %v1483, 4294901760
        %1485 = vmatpush.msra.mxu0 %v1484
        %v1486 = vand.u32 %v352, 4294901760
        %1487 = vmatmul.f32.gmra.mxu0 %v1486
        %v1488 = vpop.f32.mrf.mxu0
        %v1489 = vadd.f32 %v1414, %v1488
        %v1490 = vand.u32 %v354, 4294901760
        %1491 = vmatmul.f32.gmra.mxu0 %v1490
        %v1492 = vpop.f32.mrf.mxu0
        %v1493 = vadd.f32 %v1420, %v1492
        %1494 = vdwg.mxu0
        %v1495 = vand.u32 %v1147, 4294901760
        %1496 = vmatpush.msra.mxu0 %v1495
        %v1497 = vand.u32 %v1146, 4294901760
        %1498 = vmatpush.msra.mxu0 %v1497
        %v1499 = vand.u32 %v1145, 4294901760
        %1500 = vmatpush.msra.mxu0 %v1499
        %v1501 = vand.u32 %v1144, 4294901760
        %1502 = vmatpush.msra.mxu0 %v1501
        %v1503 = vand.u32 %v1143, 4294901760
        %1504 = vmatpush.msra.mxu0 %v1503
        %v1505 = vand.u32 %v1142, 4294901760
        %1506 = vmatpush.msra.mxu0 %v1505
        %v1507 = vand.u32 %v1141, 4294901760
        %1508 = vmatpush.msra.mxu0 %v1507
        %v1509 = vand.u32 %v1140, 4294901760
        %1510 = vmatpush.msra.mxu0 %v1509
        %v1511 = vand.u32 %v1139, 4294901760
        %1512 = vmatpush.msra.mxu0 %v1511
        %v1513 = vand.u32 %v1138, 4294901760
        %1514 = vmatpush.msra.mxu0 %v1513
        %v1515 = vand.u32 %v1137, 4294901760
        %1516 = vmatpush.msra.mxu0 %v1515
        %v1517 = vand.u32 %v1136, 4294901760
        %1518 = vmatpush.msra.mxu0 %v1517
        %v1519 = vand.u32 %v1135, 4294901760
        %1520 = vmatpush.msra.mxu0 %v1519
        %v1521 = vand.u32 %v1134, 4294901760
        %1522 = vmatpush.msra.mxu0 %v1521
        %v1523 = vand.u32 %v1133, 4294901760
        %1524 = vmatpush.msra.mxu0 %v1523
        %v1525 = vand.u32 %v1132, 4294901760
        %1526 = vmatpush.msra.mxu0 %v1525
        %v1527 = vand.u32 %v352, 4294901760
        %1528 = vmatmul.f32.gmra.mxu0 %v1527
        %v1529 = vpop.f32.mrf.mxu0
        %v1530 = vadd.f32 %v1489, %v1529
        %v1531 = vand.u32 %v354, 4294901760
        %1532 = vmatmul.f32.gmra.mxu0 %v1531
        %v1533 = vpop.f32.mrf.mxu0
        %v1534 = vadd.f32 %v1493, %v1533
        %1535 = vdwg.mxu0
        %v1536 = vand.u32 %v1163, 4294901760
        %1537 = vmatpush.msra.mxu0 %v1536
        %v1538 = vand.u32 %v1162, 4294901760
        %1539 = vmatpush.msra.mxu0 %v1538
        %v1540 = vand.u32 %v1161, 4294901760
        %1541 = vmatpush.msra.mxu0 %v1540
        %v1542 = vand.u32 %v1160, 4294901760
        %1543 = vmatpush.msra.mxu0 %v1542
        %v1544 = vand.u32 %v1159, 4294901760
        %1545 = vmatpush.msra.mxu0 %v1544
        %v1546 = vand.u32 %v1158, 4294901760
        %1547 = vmatpush.msra.mxu0 %v1546
        %v1548 = vand.u32 %v1157, 4294901760
        %1549 = vmatpush.msra.mxu0 %v1548
        %v1550 = vand.u32 %v1156, 4294901760
        %1551 = vmatpush.msra.mxu0 %v1550
        %v1552 = vand.u32 %v1155, 4294901760
        %1553 = vmatpush.msra.mxu0 %v1552
        %v1554 = vand.u32 %v1154, 4294901760
        %1555 = vmatpush.msra.mxu0 %v1554
        %v1556 = vand.u32 %v1153, 4294901760
        %1557 = vmatpush.msra.mxu0 %v1556
        %v1558 = vand.u32 %v1152, 4294901760
        %1559 = vmatpush.msra.mxu0 %v1558
        %v1560 = vand.u32 %v1151, 4294901760
        %1561 = vmatpush.msra.mxu0 %v1560
        %v1562 = vand.u32 %v1150, 4294901760
        %1563 = vmatpush.msra.mxu0 %v1562
        %v1564 = vand.u32 %v1149, 4294901760
        %1565 = vmatpush.msra.mxu0 %v1564
        %v1566 = vand.u32 %v1148, 4294901760
        %1567 = vmatpush.msra.mxu0 %v1566
        %v1568 = vand.u32 %v353, 4294901760
        %v1569 = vsub.f32 %v353, %v1568
        %v1570 = vand.u32 %v1569, 4294901760
        %v1571 = vsub.f32 %v1569, %v1570
        %v1572 = vand.u32 %v1571, 4294901760
        %1573 = vmatmul.f32.gmra.mxu0 %v1572
        %v1574 = vpop.f32.mrf.mxu0
        %v1575 = vadd.f32 %v1530, %v1574
        %v1576 = vand.u32 %v355, 4294901760
        %v1577 = vsub.f32 %v355, %v1576
        %v1578 = vand.u32 %v1577, 4294901760
        %v1579 = vsub.f32 %v1577, %v1578
        %v1580 = vand.u32 %v1579, 4294901760
        %1581 = vmatmul.f32.gmra.mxu0 %v1580
        %v1582 = vpop.f32.mrf.mxu0
        %v1583 = vadd.f32 %v1534, %v1582
        %1584 = vdwg.mxu0
        %v1585 = vand.u32 %v1163, 4294901760
        %v1586 = vsub.f32 %v1163, %v1585
        %v1587 = vand.u32 %v1586, 4294901760
        %v1588 = vsub.f32 %v1586, %v1587
        %v1589 = vand.u32 %v1588, 4294901760
        %1590 = vmatpush.msra.mxu0 %v1589
        %v1591 = vand.u32 %v1162, 4294901760
        %v1592 = vsub.f32 %v1162, %v1591
        %v1593 = vand.u32 %v1592, 4294901760
        %v1594 = vsub.f32 %v1592, %v1593
        %v1595 = vand.u32 %v1594, 4294901760
        %1596 = vmatpush.msra.mxu0 %v1595
        %v1597 = vand.u32 %v1161, 4294901760
        %v1598 = vsub.f32 %v1161, %v1597
        %v1599 = vand.u32 %v1598, 4294901760
        %v1600 = vsub.f32 %v1598, %v1599
        %v1601 = vand.u32 %v1600, 4294901760
        %1602 = vmatpush.msra.mxu0 %v1601
        %v1603 = vand.u32 %v1160, 4294901760
        %v1604 = vsub.f32 %v1160, %v1603
        %v1605 = vand.u32 %v1604, 4294901760
        %v1606 = vsub.f32 %v1604, %v1605
        %v1607 = vand.u32 %v1606, 4294901760
        %1608 = vmatpush.msra.mxu0 %v1607
        %v1609 = vand.u32 %v1159, 4294901760
        %v1610 = vsub.f32 %v1159, %v1609
        %v1611 = vand.u32 %v1610, 4294901760
        %v1612 = vsub.f32 %v1610, %v1611
        %v1613 = vand.u32 %v1612, 4294901760
        %1614 = vmatpush.msra.mxu0 %v1613
        %v1615 = vand.u32 %v1158, 4294901760
        %v1616 = vsub.f32 %v1158, %v1615
        %v1617 = vand.u32 %v1616, 4294901760
        %v1618 = vsub.f32 %v1616, %v1617
        %v1619 = vand.u32 %v1618, 4294901760
        %1620 = vmatpush.msra.mxu0 %v1619
        %v1621 = vand.u32 %v1157, 4294901760
        %v1622 = vsub.f32 %v1157, %v1621
        %v1623 = vand.u32 %v1622, 4294901760
        %v1624 = vsub.f32 %v1622, %v1623
        %v1625 = vand.u32 %v1624, 4294901760
        %1626 = vmatpush.msra.mxu0 %v1625
        %v1627 = vand.u32 %v1156, 4294901760
        %v1628 = vsub.f32 %v1156, %v1627
        %v1629 = vand.u32 %v1628, 4294901760
        %v1630 = vsub.f32 %v1628, %v1629
        %v1631 = vand.u32 %v1630, 4294901760
        %1632 = vmatpush.msra.mxu0 %v1631
        %v1633 = vand.u32 %v1155, 4294901760
        %v1634 = vsub.f32 %v1155, %v1633
        %v1635 = vand.u32 %v1634, 4294901760
        %v1636 = vsub.f32 %v1634, %v1635
        %v1637 = vand.u32 %v1636, 4294901760
        %1638 = vmatpush.msra.mxu0 %v1637
        %v1639 = vand.u32 %v1154, 4294901760
        %v1640 = vsub.f32 %v1154, %v1639
        %v1641 = vand.u32 %v1640, 4294901760
        %v1642 = vsub.f32 %v1640, %v1641
        %v1643 = vand.u32 %v1642, 4294901760
        %1644 = vmatpush.msra.mxu0 %v1643
        %v1645 = vand.u32 %v1153, 4294901760
        %v1646 = vsub.f32 %v1153, %v1645
        %v1647 = vand.u32 %v1646, 4294901760
        %v1648 = vsub.f32 %v1646, %v1647
        %v1649 = vand.u32 %v1648, 4294901760
        %1650 = vmatpush.msra.mxu0 %v1649
        %v1651 = vand.u32 %v1152, 4294901760
        %v1652 = vsub.f32 %v1152, %v1651
        %v1653 = vand.u32 %v1652, 4294901760
        %v1654 = vsub.f32 %v1652, %v1653
        %v1655 = vand.u32 %v1654, 4294901760
        %1656 = vmatpush.msra.mxu0 %v1655
        %v1657 = vand.u32 %v1151, 4294901760
        %v1658 = vsub.f32 %v1151, %v1657
        %v1659 = vand.u32 %v1658, 4294901760
        %v1660 = vsub.f32 %v1658, %v1659
        %v1661 = vand.u32 %v1660, 4294901760
        %1662 = vmatpush.msra.mxu0 %v1661
        %v1663 = vand.u32 %v1150, 4294901760
        %v1664 = vsub.f32 %v1150, %v1663
        %v1665 = vand.u32 %v1664, 4294901760
        %v1666 = vsub.f32 %v1664, %v1665
        %v1667 = vand.u32 %v1666, 4294901760
        %1668 = vmatpush.msra.mxu0 %v1667
        %v1669 = vand.u32 %v1149, 4294901760
        %v1670 = vsub.f32 %v1149, %v1669
        %v1671 = vand.u32 %v1670, 4294901760
        %v1672 = vsub.f32 %v1670, %v1671
        %v1673 = vand.u32 %v1672, 4294901760
        %1674 = vmatpush.msra.mxu0 %v1673
        %v1675 = vand.u32 %v1148, 4294901760
        %v1676 = vsub.f32 %v1148, %v1675
        %v1677 = vand.u32 %v1676, 4294901760
        %v1678 = vsub.f32 %v1676, %v1677
        %v1679 = vand.u32 %v1678, 4294901760
        %1680 = vmatpush.msra.mxu0 %v1679
        %v1681 = vand.u32 %v353, 4294901760
        %1682 = vmatmul.f32.gmra.mxu0 %v1681
        %v1683 = vpop.f32.mrf.mxu0
        %v1684 = vadd.f32 %v1575, %v1683
        %v1685 = vand.u32 %v355, 4294901760
        %1686 = vmatmul.f32.gmra.mxu0 %v1685
        %v1687 = vpop.f32.mrf.mxu0
        %v1688 = vadd.f32 %v1583, %v1687
        %1689 = vdwg.mxu0
        %v1690 = vand.u32 %v1163, 4294901760
        %v1691 = vsub.f32 %v1163, %v1690
        %1692 = vmatpush.msra.mxu0 %v1691
        %v1693 = vand.u32 %v1162, 4294901760
        %v1694 = vsub.f32 %v1162, %v1693
        %1695 = vmatpush.msra.mxu0 %v1694
        %v1696 = vand.u32 %v1161, 4294901760
        %v1697 = vsub.f32 %v1161, %v1696
        %1698 = vmatpush.msra.mxu0 %v1697
        %v1699 = vand.u32 %v1160, 4294901760
        %v1700 = vsub.f32 %v1160, %v1699
        %1701 = vmatpush.msra.mxu0 %v1700
        %v1702 = vand.u32 %v1159, 4294901760
        %v1703 = vsub.f32 %v1159, %v1702
        %1704 = vmatpush.msra.mxu0 %v1703
        %v1705 = vand.u32 %v1158, 4294901760
        %v1706 = vsub.f32 %v1158, %v1705
        %1707 = vmatpush.msra.mxu0 %v1706
        %v1708 = vand.u32 %v1157, 4294901760
        %v1709 = vsub.f32 %v1157, %v1708
        %1710 = vmatpush.msra.mxu0 %v1709
        %v1711 = vand.u32 %v1156, 4294901760
        %v1712 = vsub.f32 %v1156, %v1711
        %1713 = vmatpush.msra.mxu0 %v1712
        %v1714 = vand.u32 %v1155, 4294901760
        %v1715 = vsub.f32 %v1155, %v1714
        %1716 = vmatpush.msra.mxu0 %v1715
        %v1717 = vand.u32 %v1154, 4294901760
        %v1718 = vsub.f32 %v1154, %v1717
        %1719 = vmatpush.msra.mxu0 %v1718
        %v1720 = vand.u32 %v1153, 4294901760
        %v1721 = vsub.f32 %v1153, %v1720
        %1722 = vmatpush.msra.mxu0 %v1721
        %v1723 = vand.u32 %v1152, 4294901760
        %v1724 = vsub.f32 %v1152, %v1723
        %1725 = vmatpush.msra.mxu0 %v1724
        %v1726 = vand.u32 %v1151, 4294901760
        %v1727 = vsub.f32 %v1151, %v1726
        %1728 = vmatpush.msra.mxu0 %v1727
        %v1729 = vand.u32 %v1150, 4294901760
        %v1730 = vsub.f32 %v1150, %v1729
        %1731 = vmatpush.msra.mxu0 %v1730
        %v1732 = vand.u32 %v1149, 4294901760
        %v1733 = vsub.f32 %v1149, %v1732
        %1734 = vmatpush.msra.mxu0 %v1733
        %v1735 = vand.u32 %v1148, 4294901760
        %v1736 = vsub.f32 %v1148, %v1735
        %1737 = vmatpush.msra.mxu0 %v1736
        %v1738 = vand.u32 %v353, 4294901760
        %v1739 = vsub.f32 %v353, %v1738
        %1740 = vmatmul.f32.gmra.mxu0 %v1739
        %v1741 = vpop.f32.mrf.mxu0
        %v1742 = vadd.f32 %v1684, %v1741
        %v1743 = vand.u32 %v355, 4294901760
        %v1744 = vsub.f32 %v355, %v1743
        %1745 = vmatmul.f32.gmra.mxu0 %v1744
        %v1746 = vpop.f32.mrf.mxu0
        %v1747 = vadd.f32 %v1688, %v1746
        %1748 = vdwg.mxu0
        %v1749 = vand.u32 %v1163, 4294901760
        %1750 = vmatpush.msra.mxu0 %v1749
        %v1751 = vand.u32 %v1162, 4294901760
        %1752 = vmatpush.msra.mxu0 %v1751
        %v1753 = vand.u32 %v1161, 4294901760
        %1754 = vmatpush.msra.mxu0 %v1753
        %v1755 = vand.u32 %v1160, 4294901760
        %1756 = vmatpush.msra.mxu0 %v1755
        %v1757 = vand.u32 %v1159, 4294901760
        %1758 = vmatpush.msra.mxu0 %v1757
        %v1759 = vand.u32 %v1158, 4294901760
        %1760 = vmatpush.msra.mxu0 %v1759
        %v1761 = vand.u32 %v1157, 4294901760
        %1762 = vmatpush.msra.mxu0 %v1761
        %v1763 = vand.u32 %v1156, 4294901760
        %1764 = vmatpush.msra.mxu0 %v1763
        %v1765 = vand.u32 %v1155, 4294901760
        %1766 = vmatpush.msra.mxu0 %v1765
        %v1767 = vand.u32 %v1154, 4294901760
        %1768 = vmatpush.msra.mxu0 %v1767
        %v1769 = vand.u32 %v1153, 4294901760
        %1770 = vmatpush.msra.mxu0 %v1769
        %v1771 = vand.u32 %v1152, 4294901760
        %1772 = vmatpush.msra.mxu0 %v1771
        %v1773 = vand.u32 %v1151, 4294901760
        %1774 = vmatpush.msra.mxu0 %v1773
        %v1775 = vand.u32 %v1150, 4294901760
        %1776 = vmatpush.msra.mxu0 %v1775
        %v1777 = vand.u32 %v1149, 4294901760
        %1778 = vmatpush.msra.mxu0 %v1777
        %v1779 = vand.u32 %v1148, 4294901760
        %1780 = vmatpush.msra.mxu0 %v1779
        %v1781 = vand.u32 %v353, 4294901760
        %v1782 = vsub.f32 %v353, %v1781
        %v1783 = vand.u32 %v1782, 4294901760
        %1784 = vmatmul.f32.gmra.mxu0 %v1783
        %v1785 = vpop.f32.mrf.mxu0
        %v1786 = vadd.f32 %v1742, %v1785
        %v1787 = vand.u32 %v355, 4294901760
        %v1788 = vsub.f32 %v355, %v1787
        %v1789 = vand.u32 %v1788, 4294901760
        %1790 = vmatmul.f32.gmra.mxu0 %v1789
        %v1791 = vpop.f32.mrf.mxu0
        %v1792 = vadd.f32 %v1747, %v1791
        %1793 = vdwg.mxu0
        %v1794 = vand.u32 %v1163, 4294901760
        %v1795 = vsub.f32 %v1163, %v1794
        %v1796 = vand.u32 %v1795, 4294901760
        %1797 = vmatpush.msra.mxu0 %v1796
        %v1798 = vand.u32 %v1162, 4294901760
        %v1799 = vsub.f32 %v1162, %v1798
        %v1800 = vand.u32 %v1799, 4294901760
        %1801 = vmatpush.msra.mxu0 %v1800
        %v1802 = vand.u32 %v1161, 4294901760
        %v1803 = vsub.f32 %v1161, %v1802
        %v1804 = vand.u32 %v1803, 4294901760
        %1805 = vmatpush.msra.mxu0 %v1804
        %v1806 = vand.u32 %v1160, 4294901760
        %v1807 = vsub.f32 %v1160, %v1806
        %v1808 = vand.u32 %v1807, 4294901760
        %1809 = vmatpush.msra.mxu0 %v1808
        %v1810 = vand.u32 %v1159, 4294901760
        %v1811 = vsub.f32 %v1159, %v1810
        %v1812 = vand.u32 %v1811, 4294901760
        %1813 = vmatpush.msra.mxu0 %v1812
        %v1814 = vand.u32 %v1158, 4294901760
        %v1815 = vsub.f32 %v1158, %v1814
        %v1816 = vand.u32 %v1815, 4294901760
        %1817 = vmatpush.msra.mxu0 %v1816
        %v1818 = vand.u32 %v1157, 4294901760
        %v1819 = vsub.f32 %v1157, %v1818
        %v1820 = vand.u32 %v1819, 4294901760
        %1821 = vmatpush.msra.mxu0 %v1820
        %v1822 = vand.u32 %v1156, 4294901760
        %v1823 = vsub.f32 %v1156, %v1822
        %v1824 = vand.u32 %v1823, 4294901760
        %1825 = vmatpush.msra.mxu0 %v1824
        %v1826 = vand.u32 %v1155, 4294901760
        %v1827 = vsub.f32 %v1155, %v1826
        %v1828 = vand.u32 %v1827, 4294901760
        %1829 = vmatpush.msra.mxu0 %v1828
        %v1830 = vand.u32 %v1154, 4294901760
        %v1831 = vsub.f32 %v1154, %v1830
        %v1832 = vand.u32 %v1831, 4294901760
        %1833 = vmatpush.msra.mxu0 %v1832
        %v1834 = vand.u32 %v1153, 4294901760
        %v1835 = vsub.f32 %v1153, %v1834
        %v1836 = vand.u32 %v1835, 4294901760
        %1837 = vmatpush.msra.mxu0 %v1836
        %v1838 = vand.u32 %v1152, 4294901760
        %v1839 = vsub.f32 %v1152, %v1838
        %v1840 = vand.u32 %v1839, 4294901760
        %1841 = vmatpush.msra.mxu0 %v1840
        %v1842 = vand.u32 %v1151, 4294901760
        %v1843 = vsub.f32 %v1151, %v1842
        %v1844 = vand.u32 %v1843, 4294901760
        %1845 = vmatpush.msra.mxu0 %v1844
        %v1846 = vand.u32 %v1150, 4294901760
        %v1847 = vsub.f32 %v1150, %v1846
        %v1848 = vand.u32 %v1847, 4294901760
        %1849 = vmatpush.msra.mxu0 %v1848
        %v1850 = vand.u32 %v1149, 4294901760
        %v1851 = vsub.f32 %v1149, %v1850
        %v1852 = vand.u32 %v1851, 4294901760
        %1853 = vmatpush.msra.mxu0 %v1852
        %v1854 = vand.u32 %v1148, 4294901760
        %v1855 = vsub.f32 %v1148, %v1854
        %v1856 = vand.u32 %v1855, 4294901760
        %1857 = vmatpush.msra.mxu0 %v1856
        %v1858 = vand.u32 %v353, 4294901760
        %1859 = vmatmul.f32.gmra.mxu0 %v1858
        %v1860 = vpop.f32.mrf.mxu0
        %v1861 = vadd.f32 %v1786, %v1860
        %v1862 = vand.u32 %v355, 4294901760
        %1863 = vmatmul.f32.gmra.mxu0 %v1862
        %v1864 = vpop.f32.mrf.mxu0
        %v1865 = vadd.f32 %v1792, %v1864
        %1866 = vdwg.mxu0
        %v1867 = vand.u32 %v1163, 4294901760
        %1868 = vmatpush.msra.mxu0 %v1867
        %v1869 = vand.u32 %v1162, 4294901760
        %1870 = vmatpush.msra.mxu0 %v1869
        %v1871 = vand.u32 %v1161, 4294901760
        %1872 = vmatpush.msra.mxu0 %v1871
        %v1873 = vand.u32 %v1160, 4294901760
        %1874 = vmatpush.msra.mxu0 %v1873
        %v1875 = vand.u32 %v1159, 4294901760
        %1876 = vmatpush.msra.mxu0 %v1875
        %v1877 = vand.u32 %v1158, 4294901760
        %1878 = vmatpush.msra.mxu0 %v1877
        %v1879 = vand.u32 %v1157, 4294901760
        %1880 = vmatpush.msra.mxu0 %v1879
        %v1881 = vand.u32 %v1156, 4294901760
        %1882 = vmatpush.msra.mxu0 %v1881
        %v1883 = vand.u32 %v1155, 4294901760
        %1884 = vmatpush.msra.mxu0 %v1883
        %v1885 = vand.u32 %v1154, 4294901760
        %1886 = vmatpush.msra.mxu0 %v1885
        %v1887 = vand.u32 %v1153, 4294901760
        %1888 = vmatpush.msra.mxu0 %v1887
        %v1889 = vand.u32 %v1152, 4294901760
        %1890 = vmatpush.msra.mxu0 %v1889
        %v1891 = vand.u32 %v1151, 4294901760
        %1892 = vmatpush.msra.mxu0 %v1891
        %v1893 = vand.u32 %v1150, 4294901760
        %1894 = vmatpush.msra.mxu0 %v1893
        %v1895 = vand.u32 %v1149, 4294901760
        %1896 = vmatpush.msra.mxu0 %v1895
        %v1897 = vand.u32 %v1148, 4294901760
        %1898 = vmatpush.msra.mxu0 %v1897
        %v1899 = vand.u32 %v353, 4294901760
        %1900 = vmatmul.f32.gmra.mxu0 %v1899
        %v1901 = vpop.f32.mrf.mxu0
        %v1902 = vadd.f32 %v1861, %v1901
        %v1903 = vand.u32 %v355, 4294901760
        %1904 = vmatmul.f32.gmra.mxu0 %v1903
        %v1905 = vpop.f32.mrf.mxu0
        %v1906 = vadd.f32 %v1865, %v1905
        %1907 = vdwg.mxu0
        %v1908 = vmul.f32 %v1126, 0.0625
        %v1909 = vmul.f32 %v1130, 0.0625
        %v1910 = vmul.f32 %v1902, 0.0625
        %v1911 = vmul.f32 %v1906, 0.0625
        %vm1912 = vcmask 130048
        %v1913 = vsel %vm1912, %v1908, 0.0
        %1914 = vadd.xlane.f32.xlu0 %v1913
        %v1915 = vpop.xlane.xlu0 %1914
        %v1916 = vsel %vm1912, %v1909, 0.0
        %1917 = vadd.xlane.f32.xlu0 %v1916
        %v1918 = vpop.xlane.xlu0 %1917
        %v1919 = vmul.f32 %v1915, 0.0625
        %v1920 = vmul.f32 %v1918, 0.0625
        %v1921 = vmul.f32 %v347, %v1919
        %v1922 = vmul.f32 %v348, %v1920
        %v1923 = vxor.u32 %v1921, 2147483648
        %v1924 = vxor.u32 %v1922, 2147483648
        %v1925 = vmul.f32 %v1923, 1.442695
        %v1926 = vpow.pop %v1925
        %v1927 = vmul.f32 %v1924, 1.442695
        %v1928 = vpow.pop %v1927
        %v1929 = vadd.f32 %v1926, 1.0
        %v1930 = vadd.f32 %v1928, 1.0
        %v1931 = vrcp.pop %v1929
        %v1932 = vmul.f32 %v1929, %v1931
        %v1933 = vsub.f32 1.0, %v1932
        %v1934 = vmul.f32 %v1931, %v1933
        %v1935 = vadd.f32 %v1931, %v1934
        %vm1936 = vweird.f32 %v1929
        %vm1937 = vweird.f32 %v1931
        %vm1938 = vmor %vm1936, %vm1937
        %v1939 = vsel %vm1938, %v1931, %v1935
        %v1940 = vand.u32 2147483647, %v1929
        %vm1941 = vcmp.eq.f32.partialorder %v1940, 8.507059e+37
        %v1942 = vand.u32 %v1929, 2147483648
        %v1943 = vor.u32 1.1754944e-38, %v1942
        %v1944 = vsel %vm1941, %v1943, %v1939
        %v1945 = vmul.f32 1.0, %v1944
        %v1946 = vrcp.pop %v1930
        %v1947 = vmul.f32 %v1930, %v1946
        %v1948 = vsub.f32 1.0, %v1947
        %v1949 = vmul.f32 %v1946, %v1948
        %v1950 = vadd.f32 %v1946, %v1949
        %vm1951 = vweird.f32 %v1930
        %vm1952 = vweird.f32 %v1946
        %vm1953 = vmor %vm1951, %vm1952
        %v1954 = vsel %vm1953, %v1946, %v1950
        %v1955 = vand.u32 2147483647, %v1930
        %vm1956 = vcmp.eq.f32.partialorder %v1955, 8.507059e+37
        %v1957 = vand.u32 %v1930, 2147483648
        %v1958 = vor.u32 1.1754944e-38, %v1957
        %v1959 = vsel %vm1956, %v1958, %v1954
        %v1960 = vmul.f32 1.0, %v1959
        %v1961 = vstv %s349
        %v1962 = vmul.f32 %v1961, %v1945
        %v1963 = vmul.f32 %v1961, %v1960
        %v1964 = vstv %s351
        %v1965 = vadd.f32 %v1962, %v1964
        %v1966 = vadd.f32 %v1963, %v1964
        %1969 = vrot.lane.b32.xlu0 %v1908, 2
        %v1970 = vpop.permute.xlu0 %1969
        %1971 = vrot.lane.b32.xlu0 %v1909, 2
        %v1972 = vpop.permute.xlu0 %1971
        %vm1975 = vcmask 15360
        %v1976 = vsel %vm1975, 0.0, %v1970
        %v1977 = vsel %vm1975, 0.0, %v1972
        %vm1978 = vcmask 146432
        %v1979 = vsel %vm1978, %v1976, 0.0
        %v1980 = vsel %vm1978, %v1977, 0.0
        %1982 = vset.pattern.permute.xlu0 0
        %1983 = vperm.xlu0 %1982, %v347
        %v1984 = vpop.permute.xlu0 %1983
        %1987 = vset.pattern.permute.xlu0 0
        %1988 = vperm.xlu0 %1987, %v348
        %v1989 = vpop.permute.xlu0 %1988
        %v1991 = vmul.f32 %v1984, %v1979
        %v1992 = vmul.f32 %v1989, %v1980
        %1993 = vset.pattern.permute.xlu0 1
        %1994 = vperm.xlu0 %1993, %v347
        %v1995 = vpop.permute.xlu0 %1994
        %1997 = vset.pattern.permute.xlu0 1
        %1998 = vperm.xlu0 %1997, %v348
        %v1999 = vpop.permute.xlu0 %1998
        %v2001 = vmul.f32 %v1995, %v1979
        %v2002 = vmul.f32 %v1999, %v1980
        %2005 = vrot.lane.b32.xlu0 %v2001, 126
        %v2006 = vpop.permute.xlu0 %2005
        %2007 = vrot.lane.b32.xlu0 %v2002, 126
        %v2008 = vpop.permute.xlu0 %2007
        %v2011 = vadd.f32 %v1991, %v2006
        %v2012 = vadd.f32 %v1992, %v2008
        %2013 = vset.pattern.permute.xlu0 2
        %2014 = vperm.xlu0 %2013, %v347
        %v2015 = vpop.permute.xlu0 %2014
        %2017 = vset.pattern.permute.xlu0 2
        %2018 = vperm.xlu0 %2017, %v348
        %v2019 = vpop.permute.xlu0 %2018
        %v2021 = vmul.f32 %v2015, %v1979
        %v2022 = vmul.f32 %v2019, %v1980
        %2025 = vrot.lane.b32.xlu0 %v2021, 124
        %v2026 = vpop.permute.xlu0 %2025
        %2027 = vrot.lane.b32.xlu0 %v2022, 124
        %v2028 = vpop.permute.xlu0 %2027
        %v2031 = vadd.f32 %v2011, %v2026
        %v2032 = vadd.f32 %v2012, %v2028
        %v2033 = vsel %vm1912, %v2031, 0.0
        %v2034 = vsel %vm1912, %v2032, 0.0
        %v2035 = vadd.f32 %v2033, %v2034
        %2036 = vadd.xlane.f32.xlu0 %v2035
        %v2037 = vpop.xlane.xlu0 %2036
        %v2038 = vrot.slane %v2037, 4
        %v2039 = vadd.f32 %v2037, %v2038
        %v2040 = vrot.slane %v2039, 2
        %v2041 = vadd.f32 %v2039, %v2040
        %v2042 = vrot.slane %v2041, 1
        %v2043 = vadd.f32 %v2041, %v2042
        %v2044 = vrcp.pop 256.0
        %v2045 = vmul.f32 256.0, %v2044
        %v2046 = vsub.f32 1.0, %v2045
        %v2047 = vmul.f32 %v2044, %v2046
        %v2048 = vadd.f32 %v2044, %v2047
        %vm2049 = vweird.f32 %v2044
        %v2050 = vsel %vm2049, %v2044, %v2048
        %v2051 = vmul.f32 %v2043, %v2050
        %v2052 = vsub.f32 %v2031, %v2051
        %v2053 = vsub.f32 %v2032, %v2051
        %v2054 = vmul.f32 %v2052, %v2052
        %v2055 = vmul.f32 %v2053, %v2053
        %v2056 = vsel %vm1912, %v2054, 0.0
        %v2057 = vsel %vm1912, %v2055, 0.0
        %v2058 = vadd.f32 %v2056, %v2057
        %2059 = vadd.xlane.f32.xlu0 %v2058
        %v2060 = vpop.xlane.xlu0 %2059
        %v2061 = vrot.slane %v2060, 4
        %v2062 = vadd.f32 %v2060, %v2061
        %v2063 = vrot.slane %v2062, 2
        %v2064 = vadd.f32 %v2062, %v2063
        %v2065 = vrot.slane %v2064, 1
        %v2066 = vadd.f32 %v2064, %v2065
        %v2067 = vmul.f32 %v2066, %v2050
        %v2068 = vadd.f32 %v2067, 1e-05
        %v2069 = vrsqrt.pop %v2068
        %v2070 = vmul.f32 %v2069, %v2068
        %v2071 = vmul.f32 %v2070, %v2069
        %v2072 = vmul.f32 0.5, %v2071
        %v2073 = vsub.f32 1.5, %v2072
        %v2074 = vmul.f32 %v2069, %v2073
        %vm2075 = vweird.f32 %v2068
        %vm2076 = vweird.f32 %v2069
        %vm2077 = vmor %vm2075, %vm2076
        %v2078 = vsel %vm2077, %v2069, %v2074
        %v2079 = vmul.f32 %v2052, %v2078
        %v2080 = vmul.f32 %v2053, %v2078
        %2081 = vset.pattern.permute.xlu0 4
        %2082 = vperm.xlu0 %2081, %v347
        %v2083 = vpop.permute.xlu0 %2082
        %2085 = vset.pattern.permute.xlu0 4
        %2086 = vperm.xlu0 %2085, %v348
        %v2087 = vpop.permute.xlu0 %2086
        %v2089 = vmul.f32 %v2079, %v2083
        %v2090 = vmul.f32 %v2080, %v2087
        %2091 = vset.pattern.permute.xlu0 5
        %2092 = vperm.xlu0 %2091, %v347
        %v2093 = vpop.permute.xlu0 %2092
        %2095 = vset.pattern.permute.xlu0 5
        %2096 = vperm.xlu0 %2095, %v348
        %v2097 = vpop.permute.xlu0 %2096
        %v2099 = vadd.f32 %v2089, %v2093
        %v2100 = vadd.f32 %v2090, %v2097
        %v2101 = vxor.u32 %v2099, 2147483648
        %v2102 = vxor.u32 %v2100, 2147483648
        %v2103 = vmul.f32 %v2101, 1.442695
        %v2104 = vpow.pop %v2103
        %v2105 = vmul.f32 %v2102, 1.442695
        %v2106 = vpow.pop %v2105
        %v2107 = vadd.f32 %v2104, 1.0
        %v2108 = vadd.f32 %v2106, 1.0
        %v2109 = vrcp.pop %v2107
        %v2110 = vmul.f32 %v2107, %v2109
        %v2111 = vsub.f32 1.0, %v2110
        %v2112 = vmul.f32 %v2109, %v2111
        %v2113 = vadd.f32 %v2109, %v2112
        %vm2114 = vweird.f32 %v2107
        %vm2115 = vweird.f32 %v2109
        %vm2116 = vmor %vm2114, %vm2115
        %v2117 = vsel %vm2116, %v2109, %v2113
        %v2118 = vand.u32 2147483647, %v2107
        %vm2119 = vcmp.eq.f32.partialorder %v2118, 8.507059e+37
        %v2120 = vand.u32 %v2107, 2147483648
        %v2121 = vor.u32 1.1754944e-38, %v2120
        %v2122 = vsel %vm2119, %v2121, %v2117
        %v2123 = vmul.f32 1.0, %v2122
        %v2124 = vrcp.pop %v2108
        %v2125 = vmul.f32 %v2108, %v2124
        %v2126 = vsub.f32 1.0, %v2125
        %v2127 = vmul.f32 %v2124, %v2126
        %v2128 = vadd.f32 %v2124, %v2127
        %vm2129 = vweird.f32 %v2108
        %vm2130 = vweird.f32 %v2124
        %vm2131 = vmor %vm2129, %vm2130
        %v2132 = vsel %vm2131, %v2124, %v2128
        %v2133 = vand.u32 2147483647, %v2108
        %vm2134 = vcmp.eq.f32.partialorder %v2133, 8.507059e+37
        %v2135 = vand.u32 %v2108, 2147483648
        %v2136 = vor.u32 1.1754944e-38, %v2135
        %v2137 = vsel %vm2134, %v2136, %v2132
        %v2138 = vmul.f32 1.0, %v2137
        %v2139 = vstv %s350
        %v2140 = vmul.f32 %v2123, %v2139
        %v2141 = vmul.f32 %v2138, %v2139
        %2144 = vrot.lane.b32.xlu0 %v1910, 2
        %v2145 = vpop.permute.xlu0 %2144
        %2146 = vrot.lane.b32.xlu0 %v1911, 2
        %v2147 = vpop.permute.xlu0 %2146
        %v2150 = vsel %vm1975, 0.0, %v2145
        %v2151 = vsel %vm1975, 0.0, %v2147
        %v2152 = vsel %vm1978, %v2150, 0.0
        %v2153 = vsel %vm1978, %v2151, 0.0
        %v2154 = vmul.f32 %v1984, %v2152
        %v2155 = vmul.f32 %v1989, %v2153
        %v2156 = vmul.f32 %v1995, %v2152
        %v2157 = vmul.f32 %v1999, %v2153
        %2160 = vrot.lane.b32.xlu0 %v2156, 126
        %v2161 = vpop.permute.xlu0 %2160
        %2162 = vrot.lane.b32.xlu0 %v2157, 126
        %v2163 = vpop.permute.xlu0 %2162
        %v2166 = vadd.f32 %v2154, %v2161
        %v2167 = vadd.f32 %v2155, %v2163
        %v2168 = vmul.f32 %v2015, %v2152
        %v2169 = vmul.f32 %v2019, %v2153
        %2172 = vrot.lane.b32.xlu0 %v2168, 124
        %v2173 = vpop.permute.xlu0 %2172
        %2174 = vrot.lane.b32.xlu0 %v2169, 124
        %v2175 = vpop.permute.xlu0 %2174
        %v2178 = vadd.f32 %v2166, %v2173
        %v2179 = vadd.f32 %v2167, %v2175
        %v2180 = vsel %vm1912, %v2178, 0.0
        %v2181 = vsel %vm1912, %v2179, 0.0
        %v2182 = vadd.f32 %v2180, %v2181
        %2183 = vadd.xlane.f32.xlu0 %v2182
        %v2184 = vpop.xlane.xlu0 %2183
        %v2185 = vrot.slane %v2184, 4
        %v2186 = vadd.f32 %v2184, %v2185
        %v2187 = vrot.slane %v2186, 2
        %v2188 = vadd.f32 %v2186, %v2187
        %v2189 = vrot.slane %v2188, 1
        %v2190 = vadd.f32 %v2188, %v2189
        %v2191 = vmul.f32 %v2190, %v2050
        %v2192 = vsub.f32 %v2178, %v2191
        %v2193 = vsub.f32 %v2179, %v2191
        %v2194 = vmul.f32 %v2192, %v2192
        %v2195 = vmul.f32 %v2193, %v2193
        %v2196 = vsel %vm1912, %v2194, 0.0
        %v2197 = vsel %vm1912, %v2195, 0.0
        %v2198 = vadd.f32 %v2196, %v2197
        %2199 = vadd.xlane.f32.xlu0 %v2198
        %v2200 = vpop.xlane.xlu0 %2199
        %v2201 = vrot.slane %v2200, 4
        %v2202 = vadd.f32 %v2200, %v2201
        %v2203 = vrot.slane %v2202, 2
        %v2204 = vadd.f32 %v2202, %v2203
        %v2205 = vrot.slane %v2204, 1
        %v2206 = vadd.f32 %v2204, %v2205
        %v2207 = vmul.f32 %v2206, %v2050
        %v2208 = vadd.f32 %v2207, 1e-05
        %v2209 = vrsqrt.pop %v2208
        %v2210 = vmul.f32 %v2209, %v2208
        %v2211 = vmul.f32 %v2210, %v2209
        %v2212 = vmul.f32 0.5, %v2211
        %v2213 = vsub.f32 1.5, %v2212
        %v2214 = vmul.f32 %v2209, %v2213
        %vm2215 = vweird.f32 %v2208
        %vm2216 = vweird.f32 %v2209
        %vm2217 = vmor %vm2215, %vm2216
        %v2218 = vsel %vm2217, %v2209, %v2214
        %v2219 = vmul.f32 %v2192, %v2218
        %v2220 = vmul.f32 %v2193, %v2218
        %v2221 = vmul.f32 %v2219, %v2083
        %v2222 = vmul.f32 %v2220, %v2087
        %v2223 = vadd.f32 %v2221, %v2093
        %v2224 = vadd.f32 %v2222, %v2097
        %v2225 = vxor.u32 %v2223, 2147483648
        %v2226 = vxor.u32 %v2224, 2147483648
        %v2227 = vmul.f32 %v2225, 1.442695
        %v2228 = vpow.pop %v2227
        %v2229 = vmul.f32 %v2226, 1.442695
        %v2230 = vpow.pop %v2229
        %v2231 = vadd.f32 %v2228, 1.0
        %v2232 = vadd.f32 %v2230, 1.0
        %v2233 = vrcp.pop %v2231
        %v2234 = vmul.f32 %v2231, %v2233
        %v2235 = vsub.f32 1.0, %v2234
        %v2236 = vmul.f32 %v2233, %v2235
        %v2237 = vadd.f32 %v2233, %v2236
        %vm2238 = vweird.f32 %v2231
        %vm2239 = vweird.f32 %v2233
        %vm2240 = vmor %vm2238, %vm2239
        %v2241 = vsel %vm2240, %v2233, %v2237
        %v2242 = vand.u32 2147483647, %v2231
        %vm2243 = vcmp.eq.f32.partialorder %v2242, 8.507059e+37
        %v2244 = vand.u32 %v2231, 2147483648
        %v2245 = vor.u32 1.1754944e-38, %v2244
        %v2246 = vsel %vm2243, %v2245, %v2241
        %v2247 = vmul.f32 1.0, %v2246
        %v2248 = vrcp.pop %v2232
        %v2249 = vmul.f32 %v2232, %v2248
        %v2250 = vsub.f32 1.0, %v2249
        %v2251 = vmul.f32 %v2248, %v2250
        %v2252 = vadd.f32 %v2248, %v2251
        %vm2253 = vweird.f32 %v2232
        %vm2254 = vweird.f32 %v2248
        %vm2255 = vmor %vm2253, %vm2254
        %v2256 = vsel %vm2255, %v2248, %v2252
        %v2257 = vand.u32 2147483647, %v2232
        %vm2258 = vcmp.eq.f32.partialorder %v2257, 8.507059e+37
        %v2259 = vand.u32 %v2232, 2147483648
        %v2260 = vor.u32 1.1754944e-38, %v2259
        %v2261 = vsel %vm2258, %v2260, %v2256
        %v2262 = vmul.f32 1.0, %v2261
        %v2263 = vld [vmem:[%s2] sm:$0xff]
        %v2264 = vld [vmem:[%s2 + $0x8] sm:$0xff]
        %v2265 = vld [vmem:[%s2 + $0x10] sm:$0xff]
        %v2266 = vld [vmem:[%s2 + $0x18] sm:$0xff]
        %v2267 = vld [vmem:[%s3] sm:$0xff]
        %v2268 = vld [vmem:[%s3 + $0x8] sm:$0xff]
        %v2269 = vld [vmem:[%s3 + $0x10] sm:$0xff]
        %v2270 = vld [vmem:[%s3 + $0x18] sm:$0xff]
        %v2272 = vsel %vm1912, %v2140, 0
        %v2275 = vsel %vm1912, %v2141, 0
        %2277 = vmatpush.msra.mxu0 0.0
        %2278 = vmatpush.msra.mxu0 0.0
        %2279 = vmatpush.msra.mxu0 0.0
        %2280 = vmatpush.msra.mxu0 0.0
        %2281 = vmatpush.msra.mxu0 0.0
        %2282 = vmatpush.msra.mxu0 0.0
        %2283 = vmatpush.msra.mxu0 0.0
        %2284 = vmatpush.msra.mxu0 0.0
        %2285 = vmatpush.msra.mxu0 0.0
        %2286 = vmatpush.msra.mxu0 0.0
        %2287 = vmatpush.msra.mxu0 0.0
        %2288 = vmatpush.msra.mxu0 0.0
        %2289 = vmatpush.msra.mxu0 0.0
        %2290 = vmatpush.msra.mxu0 0.0
        %v2291 = vand.u32 %v2265, 4294901760
        %2292 = vmatpush.msra.mxu0 %v2291
        %v2293 = vand.u32 %v2263, 4294901760
        %2294 = vmatpush.msra.mxu0 %v2293
        %v2295 = vand.u32 %v2272, 4294901760
        %v2296 = vsub.f32 %v2272, %v2295
        %v2297 = vand.u32 %v2296, 4294901760
        %v2298 = vsub.f32 %v2296, %v2297
        %v2299 = vand.u32 %v2298, 4294901760
        %2300 = vmatmul.f32.gmra.mxu0 %v2299
        %v2301 = vpop.f32.mrf.mxu0
        %v2302 = vadd.f32 0.0, %v2301
        %v2303 = vand.u32 %v2275, 4294901760
        %v2304 = vsub.f32 %v2275, %v2303
        %v2305 = vand.u32 %v2304, 4294901760
        %v2306 = vsub.f32 %v2304, %v2305
        %v2307 = vand.u32 %v2306, 4294901760
        %2308 = vmatmul.f32.gmra.mxu0 %v2307
        %v2309 = vpop.f32.mrf.mxu0
        %v2310 = vadd.f32 0.0, %v2309
        %2311 = vdwg.mxu0
        %2312 = vmatpush.msra.mxu0 0.0
        %2313 = vmatpush.msra.mxu0 0.0
        %2314 = vmatpush.msra.mxu0 0.0
        %2315 = vmatpush.msra.mxu0 0.0
        %2316 = vmatpush.msra.mxu0 0.0
        %2317 = vmatpush.msra.mxu0 0.0
        %2318 = vmatpush.msra.mxu0 0.0
        %2319 = vmatpush.msra.mxu0 0.0
        %2320 = vmatpush.msra.mxu0 0.0
        %2321 = vmatpush.msra.mxu0 0.0
        %2322 = vmatpush.msra.mxu0 0.0
        %2323 = vmatpush.msra.mxu0 0.0
        %2324 = vmatpush.msra.mxu0 0.0
        %2325 = vmatpush.msra.mxu0 0.0
        %v2326 = vand.u32 %v2265, 4294901760
        %v2327 = vsub.f32 %v2265, %v2326
        %v2328 = vand.u32 %v2327, 4294901760
        %v2329 = vsub.f32 %v2327, %v2328
        %v2330 = vand.u32 %v2329, 4294901760
        %2331 = vmatpush.msra.mxu0 %v2330
        %v2332 = vand.u32 %v2263, 4294901760
        %v2333 = vsub.f32 %v2263, %v2332
        %v2334 = vand.u32 %v2333, 4294901760
        %v2335 = vsub.f32 %v2333, %v2334
        %v2336 = vand.u32 %v2335, 4294901760
        %2337 = vmatpush.msra.mxu0 %v2336
        %v2338 = vand.u32 %v2272, 4294901760
        %2339 = vmatmul.f32.gmra.mxu0 %v2338
        %v2340 = vpop.f32.mrf.mxu0
        %v2341 = vadd.f32 %v2302, %v2340
        %v2342 = vand.u32 %v2275, 4294901760
        %2343 = vmatmul.f32.gmra.mxu0 %v2342
        %v2344 = vpop.f32.mrf.mxu0
        %v2345 = vadd.f32 %v2310, %v2344
        %2346 = vdwg.mxu0
        %2347 = vmatpush.msra.mxu0 0.0
        %2348 = vmatpush.msra.mxu0 0.0
        %2349 = vmatpush.msra.mxu0 0.0
        %2350 = vmatpush.msra.mxu0 0.0
        %2351 = vmatpush.msra.mxu0 0.0
        %2352 = vmatpush.msra.mxu0 0.0
        %2353 = vmatpush.msra.mxu0 0.0
        %2354 = vmatpush.msra.mxu0 0.0
        %2355 = vmatpush.msra.mxu0 0.0
        %2356 = vmatpush.msra.mxu0 0.0
        %2357 = vmatpush.msra.mxu0 0.0
        %2358 = vmatpush.msra.mxu0 0.0
        %2359 = vmatpush.msra.mxu0 0.0
        %2360 = vmatpush.msra.mxu0 0.0
        %v2361 = vand.u32 %v2265, 4294901760
        %v2362 = vsub.f32 %v2265, %v2361
        %2363 = vmatpush.msra.mxu0 %v2362
        %v2364 = vand.u32 %v2263, 4294901760
        %v2365 = vsub.f32 %v2263, %v2364
        %2366 = vmatpush.msra.mxu0 %v2365
        %v2367 = vand.u32 %v2272, 4294901760
        %v2368 = vsub.f32 %v2272, %v2367
        %2369 = vmatmul.f32.gmra.mxu0 %v2368
        %v2370 = vpop.f32.mrf.mxu0
        %v2371 = vadd.f32 %v2341, %v2370
        %v2372 = vand.u32 %v2275, 4294901760
        %v2373 = vsub.f32 %v2275, %v2372
        %2374 = vmatmul.f32.gmra.mxu0 %v2373
        %v2375 = vpop.f32.mrf.mxu0
        %v2376 = vadd.f32 %v2345, %v2375
        %2377 = vdwg.mxu0
        %2378 = vmatpush.msra.mxu0 0.0
        %2379 = vmatpush.msra.mxu0 0.0
        %2380 = vmatpush.msra.mxu0 0.0
        %2381 = vmatpush.msra.mxu0 0.0
        %2382 = vmatpush.msra.mxu0 0.0
        %2383 = vmatpush.msra.mxu0 0.0
        %2384 = vmatpush.msra.mxu0 0.0
        %2385 = vmatpush.msra.mxu0 0.0
        %2386 = vmatpush.msra.mxu0 0.0
        %2387 = vmatpush.msra.mxu0 0.0
        %2388 = vmatpush.msra.mxu0 0.0
        %2389 = vmatpush.msra.mxu0 0.0
        %2390 = vmatpush.msra.mxu0 0.0
        %2391 = vmatpush.msra.mxu0 0.0
        %v2392 = vand.u32 %v2265, 4294901760
        %2393 = vmatpush.msra.mxu0 %v2392
        %v2394 = vand.u32 %v2263, 4294901760
        %2395 = vmatpush.msra.mxu0 %v2394
        %v2396 = vand.u32 %v2272, 4294901760
        %v2397 = vsub.f32 %v2272, %v2396
        %v2398 = vand.u32 %v2397, 4294901760
        %2399 = vmatmul.f32.gmra.mxu0 %v2398
        %v2400 = vpop.f32.mrf.mxu0
        %v2401 = vadd.f32 %v2371, %v2400
        %v2402 = vand.u32 %v2275, 4294901760
        %v2403 = vsub.f32 %v2275, %v2402
        %v2404 = vand.u32 %v2403, 4294901760
        %2405 = vmatmul.f32.gmra.mxu0 %v2404
        %v2406 = vpop.f32.mrf.mxu0
        %v2407 = vadd.f32 %v2376, %v2406
        %2408 = vdwg.mxu0
        %2409 = vmatpush.msra.mxu0 0.0
        %2410 = vmatpush.msra.mxu0 0.0
        %2411 = vmatpush.msra.mxu0 0.0
        %2412 = vmatpush.msra.mxu0 0.0
        %2413 = vmatpush.msra.mxu0 0.0
        %2414 = vmatpush.msra.mxu0 0.0
        %2415 = vmatpush.msra.mxu0 0.0
        %2416 = vmatpush.msra.mxu0 0.0
        %2417 = vmatpush.msra.mxu0 0.0
        %2418 = vmatpush.msra.mxu0 0.0
        %2419 = vmatpush.msra.mxu0 0.0
        %2420 = vmatpush.msra.mxu0 0.0
        %2421 = vmatpush.msra.mxu0 0.0
        %2422 = vmatpush.msra.mxu0 0.0
        %v2423 = vand.u32 %v2265, 4294901760
        %v2424 = vsub.f32 %v2265, %v2423
        %v2425 = vand.u32 %v2424, 4294901760
        %2426 = vmatpush.msra.mxu0 %v2425
        %v2427 = vand.u32 %v2263, 4294901760
        %v2428 = vsub.f32 %v2263, %v2427
        %v2429 = vand.u32 %v2428, 4294901760
        %2430 = vmatpush.msra.mxu0 %v2429
        %v2431 = vand.u32 %v2272, 4294901760
        %2432 = vmatmul.f32.gmra.mxu0 %v2431
        %v2433 = vpop.f32.mrf.mxu0
        %v2434 = vadd.f32 %v2401, %v2433
        %v2435 = vand.u32 %v2275, 4294901760
        %2436 = vmatmul.f32.gmra.mxu0 %v2435
        %v2437 = vpop.f32.mrf.mxu0
        %v2438 = vadd.f32 %v2407, %v2437
        %2439 = vdwg.mxu0
        %2440 = vmatpush.msra.mxu0 0.0
        %2441 = vmatpush.msra.mxu0 0.0
        %2442 = vmatpush.msra.mxu0 0.0
        %2443 = vmatpush.msra.mxu0 0.0
        %2444 = vmatpush.msra.mxu0 0.0
        %2445 = vmatpush.msra.mxu0 0.0
        %2446 = vmatpush.msra.mxu0 0.0
        %2447 = vmatpush.msra.mxu0 0.0
        %2448 = vmatpush.msra.mxu0 0.0
        %2449 = vmatpush.msra.mxu0 0.0
        %2450 = vmatpush.msra.mxu0 0.0
        %2451 = vmatpush.msra.mxu0 0.0
        %2452 = vmatpush.msra.mxu0 0.0
        %2453 = vmatpush.msra.mxu0 0.0
        %v2454 = vand.u32 %v2265, 4294901760
        %2455 = vmatpush.msra.mxu0 %v2454
        %v2456 = vand.u32 %v2263, 4294901760
        %2457 = vmatpush.msra.mxu0 %v2456
        %v2458 = vand.u32 %v2272, 4294901760
        %2459 = vmatmul.f32.gmra.mxu0 %v2458
        %v2460 = vpop.f32.mrf.mxu0
        %v2461 = vadd.f32 %v2434, %v2460
        %v2462 = vand.u32 %v2275, 4294901760
        %2463 = vmatmul.f32.gmra.mxu0 %v2462
        %v2464 = vpop.f32.mrf.mxu0
        %v2465 = vadd.f32 %v2438, %v2464
        %2466 = vdwg.mxu0
        %2467 = vmatpush.msra.mxu0 0.0
        %2468 = vmatpush.msra.mxu0 0.0
        %2469 = vmatpush.msra.mxu0 0.0
        %2470 = vmatpush.msra.mxu0 0.0
        %2471 = vmatpush.msra.mxu0 0.0
        %2472 = vmatpush.msra.mxu0 0.0
        %2473 = vmatpush.msra.mxu0 0.0
        %2474 = vmatpush.msra.mxu0 0.0
        %2475 = vmatpush.msra.mxu0 0.0
        %2476 = vmatpush.msra.mxu0 0.0
        %2477 = vmatpush.msra.mxu0 0.0
        %2478 = vmatpush.msra.mxu0 0.0
        %2479 = vmatpush.msra.mxu0 0.0
        %2480 = vmatpush.msra.mxu0 0.0
        %v2481 = vand.u32 %v2266, 4294901760
        %2482 = vmatpush.msra.mxu0 %v2481
        %v2483 = vand.u32 %v2264, 4294901760
        %2484 = vmatpush.msra.mxu0 %v2483
        %v2485 = vand.u32 %v2272, 4294901760
        %v2486 = vsub.f32 %v2272, %v2485
        %v2487 = vand.u32 %v2486, 4294901760
        %v2488 = vsub.f32 %v2486, %v2487
        %v2489 = vand.u32 %v2488, 4294901760
        %2490 = vmatmul.f32.gmra.mxu0 %v2489
        %v2491 = vpop.f32.mrf.mxu0
        %v2492 = vadd.f32 0.0, %v2491
        %v2493 = vand.u32 %v2275, 4294901760
        %v2494 = vsub.f32 %v2275, %v2493
        %v2495 = vand.u32 %v2494, 4294901760
        %v2496 = vsub.f32 %v2494, %v2495
        %v2497 = vand.u32 %v2496, 4294901760
        %2498 = vmatmul.f32.gmra.mxu0 %v2497
        %v2499 = vpop.f32.mrf.mxu0
        %v2500 = vadd.f32 0.0, %v2499
        %2501 = vdwg.mxu0
        %2502 = vmatpush.msra.mxu0 0.0
        %2503 = vmatpush.msra.mxu0 0.0
        %2504 = vmatpush.msra.mxu0 0.0
        %2505 = vmatpush.msra.mxu0 0.0
        %2506 = vmatpush.msra.mxu0 0.0
        %2507 = vmatpush.msra.mxu0 0.0
        %2508 = vmatpush.msra.mxu0 0.0
        %2509 = vmatpush.msra.mxu0 0.0
        %2510 = vmatpush.msra.mxu0 0.0
        %2511 = vmatpush.msra.mxu0 0.0
        %2512 = vmatpush.msra.mxu0 0.0
        %2513 = vmatpush.msra.mxu0 0.0
        %2514 = vmatpush.msra.mxu0 0.0
        %2515 = vmatpush.msra.mxu0 0.0
        %v2516 = vand.u32 %v2266, 4294901760
        %v2517 = vsub.f32 %v2266, %v2516
        %v2518 = vand.u32 %v2517, 4294901760
        %v2519 = vsub.f32 %v2517, %v2518
        %v2520 = vand.u32 %v2519, 4294901760
        %2521 = vmatpush.msra.mxu0 %v2520
        %v2522 = vand.u32 %v2264, 4294901760
        %v2523 = vsub.f32 %v2264, %v2522
        %v2524 = vand.u32 %v2523, 4294901760
        %v2525 = vsub.f32 %v2523, %v2524
        %v2526 = vand.u32 %v2525, 4294901760
        %2527 = vmatpush.msra.mxu0 %v2526
        %v2528 = vand.u32 %v2272, 4294901760
        %2529 = vmatmul.f32.gmra.mxu0 %v2528
        %v2530 = vpop.f32.mrf.mxu0
        %v2531 = vadd.f32 %v2492, %v2530
        %v2532 = vand.u32 %v2275, 4294901760
        %2533 = vmatmul.f32.gmra.mxu0 %v2532
        %v2534 = vpop.f32.mrf.mxu0
        %v2535 = vadd.f32 %v2500, %v2534
        %2536 = vdwg.mxu0
        %2537 = vmatpush.msra.mxu0 0.0
        %2538 = vmatpush.msra.mxu0 0.0
        %2539 = vmatpush.msra.mxu0 0.0
        %2540 = vmatpush.msra.mxu0 0.0
        %2541 = vmatpush.msra.mxu0 0.0
        %2542 = vmatpush.msra.mxu0 0.0
        %2543 = vmatpush.msra.mxu0 0.0
        %2544 = vmatpush.msra.mxu0 0.0
        %2545 = vmatpush.msra.mxu0 0.0
        %2546 = vmatpush.msra.mxu0 0.0
        %2547 = vmatpush.msra.mxu0 0.0
        %2548 = vmatpush.msra.mxu0 0.0
        %2549 = vmatpush.msra.mxu0 0.0
        %2550 = vmatpush.msra.mxu0 0.0
        %v2551 = vand.u32 %v2266, 4294901760
        %v2552 = vsub.f32 %v2266, %v2551
        %2553 = vmatpush.msra.mxu0 %v2552
        %v2554 = vand.u32 %v2264, 4294901760
        %v2555 = vsub.f32 %v2264, %v2554
        %2556 = vmatpush.msra.mxu0 %v2555
        %v2557 = vand.u32 %v2272, 4294901760
        %v2558 = vsub.f32 %v2272, %v2557
        %2559 = vmatmul.f32.gmra.mxu0 %v2558
        %v2560 = vpop.f32.mrf.mxu0
        %v2561 = vadd.f32 %v2531, %v2560
        %v2562 = vand.u32 %v2275, 4294901760
        %v2563 = vsub.f32 %v2275, %v2562
        %2564 = vmatmul.f32.gmra.mxu0 %v2563
        %v2565 = vpop.f32.mrf.mxu0
        %v2566 = vadd.f32 %v2535, %v2565
        %2567 = vdwg.mxu0
        %2568 = vmatpush.msra.mxu0 0.0
        %2569 = vmatpush.msra.mxu0 0.0
        %2570 = vmatpush.msra.mxu0 0.0
        %2571 = vmatpush.msra.mxu0 0.0
        %2572 = vmatpush.msra.mxu0 0.0
        %2573 = vmatpush.msra.mxu0 0.0
        %2574 = vmatpush.msra.mxu0 0.0
        %2575 = vmatpush.msra.mxu0 0.0
        %2576 = vmatpush.msra.mxu0 0.0
        %2577 = vmatpush.msra.mxu0 0.0
        %2578 = vmatpush.msra.mxu0 0.0
        %2579 = vmatpush.msra.mxu0 0.0
        %2580 = vmatpush.msra.mxu0 0.0
        %2581 = vmatpush.msra.mxu0 0.0
        %v2582 = vand.u32 %v2266, 4294901760
        %2583 = vmatpush.msra.mxu0 %v2582
        %v2584 = vand.u32 %v2264, 4294901760
        %2585 = vmatpush.msra.mxu0 %v2584
        %v2586 = vand.u32 %v2272, 4294901760
        %v2587 = vsub.f32 %v2272, %v2586
        %v2588 = vand.u32 %v2587, 4294901760
        %2589 = vmatmul.f32.gmra.mxu0 %v2588
        %v2590 = vpop.f32.mrf.mxu0
        %v2591 = vadd.f32 %v2561, %v2590
        %v2592 = vand.u32 %v2275, 4294901760
        %v2593 = vsub.f32 %v2275, %v2592
        %v2594 = vand.u32 %v2593, 4294901760
        %2595 = vmatmul.f32.gmra.mxu0 %v2594
        %v2596 = vpop.f32.mrf.mxu0
        %v2597 = vadd.f32 %v2566, %v2596
        %2598 = vdwg.mxu0
        %2599 = vmatpush.msra.mxu0 0.0
        %2600 = vmatpush.msra.mxu0 0.0
        %2601 = vmatpush.msra.mxu0 0.0
        %2602 = vmatpush.msra.mxu0 0.0
        %2603 = vmatpush.msra.mxu0 0.0
        %2604 = vmatpush.msra.mxu0 0.0
        %2605 = vmatpush.msra.mxu0 0.0
        %2606 = vmatpush.msra.mxu0 0.0
        %2607 = vmatpush.msra.mxu0 0.0
        %2608 = vmatpush.msra.mxu0 0.0
        %2609 = vmatpush.msra.mxu0 0.0
        %2610 = vmatpush.msra.mxu0 0.0
        %2611 = vmatpush.msra.mxu0 0.0
        %2612 = vmatpush.msra.mxu0 0.0
        %v2613 = vand.u32 %v2266, 4294901760
        %v2614 = vsub.f32 %v2266, %v2613
        %v2615 = vand.u32 %v2614, 4294901760
        %2616 = vmatpush.msra.mxu0 %v2615
        %v2617 = vand.u32 %v2264, 4294901760
        %v2618 = vsub.f32 %v2264, %v2617
        %v2619 = vand.u32 %v2618, 4294901760
        %2620 = vmatpush.msra.mxu0 %v2619
        %v2621 = vand.u32 %v2272, 4294901760
        %2622 = vmatmul.f32.gmra.mxu0 %v2621
        %v2623 = vpop.f32.mrf.mxu0
        %v2624 = vadd.f32 %v2591, %v2623
        %v2625 = vand.u32 %v2275, 4294901760
        %2626 = vmatmul.f32.gmra.mxu0 %v2625
        %v2627 = vpop.f32.mrf.mxu0
        %v2628 = vadd.f32 %v2597, %v2627
        %2629 = vdwg.mxu0
        %2630 = vmatpush.msra.mxu0 0.0
        %2631 = vmatpush.msra.mxu0 0.0
        %2632 = vmatpush.msra.mxu0 0.0
        %2633 = vmatpush.msra.mxu0 0.0
        %2634 = vmatpush.msra.mxu0 0.0
        %2635 = vmatpush.msra.mxu0 0.0
        %2636 = vmatpush.msra.mxu0 0.0
        %2637 = vmatpush.msra.mxu0 0.0
        %2638 = vmatpush.msra.mxu0 0.0
        %2639 = vmatpush.msra.mxu0 0.0
        %2640 = vmatpush.msra.mxu0 0.0
        %2641 = vmatpush.msra.mxu0 0.0
        %2642 = vmatpush.msra.mxu0 0.0
        %2643 = vmatpush.msra.mxu0 0.0
        %v2644 = vand.u32 %v2266, 4294901760
        %2645 = vmatpush.msra.mxu0 %v2644
        %v2646 = vand.u32 %v2264, 4294901760
        %2647 = vmatpush.msra.mxu0 %v2646
        %v2648 = vand.u32 %v2272, 4294901760
        %2649 = vmatmul.f32.gmra.mxu0 %v2648
        %v2650 = vpop.f32.mrf.mxu0
        %v2651 = vadd.f32 %v2624, %v2650
        %v2652 = vand.u32 %v2275, 4294901760
        %2653 = vmatmul.f32.gmra.mxu0 %v2652
        %v2654 = vpop.f32.mrf.mxu0
        %v2655 = vadd.f32 %v2628, %v2654
        %2656 = vdwg.mxu0
        %v2658 = vsel %vm1912, %v2247, 0
        %v2661 = vsel %vm1912, %v2262, 0
        %2663 = vmatpush.msra.mxu0 0.0
        %2664 = vmatpush.msra.mxu0 0.0
        %2665 = vmatpush.msra.mxu0 0.0
        %2666 = vmatpush.msra.mxu0 0.0
        %2667 = vmatpush.msra.mxu0 0.0
        %2668 = vmatpush.msra.mxu0 0.0
        %2669 = vmatpush.msra.mxu0 0.0
        %2670 = vmatpush.msra.mxu0 0.0
        %2671 = vmatpush.msra.mxu0 0.0
        %2672 = vmatpush.msra.mxu0 0.0
        %2673 = vmatpush.msra.mxu0 0.0
        %2674 = vmatpush.msra.mxu0 0.0
        %2675 = vmatpush.msra.mxu0 0.0
        %2676 = vmatpush.msra.mxu0 0.0
        %v2677 = vand.u32 %v2269, 4294901760
        %2678 = vmatpush.msra.mxu0 %v2677
        %v2679 = vand.u32 %v2267, 4294901760
        %2680 = vmatpush.msra.mxu0 %v2679
        %v2681 = vand.u32 %v2658, 4294901760
        %v2682 = vsub.f32 %v2658, %v2681
        %v2683 = vand.u32 %v2682, 4294901760
        %v2684 = vsub.f32 %v2682, %v2683
        %v2685 = vand.u32 %v2684, 4294901760
        %2686 = vmatmul.f32.gmra.mxu0 %v2685
        %v2687 = vpop.f32.mrf.mxu0
        %v2688 = vadd.f32 0.0, %v2687
        %v2689 = vand.u32 %v2661, 4294901760
        %v2690 = vsub.f32 %v2661, %v2689
        %v2691 = vand.u32 %v2690, 4294901760
        %v2692 = vsub.f32 %v2690, %v2691
        %v2693 = vand.u32 %v2692, 4294901760
        %2694 = vmatmul.f32.gmra.mxu0 %v2693
        %v2695 = vpop.f32.mrf.mxu0
        %v2696 = vadd.f32 0.0, %v2695
        %2697 = vdwg.mxu0
        %2698 = vmatpush.msra.mxu0 0.0
        %2699 = vmatpush.msra.mxu0 0.0
        %2700 = vmatpush.msra.mxu0 0.0
        %2701 = vmatpush.msra.mxu0 0.0
        %2702 = vmatpush.msra.mxu0 0.0
        %2703 = vmatpush.msra.mxu0 0.0
        %2704 = vmatpush.msra.mxu0 0.0
        %2705 = vmatpush.msra.mxu0 0.0
        %2706 = vmatpush.msra.mxu0 0.0
        %2707 = vmatpush.msra.mxu0 0.0
        %2708 = vmatpush.msra.mxu0 0.0
        %2709 = vmatpush.msra.mxu0 0.0
        %2710 = vmatpush.msra.mxu0 0.0
        %2711 = vmatpush.msra.mxu0 0.0
        %v2712 = vand.u32 %v2269, 4294901760
        %v2713 = vsub.f32 %v2269, %v2712
        %v2714 = vand.u32 %v2713, 4294901760
        %v2715 = vsub.f32 %v2713, %v2714
        %v2716 = vand.u32 %v2715, 4294901760
        %2717 = vmatpush.msra.mxu0 %v2716
        %v2718 = vand.u32 %v2267, 4294901760
        %v2719 = vsub.f32 %v2267, %v2718
        %v2720 = vand.u32 %v2719, 4294901760
        %v2721 = vsub.f32 %v2719, %v2720
        %v2722 = vand.u32 %v2721, 4294901760
        %2723 = vmatpush.msra.mxu0 %v2722
        %v2724 = vand.u32 %v2658, 4294901760
        %2725 = vmatmul.f32.gmra.mxu0 %v2724
        %v2726 = vpop.f32.mrf.mxu0
        %v2727 = vadd.f32 %v2688, %v2726
        %v2728 = vand.u32 %v2661, 4294901760
        %2729 = vmatmul.f32.gmra.mxu0 %v2728
        %v2730 = vpop.f32.mrf.mxu0
        %v2731 = vadd.f32 %v2696, %v2730
        %2732 = vdwg.mxu0
        %2733 = vmatpush.msra.mxu0 0.0
        %2734 = vmatpush.msra.mxu0 0.0
        %2735 = vmatpush.msra.mxu0 0.0
        %2736 = vmatpush.msra.mxu0 0.0
        %2737 = vmatpush.msra.mxu0 0.0
        %2738 = vmatpush.msra.mxu0 0.0
        %2739 = vmatpush.msra.mxu0 0.0
        %2740 = vmatpush.msra.mxu0 0.0
        %2741 = vmatpush.msra.mxu0 0.0
        %2742 = vmatpush.msra.mxu0 0.0
        %2743 = vmatpush.msra.mxu0 0.0
        %2744 = vmatpush.msra.mxu0 0.0
        %2745 = vmatpush.msra.mxu0 0.0
        %2746 = vmatpush.msra.mxu0 0.0
        %v2747 = vand.u32 %v2269, 4294901760
        %v2748 = vsub.f32 %v2269, %v2747
        %2749 = vmatpush.msra.mxu0 %v2748
        %v2750 = vand.u32 %v2267, 4294901760
        %v2751 = vsub.f32 %v2267, %v2750
        %2752 = vmatpush.msra.mxu0 %v2751
        %v2753 = vand.u32 %v2658, 4294901760
        %v2754 = vsub.f32 %v2658, %v2753
        %2755 = vmatmul.f32.gmra.mxu0 %v2754
        %v2756 = vpop.f32.mrf.mxu0
        %v2757 = vadd.f32 %v2727, %v2756
        %v2758 = vand.u32 %v2661, 4294901760
        %v2759 = vsub.f32 %v2661, %v2758
        %2760 = vmatmul.f32.gmra.mxu0 %v2759
        %v2761 = vpop.f32.mrf.mxu0
        %v2762 = vadd.f32 %v2731, %v2761
        %2763 = vdwg.mxu0
        %2764 = vmatpush.msra.mxu0 0.0
        %2765 = vmatpush.msra.mxu0 0.0
        %2766 = vmatpush.msra.mxu0 0.0
        %2767 = vmatpush.msra.mxu0 0.0
        %2768 = vmatpush.msra.mxu0 0.0
        %2769 = vmatpush.msra.mxu0 0.0
        %2770 = vmatpush.msra.mxu0 0.0
        %2771 = vmatpush.msra.mxu0 0.0
        %2772 = vmatpush.msra.mxu0 0.0
        %2773 = vmatpush.msra.mxu0 0.0
        %2774 = vmatpush.msra.mxu0 0.0
        %2775 = vmatpush.msra.mxu0 0.0
        %2776 = vmatpush.msra.mxu0 0.0
        %2777 = vmatpush.msra.mxu0 0.0
        %v2778 = vand.u32 %v2269, 4294901760
        %2779 = vmatpush.msra.mxu0 %v2778
        %v2780 = vand.u32 %v2267, 4294901760
        %2781 = vmatpush.msra.mxu0 %v2780
        %v2782 = vand.u32 %v2658, 4294901760
        %v2783 = vsub.f32 %v2658, %v2782
        %v2784 = vand.u32 %v2783, 4294901760
        %2785 = vmatmul.f32.gmra.mxu0 %v2784
        %v2786 = vpop.f32.mrf.mxu0
        %v2787 = vadd.f32 %v2757, %v2786
        %v2788 = vand.u32 %v2661, 4294901760
        %v2789 = vsub.f32 %v2661, %v2788
        %v2790 = vand.u32 %v2789, 4294901760
        %2791 = vmatmul.f32.gmra.mxu0 %v2790
        %v2792 = vpop.f32.mrf.mxu0
        %v2793 = vadd.f32 %v2762, %v2792
        %2794 = vdwg.mxu0
        %2795 = vmatpush.msra.mxu0 0.0
        %2796 = vmatpush.msra.mxu0 0.0
        %2797 = vmatpush.msra.mxu0 0.0
        %2798 = vmatpush.msra.mxu0 0.0
        %2799 = vmatpush.msra.mxu0 0.0
        %2800 = vmatpush.msra.mxu0 0.0
        %2801 = vmatpush.msra.mxu0 0.0
        %2802 = vmatpush.msra.mxu0 0.0
        %2803 = vmatpush.msra.mxu0 0.0
        %2804 = vmatpush.msra.mxu0 0.0
        %2805 = vmatpush.msra.mxu0 0.0
        %2806 = vmatpush.msra.mxu0 0.0
        %2807 = vmatpush.msra.mxu0 0.0
        %2808 = vmatpush.msra.mxu0 0.0
        %v2809 = vand.u32 %v2269, 4294901760
        %v2810 = vsub.f32 %v2269, %v2809
        %v2811 = vand.u32 %v2810, 4294901760
        %2812 = vmatpush.msra.mxu0 %v2811
        %v2813 = vand.u32 %v2267, 4294901760
        %v2814 = vsub.f32 %v2267, %v2813
        %v2815 = vand.u32 %v2814, 4294901760
        %2816 = vmatpush.msra.mxu0 %v2815
        %v2817 = vand.u32 %v2658, 4294901760
        %2818 = vmatmul.f32.gmra.mxu0 %v2817
        %v2819 = vpop.f32.mrf.mxu0
        %v2820 = vadd.f32 %v2787, %v2819
        %v2821 = vand.u32 %v2661, 4294901760
        %2822 = vmatmul.f32.gmra.mxu0 %v2821
        %v2823 = vpop.f32.mrf.mxu0
        %v2824 = vadd.f32 %v2793, %v2823
        %2825 = vdwg.mxu0
        %2826 = vmatpush.msra.mxu0 0.0
        %2827 = vmatpush.msra.mxu0 0.0
        %2828 = vmatpush.msra.mxu0 0.0
        %2829 = vmatpush.msra.mxu0 0.0
        %2830 = vmatpush.msra.mxu0 0.0
        %2831 = vmatpush.msra.mxu0 0.0
        %2832 = vmatpush.msra.mxu0 0.0
        %2833 = vmatpush.msra.mxu0 0.0
        %2834 = vmatpush.msra.mxu0 0.0
        %2835 = vmatpush.msra.mxu0 0.0
        %2836 = vmatpush.msra.mxu0 0.0
        %2837 = vmatpush.msra.mxu0 0.0
        %2838 = vmatpush.msra.mxu0 0.0
        %2839 = vmatpush.msra.mxu0 0.0
        %v2840 = vand.u32 %v2269, 4294901760
        %2841 = vmatpush.msra.mxu0 %v2840
        %v2842 = vand.u32 %v2267, 4294901760
        %2843 = vmatpush.msra.mxu0 %v2842
        %v2844 = vand.u32 %v2658, 4294901760
        %2845 = vmatmul.f32.gmra.mxu0 %v2844
        %v2846 = vpop.f32.mrf.mxu0
        %v2847 = vadd.f32 %v2820, %v2846
        %v2848 = vand.u32 %v2661, 4294901760
        %2849 = vmatmul.f32.gmra.mxu0 %v2848
        %v2850 = vpop.f32.mrf.mxu0
        %v2851 = vadd.f32 %v2824, %v2850
        %2852 = vdwg.mxu0
        %2853 = vmatpush.msra.mxu0 0.0
        %2854 = vmatpush.msra.mxu0 0.0
        %2855 = vmatpush.msra.mxu0 0.0
        %2856 = vmatpush.msra.mxu0 0.0
        %2857 = vmatpush.msra.mxu0 0.0
        %2858 = vmatpush.msra.mxu0 0.0
        %2859 = vmatpush.msra.mxu0 0.0
        %2860 = vmatpush.msra.mxu0 0.0
        %2861 = vmatpush.msra.mxu0 0.0
        %2862 = vmatpush.msra.mxu0 0.0
        %2863 = vmatpush.msra.mxu0 0.0
        %2864 = vmatpush.msra.mxu0 0.0
        %2865 = vmatpush.msra.mxu0 0.0
        %2866 = vmatpush.msra.mxu0 0.0
        %v2867 = vand.u32 %v2270, 4294901760
        %2868 = vmatpush.msra.mxu0 %v2867
        %v2869 = vand.u32 %v2268, 4294901760
        %2870 = vmatpush.msra.mxu0 %v2869
        %v2871 = vand.u32 %v2658, 4294901760
        %v2872 = vsub.f32 %v2658, %v2871
        %v2873 = vand.u32 %v2872, 4294901760
        %v2874 = vsub.f32 %v2872, %v2873
        %v2875 = vand.u32 %v2874, 4294901760
        %2876 = vmatmul.f32.gmra.mxu0 %v2875
        %v2877 = vpop.f32.mrf.mxu0
        %v2878 = vadd.f32 0.0, %v2877
        %v2879 = vand.u32 %v2661, 4294901760
        %v2880 = vsub.f32 %v2661, %v2879
        %v2881 = vand.u32 %v2880, 4294901760
        %v2882 = vsub.f32 %v2880, %v2881
        %v2883 = vand.u32 %v2882, 4294901760
        %2884 = vmatmul.f32.gmra.mxu0 %v2883
        %v2885 = vpop.f32.mrf.mxu0
        %v2886 = vadd.f32 0.0, %v2885
        %2887 = vdwg.mxu0
        %2888 = vmatpush.msra.mxu0 0.0
        %2889 = vmatpush.msra.mxu0 0.0
        %2890 = vmatpush.msra.mxu0 0.0
        %2891 = vmatpush.msra.mxu0 0.0
        %2892 = vmatpush.msra.mxu0 0.0
        %2893 = vmatpush.msra.mxu0 0.0
        %2894 = vmatpush.msra.mxu0 0.0
        %2895 = vmatpush.msra.mxu0 0.0
        %2896 = vmatpush.msra.mxu0 0.0
        %2897 = vmatpush.msra.mxu0 0.0
        %2898 = vmatpush.msra.mxu0 0.0
        %2899 = vmatpush.msra.mxu0 0.0
        %2900 = vmatpush.msra.mxu0 0.0
        %2901 = vmatpush.msra.mxu0 0.0
        %v2902 = vand.u32 %v2270, 4294901760
        %v2903 = vsub.f32 %v2270, %v2902
        %v2904 = vand.u32 %v2903, 4294901760
        %v2905 = vsub.f32 %v2903, %v2904
        %v2906 = vand.u32 %v2905, 4294901760
        %2907 = vmatpush.msra.mxu0 %v2906
        %v2908 = vand.u32 %v2268, 4294901760
        %v2909 = vsub.f32 %v2268, %v2908
        %v2910 = vand.u32 %v2909, 4294901760
        %v2911 = vsub.f32 %v2909, %v2910
        %v2912 = vand.u32 %v2911, 4294901760
        %2913 = vmatpush.msra.mxu0 %v2912
        %v2914 = vand.u32 %v2658, 4294901760
        %2915 = vmatmul.f32.gmra.mxu0 %v2914
        %v2916 = vpop.f32.mrf.mxu0
        %v2917 = vadd.f32 %v2878, %v2916
        %v2918 = vand.u32 %v2661, 4294901760
        %2919 = vmatmul.f32.gmra.mxu0 %v2918
        %v2920 = vpop.f32.mrf.mxu0
        %v2921 = vadd.f32 %v2886, %v2920
        %2922 = vdwg.mxu0
        %2923 = vmatpush.msra.mxu0 0.0
        %2924 = vmatpush.msra.mxu0 0.0
        %2925 = vmatpush.msra.mxu0 0.0
        %2926 = vmatpush.msra.mxu0 0.0
        %2927 = vmatpush.msra.mxu0 0.0
        %2928 = vmatpush.msra.mxu0 0.0
        %2929 = vmatpush.msra.mxu0 0.0
        %2930 = vmatpush.msra.mxu0 0.0
        %2931 = vmatpush.msra.mxu0 0.0
        %2932 = vmatpush.msra.mxu0 0.0
        %2933 = vmatpush.msra.mxu0 0.0
        %2934 = vmatpush.msra.mxu0 0.0
        %2935 = vmatpush.msra.mxu0 0.0
        %2936 = vmatpush.msra.mxu0 0.0
        %v2937 = vand.u32 %v2270, 4294901760
        %v2938 = vsub.f32 %v2270, %v2937
        %2939 = vmatpush.msra.mxu0 %v2938
        %v2940 = vand.u32 %v2268, 4294901760
        %v2941 = vsub.f32 %v2268, %v2940
        %2942 = vmatpush.msra.mxu0 %v2941
        %v2943 = vand.u32 %v2658, 4294901760
        %v2944 = vsub.f32 %v2658, %v2943
        %2945 = vmatmul.f32.gmra.mxu0 %v2944
        %v2946 = vpop.f32.mrf.mxu0
        %v2947 = vadd.f32 %v2917, %v2946
        %v2948 = vand.u32 %v2661, 4294901760
        %v2949 = vsub.f32 %v2661, %v2948
        %2950 = vmatmul.f32.gmra.mxu0 %v2949
        %v2951 = vpop.f32.mrf.mxu0
        %v2952 = vadd.f32 %v2921, %v2951
        %2953 = vdwg.mxu0
        %2954 = vmatpush.msra.mxu0 0.0
        %2955 = vmatpush.msra.mxu0 0.0
        %2956 = vmatpush.msra.mxu0 0.0
        %2957 = vmatpush.msra.mxu0 0.0
        %2958 = vmatpush.msra.mxu0 0.0
        %2959 = vmatpush.msra.mxu0 0.0
        %2960 = vmatpush.msra.mxu0 0.0
        %2961 = vmatpush.msra.mxu0 0.0
        %2962 = vmatpush.msra.mxu0 0.0
        %2963 = vmatpush.msra.mxu0 0.0
        %2964 = vmatpush.msra.mxu0 0.0
        %2965 = vmatpush.msra.mxu0 0.0
        %2966 = vmatpush.msra.mxu0 0.0
        %2967 = vmatpush.msra.mxu0 0.0
        %v2968 = vand.u32 %v2270, 4294901760
        %2969 = vmatpush.msra.mxu0 %v2968
        %v2970 = vand.u32 %v2268, 4294901760
        %2971 = vmatpush.msra.mxu0 %v2970
        %v2972 = vand.u32 %v2658, 4294901760
        %v2973 = vsub.f32 %v2658, %v2972
        %v2974 = vand.u32 %v2973, 4294901760
        %2975 = vmatmul.f32.gmra.mxu0 %v2974
        %v2976 = vpop.f32.mrf.mxu0
        %v2977 = vadd.f32 %v2947, %v2976
        %v2978 = vand.u32 %v2661, 4294901760
        %v2979 = vsub.f32 %v2661, %v2978
        %v2980 = vand.u32 %v2979, 4294901760
        %2981 = vmatmul.f32.gmra.mxu0 %v2980
        %v2982 = vpop.f32.mrf.mxu0
        %v2983 = vadd.f32 %v2952, %v2982
        %2984 = vdwg.mxu0
        %2985 = vmatpush.msra.mxu0 0.0
        %2986 = vmatpush.msra.mxu0 0.0
        %2987 = vmatpush.msra.mxu0 0.0
        %2988 = vmatpush.msra.mxu0 0.0
        %2989 = vmatpush.msra.mxu0 0.0
        %2990 = vmatpush.msra.mxu0 0.0
        %2991 = vmatpush.msra.mxu0 0.0
        %2992 = vmatpush.msra.mxu0 0.0
        %2993 = vmatpush.msra.mxu0 0.0
        %2994 = vmatpush.msra.mxu0 0.0
        %2995 = vmatpush.msra.mxu0 0.0
        %2996 = vmatpush.msra.mxu0 0.0
        %2997 = vmatpush.msra.mxu0 0.0
        %2998 = vmatpush.msra.mxu0 0.0
        %v2999 = vand.u32 %v2270, 4294901760
        %v3000 = vsub.f32 %v2270, %v2999
        %v3001 = vand.u32 %v3000, 4294901760
        %3002 = vmatpush.msra.mxu0 %v3001
        %v3003 = vand.u32 %v2268, 4294901760
        %v3004 = vsub.f32 %v2268, %v3003
        %v3005 = vand.u32 %v3004, 4294901760
        %3006 = vmatpush.msra.mxu0 %v3005
        %v3007 = vand.u32 %v2658, 4294901760
        %3008 = vmatmul.f32.gmra.mxu0 %v3007
        %v3009 = vpop.f32.mrf.mxu0
        %v3010 = vadd.f32 %v2977, %v3009
        %v3011 = vand.u32 %v2661, 4294901760
        %3012 = vmatmul.f32.gmra.mxu0 %v3011
        %v3013 = vpop.f32.mrf.mxu0
        %v3014 = vadd.f32 %v2983, %v3013
        %3015 = vdwg.mxu0
        %3016 = vmatpush.msra.mxu0 0.0
        %3017 = vmatpush.msra.mxu0 0.0
        %3018 = vmatpush.msra.mxu0 0.0
        %3019 = vmatpush.msra.mxu0 0.0
        %3020 = vmatpush.msra.mxu0 0.0
        %3021 = vmatpush.msra.mxu0 0.0
        %3022 = vmatpush.msra.mxu0 0.0
        %3023 = vmatpush.msra.mxu0 0.0
        %3024 = vmatpush.msra.mxu0 0.0
        %3025 = vmatpush.msra.mxu0 0.0
        %3026 = vmatpush.msra.mxu0 0.0
        %3027 = vmatpush.msra.mxu0 0.0
        %3028 = vmatpush.msra.mxu0 0.0
        %3029 = vmatpush.msra.mxu0 0.0
        %v3030 = vand.u32 %v2270, 4294901760
        %3031 = vmatpush.msra.mxu0 %v3030
        %v3032 = vand.u32 %v2268, 4294901760
        %3033 = vmatpush.msra.mxu0 %v3032
        %v3034 = vand.u32 %v2658, 4294901760
        %3035 = vmatmul.f32.gmra.mxu0 %v3034
        %v3036 = vpop.f32.mrf.mxu0
        %v3037 = vadd.f32 %v3010, %v3036
        %v3038 = vand.u32 %v2661, 4294901760
        %3039 = vmatmul.f32.gmra.mxu0 %v3038
        %v3040 = vpop.f32.mrf.mxu0
        %v3041 = vadd.f32 %v3014, %v3040
        %3042 = vdwg.mxu0
        %v3043 = vmul.f32 %v2461, %v2847
        %v3044 = vmul.f32 %v2651, %v3037
        %v3045 = vmul.f32 %v2465, %v2851
        %v3046 = vmul.f32 %v2655, %v3041
        %3048 = vset.pattern.permute.xlu0 3
        %3049 = vperm.xlu0 %3048, %v1965
        %v3050 = vpop.permute.xlu0 %3049
        %3053 = vset.pattern.permute.xlu0 3
        %3054 = vperm.xlu0 %3053, %v1966
        %v3055 = vpop.permute.xlu0 %3054
        %v3057 = vadd.f32 %v3050, %v3043
        %v3058 = vadd.f32 %v3050, %v3044
        %v3059 = vadd.f32 %v3055, %v3045
        %v3060 = vadd.f32 %v3055, %v3046
        %v3061 = vmul.f32 %v352, %v3057
        %v3062 = vmul.f32 %v353, %v3058
        %v3063 = vmul.f32 %v354, %v3059
        %v3064 = vmul.f32 %v355, %v3060
        %3065 = vst [vmem:[%s328] sm:$0xff] %v3061
        %3066 = vst [vmem:[%s328 + $0x8] sm:$0xff] %v3062
        %3067 = vst [vmem:[%s328 + $0x10] sm:$0xff] %v3063
        %3068 = vst [vmem:[%s328 + $0x18] sm:$0xff] %v3064
        %s3069 = sand.u32 %s203, 1
        %s3070 = scalar_lea.sflag [#allocation3], %s3069
        %s3071 = sand.u32 %s203, 1
        %s3072 = smul.addr %s3071, 32
        %s3073 = scalar_lea.vmem [#allocation5], %s3072
        // Predicated region
        $region53: #{tpu_custom_call.1} parent=47 // pred_check
          %p3074 = pneg %p213
        $region54: #{tpu_custom_call.1} parent=47 // pred_check_branch
          %3076 = sbr.rel (%p3074) target = $region56
        $region55: #{tpu_custom_call.1} parent=47 // pred_region
          %s3077 = smul.u32 2, %s26
          %3079 = vsyncadd %s3070, 0
          %s3080 = smul.addr %s3077, 2
          %s3081 = smul.addr %s27, 4
          %s3082 = sadd.s32 %s3080, %s3081
          %s3083 = smul.addr %s3082, 8
          %s3084 = scalar_lea.hbm %s7, %s3083
          %s3085 = sshll.u32 %s3073, 4
          %s3086 = int_to_ptr.vmem [resolvable:$true] %s3085
          %s3087 = sshll.u32 %s3084, 4
          %s3088 = int_to_ptr.hbm [resolvable:$true] %s3087
          %3093 = dma.vmem_to_hbm [thread:$0]  %s3086, 512, %s3088, %s3070, 256, 256, 16
        $region56: #{tpu_custom_call.1} parent=47 // pred_fallthru
          _
      $region48: #{tpu_custom_call.1} parent=5 // pred_fallthru
        _
      %p3094 = scmp.le.s32.totalorder 2, %s17
      // Predicated region
      $region57: #{tpu_custom_call.1} parent=5 // pred_check
        %p3095 = pneg %p3094
      $region58: #{tpu_custom_call.1} parent=5 // pred_check_branch
        %3097 = sbr.rel (%p3095) target = $region60
      $region59: #{tpu_custom_call.1} parent=5 // pred_region
        %s3098 = ssub.s32 %s17, 2
        // Predicated region
        $region61: #{tpu_custom_call.1} parent=59 // pred_check
          %p3099 = pneg %p219
        $region62: #{tpu_custom_call.1} parent=59 // pred_check_branch
          %3101 = sbr.rel (%p3099) target = $region64
        $region63: #{tpu_custom_call.1} parent=59 // pred_region
          %s3102 = sand.u32 %s204, 1
          %s3103 = scalar_lea.sflag [#allocation3], %s3102
          %s3104 = sand.u32 %s204, 1
          %s3105 = smul.addr %s3104, 32
          %s3106 = scalar_lea.vmem [#allocation5], %s3105
          %3108 = dma.done %s3103, 512
        $region64: #{tpu_custom_call.1} parent=59 // pred_fallthru
          _
      $region60: #{tpu_custom_call.1} parent=5 // pred_fallthru
        _
    $region6: #{tpu_custom_call.1} parent=1 // loop_footer
      %s21 = sadd.s32 1, %s17
    $region7: #{tpu_custom_call.1} parent=1 // loop_footer_branch
      %16 = sbr.rel target = $region3
    $region8: #{tpu_custom_call.1} parent=1 // loop_exit
      _
    %3109 = vsyncpa [#allocation3], 1
    %s3110 = scalar_lea.sflag [#allocation3], 1
    %3111 = vsyncpa %s3110, 1
    %3112 = vsyncpa [#allocation4], 1
    %s3113 = scalar_lea.sflag [#allocation4], 1
    %3114 = vsyncpa %s3113, 1

</llo_original>
